<compile_context>
chip_gen: v5e
topology: v5e:2x2
jax: 0.10.0
libtpu: 0.0.40
codegen_flags: <defaults>
</compile_context>

<pallas_src>
import functools
import math

import jax
import jax.numpy as jnp
from jax.experimental import pallas as pl
from jax.experimental.pallas import tpu as pltpu


def _round_up(v, m):
    return ((v + m - 1) // m) * m


# ----------------------------------------------------------------------------
# Pallas kernel 1: M/K-tiled (M, K) @ (K, N) + bias, optional LeakyReLU(0.1)
#   grid = (M tiles [parallel], K tiles [arbitrary / reduction])
# ----------------------------------------------------------------------------
def _matmul_bias_act_kernel(x_ref, w_ref, b_ref, o_ref, acc_ref, *,
                            apply_act: bool, negative_slope: float):
    k = pl.program_id(1)

    @pl.when(k == 0)
    def _():
        acc_ref[...] = jnp.zeros_like(acc_ref)

    acc_ref[...] += jnp.dot(x_ref[...], w_ref[...],
                            preferred_element_type=jnp.float32)

    @pl.when(k == pl.num_programs(1) - 1)
    def _():
        y = acc_ref[...] + b_ref[...]              # (tm, N) + (1, N)
        if apply_act:
            y = jnp.where(y >= 0, y, negative_slope * y)   # LeakyReLU(0.1)
        o_ref[...] = y.astype(o_ref.dtype)


def matmul_bias_act(x, w, b, apply_act, negative_slope=0.1):
    """x: (M, K) f32, w: (K, N) f32, b: (N,) f32 -> (M, N) f32."""
    M, K = x.shape
    Kw, N = w.shape
    assert K == Kw

    # Tile sizes: cap VMEM independent of M; bf16 sublane packing -> x16.
    tm = min(256, _round_up(M, 16))
    Mp = _round_up(M, tm)
    tk = 256 if K % 256 == 0 else 128
    Kp = _round_up(K, tk)
    Np = _round_up(N, 128)

    # bf16 LHS/RHS (f32 accumulation in-kernel); pad only when needed.
    xb = x.astype(jnp.bfloat16)
    wb = w.astype(jnp.bfloat16)
    if (Mp, Kp) != (M, K):
        xb = jnp.pad(xb, ((0, Mp - M), (0, Kp - K)))
    if (Kp, Np) != (K, N):
        wb = jnp.pad(wb, ((0, Kp - K), (0, Np - N)))
    bp = b if Np == N else jnp.pad(b, (0, Np - N))
    bp = bp.reshape(1, Np).astype(jnp.float32)

    grid = (Mp // tm, Kp // tk)

    out = pl.pallas_call(
        functools.partial(_matmul_bias_act_kernel,
                          apply_act=apply_act,
                          negative_slope=negative_slope),
        out_shape=jax.ShapeDtypeStruct((Mp, Np), jnp.float32),
        grid_spec=pltpu.PrefetchScalarGridSpec(
            num_scalar_prefetch=0,
            grid=grid,
            in_specs=[
                pl.BlockSpec((tm, tk), lambda i, k: (i, k)),
                pl.BlockSpec((tk, Np), lambda i, k: (k, 0)),
                pl.BlockSpec((1, Np), lambda i, k: (0, 0)),
            ],
            out_specs=pl.BlockSpec((tm, Np), lambda i, k: (i, 0)),
            scratch_shapes=[pltpu.VMEM((tm, Np), jnp.float32)],
        ),
        compiler_params=pltpu.CompilerParams(
            dimension_semantics=("parallel", "arbitrary")),
    )(xb, wb, bp)

    if (Mp, Np) != (M, N):
        out = out[:M, :N]
    return out


# ----------------------------------------------------------------------------
# Pallas kernel 2: fused 1x1 heads
#   y = (LeakyReLU(x @ W1 + b1)) @ W2 + b2
#   W1: four 256->64 projections concatenated -> (256, 256) (LeakyReLU)
#   W2: four 64->1 projections laid block-diagonally -> (256, 4), padded to 128
# ----------------------------------------------------------------------------
def _head_fused_kernel(x_ref, w1_ref, b1_ref, w2_ref, b2_ref, o_ref):
    h = jnp.dot(x_ref[...], w1_ref[...], preferred_element_type=jnp.float32)
    h = h + b1_ref[...]
    h = jnp.where(h >= 0, h, 0.1 * h)            # LeakyReLU(0.1)
    y = jnp.dot(h, w2_ref[...], preferred_element_type=jnp.float32)
    o_ref[...] = (y + b2_ref[...]).astype(o_ref.dtype)


def fused_heads(x2d, w1, b1, w2, b2):
    """x2d: (M, 256) -> (M, 4) columns = [dir_x, dir_y, dir_z_raw, int_raw]."""
    M, C = x2d.shape
    assert C == 256
    tm = min(256, _round_up(M, 16))
    Mp = _round_up(M, tm)

    xb = x2d.astype(jnp.bfloat16)
    if Mp != M:
        xb = jnp.pad(xb, ((0, Mp - M), (0, 0)))
    w1b = w1.astype(jnp.bfloat16)
    b1p = b1.reshape(1, 256).astype(jnp.float32)

    NO = 128                                     # lane-pad the tiny N=4 output
    w2p = jnp.pad(w2, ((0, 0), (0, NO - w2.shape[1]))).astype(jnp.float32)
    b2p = jnp.pad(b2, (0, NO - b2.shape[0])).reshape(1, NO).astype(jnp.float32)

    out = pl.pallas_call(
        _head_fused_kernel,
        out_shape=jax.ShapeDtypeStruct((Mp, NO), jnp.float32),
        grid_spec=pltpu.PrefetchScalarGridSpec(
            num_scalar_prefetch=0,
            grid=(Mp // tm,),
            in_specs=[
                pl.BlockSpec((tm, 256), lambda i: (i, 0)),
                pl.BlockSpec((256, 256), lambda i: (0, 0)),
                pl.BlockSpec((1, 256), lambda i: (0, 0)),
                pl.BlockSpec((256, NO), lambda i: (0, 0)),
                pl.BlockSpec((1, NO), lambda i: (0, 0)),
            ],
            out_specs=pl.BlockSpec((tm, NO), lambda i: (i, 0)),
        ),
        compiler_params=pltpu.CompilerParams(
            dimension_semantics=("parallel",)),
    )(xb, w1b, b1p, w2p, b2p)

    return out[:M, :4]


# ----------------------------------------------------------------------------
# Conv2d = im2col (glue) + Pallas matmul kernel
# ----------------------------------------------------------------------------
def _extract_patches(x_nhwc, k, stride, pad):
    """Returns ((N*Ho*Wo, k*k*C), (N, Ho, Wo)). Patch order: (kh, kw, cin)."""
    N, H, W, C = x_nhwc.shape
    xp = jnp.pad(x_nhwc, ((0, 0), (pad, pad), (pad, pad), (0, 0)))
    Ho = (H + 2 * pad - k) // stride + 1
    Wo = (W + 2 * pad - k) // stride + 1
    cols = []
    for i in range(k):
        for j in range(k):
            sl = xp[:, i:i + (Ho - 1) * stride + 1:stride,
                       j:j + (Wo - 1) * stride + 1:stride, :]
            cols.append(sl)
    patches = jnp.concatenate(cols, axis=-1)            # (N, Ho, Wo, k*k*C)
    return patches.reshape(N * Ho * Wo, k * k * C), (N, Ho, Wo)


def conv2d_lrelu(x_nhwc, w_hwio, b, stride, pad, apply_act):
    """w_hwio: (k, k, Cin, Cout); matches (kh, kw, cin) patch ordering."""
    k = w_hwio.shape[0]
    cout = w_hwio.shape[-1]
    patches, (N, Ho, Wo) = _extract_patches(x_nhwc, k, stride, pad)
    w_mat = w_hwio.reshape(-1, cout)
    out = matmul_bias_act(patches, w_mat, b, apply_act)
    return out.reshape(N, Ho, Wo, cout)


# ----------------------------------------------------------------------------
# Parameters (deterministic kaiming-ish init — synthetic, no checkpoint)
# ----------------------------------------------------------------------------
def _init_conv(key, k, cin, cout):
    wk, bk = jax.random.split(key)
    fan_in = cin * k * k
    std = math.sqrt(2.0 / fan_in)
    w = jax.random.normal(wk, (k, k, cin, cout), jnp.float32) * std
    b = jax.random.normal(bk, (cout,), jnp.float32) * 0.01
    return w, b


def init_classifier_params(key):
    keys = jax.random.split(key, 12)
    p = {}
    p["conv1"] = _init_conv(keys[0], 3, 256, 256)
    p["conv2"] = _init_conv(keys[1], 3, 256, 256)
    p["conv3"] = _init_conv(keys[2], 3, 256, 256)
    p["conv4"] = _init_conv(keys[3], 3, 256, 256)

    # Four 1x1 heads (dir_x, dir_y, dir_z, int), each 256->64 (LReLU) -> 64->1.
    hw1, hb1, hw2, hb2 = [], [], [], []
    for idx in range(4):
        w1, b1 = _init_conv(keys[4 + 2 * idx], 1, 256, 64)
        w2, b2 = _init_conv(keys[5 + 2 * idx], 1, 64, 1)
        hw1.append(w1.reshape(256, 64))
        hb1.append(b1)
        hw2.append(w2.reshape(64))
        hb2.append(b2)
    W1 = jnp.concatenate(hw1, axis=1)                 # (256, 256)
    B1 = jnp.concatenate(hb1)                         # (256,)
    W2 = jnp.zeros((256, 4), jnp.float32)             # block-diagonal 64->1 x4
    for idx in range(4):
        W2 = W2.at[idx * 64:(idx + 1) * 64, idx].set(hw2[idx])
    B2 = jnp.concatenate(hb2)                         # (4,)
    p["heads_w1"], p["heads_b1"] = W1, B1
    p["heads_w2"], p["heads_b2"] = W2, B2
    return p


# ----------------------------------------------------------------------------
# Forward pass (matches Classifier.forward, batchNorm=False)
# ----------------------------------------------------------------------------
def classifier_forward(params, x_nchw):
    x = jnp.transpose(x_nchw, (0, 2, 3, 1))  # NCHW -> NHWC

    out = conv2d_lrelu(x, *params["conv1"], stride=1, pad=1, apply_act=True)
    out = conv2d_lrelu(out, *params["conv2"], stride=2, pad=1, apply_act=True)
    out = conv2d_lrelu(out, *params["conv3"], stride=2, pad=1, apply_act=True)
    out = conv2d_lrelu(out, *params["conv4"], stride=2, pad=1, apply_act=True)

    N, Ho, Wo, C = out.shape
    heads = fused_heads(out.reshape(N * Ho * Wo, C),
                        params["heads_w1"], params["heads_b1"],
                        params["heads_w2"], params["heads_b2"])
    heads = heads.reshape(N, Ho, Wo, 4)

    dir_x = heads[..., 0:1]
    dir_y = heads[..., 1:2]
    dir_z = -jnp.abs(heads[..., 2:3])
    ints = jnp.abs(heads[..., 3:4])

    dir_est = jnp.concatenate([dir_x, dir_y, dir_z], axis=-1)
    # F.normalize(p=2, dim=channel): x / max(||x||_2, eps=1e-12)
    # (tiny 3-channel elementwise op — kept in glue, not the hot path)
    norm = jnp.sqrt(jnp.sum(dir_est * dir_est, axis=-1, keepdims=True))
    dirs = dir_est / jnp.maximum(norm, 1e-12)

    return {
        "dirs": jnp.transpose(dirs, (0, 3, 1, 2)),   # back to NCHW
        "ints": jnp.transpose(ints, (0, 3, 1, 2)),
    }


# ----------------------------------------------------------------------------
if __name__ == "__main__":
    key = jax.random.PRNGKey(0)
    pkey, xkey = jax.random.split(key)

    params = init_classifier_params(pkey)
    # Module hard-codes 256 input channels; small batch / spatial size.
    x = jax.random.normal(xkey, (2, 256, 16, 16), jnp.float32)

    outputs = jax.jit(classifier_forward)(params, x)
    jax.block_until_ready(outputs)

    assert outputs["dirs"].shape == (2, 3, 2, 2)
    assert outputs["ints"].shape == (2, 1, 2, 2)
    assert bool(jnp.all(jnp.isfinite(outputs["dirs"])))
    assert bool(jnp.all(jnp.isfinite(outputs["ints"])))
    print("KERNEL_OK")
</pallas_src>

<mosaic_0001>
module attributes {stable_mosaic.version = 11 : i64} {
  func.func @_matmul_bias_act_kernel(%arg0: i32, %arg1: i32, %arg2: memref<256x256xbf16, #tpu.memory_space<vmem>>, %arg3: memref<256x256xbf16, #tpu.memory_space<vmem>>, %arg4: memref<1x256xf32, #tpu.memory_space<vmem>>, %arg5: memref<256x256xf32, #tpu.memory_space<vmem>>, %arg6: memref<256x256xf32, #tpu.memory_space<vmem>>) attributes {dimension_semantics = [#tpu.dimension_semantics<parallel>, #tpu.dimension_semantics<arbitrary>], iteration_bounds = array<i64: 2, 9>, scalar_prefetch = 0 : i64, scratch_operands = 1 : i64, tpu.core_type = #tpu.core_type<tc>, window_params = [{transform_indices = @transform_0, window_bounds = array<i64: 256, 256>}, {transform_indices = @transform_1, window_bounds = array<i64: 256, 256>}, {pipeline_mode = #tpu.pipeline_mode<synchronous>, transform_indices = @transform_2, window_bounds = array<i64: 1, 256>}, {transform_indices = @transform_3, window_bounds = array<i64: 256, 256>}]} {
    %c0_i32 = arith.constant 0 : i32
    %0 = arith.cmpi eq, %arg1, %c0_i32 : i32
    %1 = arith.extui %0 : i1 to i32
    %c0_i32_0 = arith.constant 0 : i32
    %2 = arith.cmpi ne, %1, %c0_i32_0 : i32
    scf.if %2 {
      %cst_9 = arith.constant 0.000000e+00 : f32
      %12 = vector.broadcast %cst_9 : f32 to vector<256x256xf32>
      %c0_10 = arith.constant 0 : index
      %c0_11 = arith.constant 0 : index
      %13 = vector.load %arg6[%c0_10, %c0_11] : memref<256x256xf32, #tpu.memory_space<vmem>>, vector<256x256xf32>
      tpu.vector_store %arg6[%c0_10, %c0_11], %12 {strides = array<i32>} : memref<256x256xf32, #tpu.memory_space<vmem>>, vector<256x256xf32>,
    } else {
    }
    %c0 = arith.constant 0 : index
    %c0_1 = arith.constant 0 : index
    %3 = vector.load %arg6[%c0, %c0_1] : memref<256x256xf32, #tpu.memory_space<vmem>>, vector<256x256xf32>
    %c0_2 = arith.constant 0 : index
    %c0_3 = arith.constant 0 : index
    %4 = vector.load %arg2[%c0_2, %c0_3] : memref<256x256xbf16, #tpu.memory_space<vmem>>, vector<256x256xbf16>
    %c0_4 = arith.constant 0 : index
    %c0_5 = arith.constant 0 : index
    %5 = vector.load %arg3[%c0_4, %c0_5] : memref<256x256xbf16, #tpu.memory_space<vmem>>, vector<256x256xbf16>
    %cst = arith.constant dense<0.000000e+00> : vector<256x256xf32>
    %6 = tpu.matmul %4, %5, %cst {dimension_numbers = #tpu.dot_dimension_numbers<[1], [0], [0], [1], [0, 0, 1, 1], [], []>} : vector<256x256xbf16>, vector<256x256xbf16>, vector<256x256xf32> -> vector<256x256xf32>
    %7 = arith.addf %3, %6 : vector<256x256xf32>
    %c0_6 = arith.constant 0 : index
    %c0_7 = arith.constant 0 : index
    %8 = vector.load %arg6[%c0_6, %c0_7] : memref<256x256xf32, #tpu.memory_space<vmem>>, vector<256x256xf32>
    tpu.vector_store %arg6[%c0_6, %c0_7], %7 {strides = array<i32>} : memref<256x256xf32, #tpu.memory_space<vmem>>, vector<256x256xf32>,
    %c8_i32 = arith.constant 8 : i32
    %9 = arith.cmpi eq, %arg1, %c8_i32 : i32
    %10 = arith.extui %9 : i1 to i32
    %c0_i32_8 = arith.constant 0 : i32
    %11 = arith.cmpi ne, %10, %c0_i32_8 : i32
    scf.if %11 {
      %c0_9 = arith.constant 0 : index
      %c0_10 = arith.constant 0 : index
      %12 = vector.load %arg6[%c0_9, %c0_10] : memref<256x256xf32, #tpu.memory_space<vmem>>, vector<256x256xf32>
      %c0_11 = arith.constant 0 : index
      %c0_12 = arith.constant 0 : index
      %13 = vector.load %arg4[%c0_11, %c0_12] : memref<1x256xf32, #tpu.memory_space<vmem>>, vector<1x256xf32>
      %14 = vector.broadcast %13 : vector<1x256xf32> to vector<256x256xf32>
      %15 = arith.addf %12, %14 : vector<256x256xf32>
      %cst_13 = arith.constant 0.000000e+00 : f32
      %16 = vector.broadcast %cst_13 : f32 to vector<256x256xf32>
      %17 = arith.cmpf oge, %15, %16 : vector<256x256xf32>
      %cst_14 = arith.constant 1.000000e-01 : f32
      %18 = vector.broadcast %cst_14 : f32 to vector<256x256xf32>
      %19 = arith.mulf %18, %15 : vector<256x256xf32>
      %20 = arith.select %17, %15, %19 : vector<256x256xi1>, vector<256x256xf32>
      %c0_15 = arith.constant 0 : index
      %c0_16 = arith.constant 0 : index
      %21 = vector.load %arg5[%c0_15, %c0_16] : memref<256x256xf32, #tpu.memory_space<vmem>>, vector<256x256xf32>
      tpu.vector_store %arg5[%c0_15, %c0_16], %20 {strides = array<i32>} : memref<256x256xf32, #tpu.memory_space<vmem>>, vector<256x256xf32>,
    } else {
    }
    return
  }
  func.func @transform_0(%arg0: i32, %arg1: i32) -> (i32, i32) {
    %c0_i32 = arith.constant 0 : i32
    return %arg0, %arg1 : i32, i32
  }
  func.func @transform_1(%arg0: i32, %arg1: i32) -> (i32, i32) {
    %c0_i32 = arith.constant 0 : i32
    %c0_i32_0 = arith.constant 0 : i32
    return %arg1, %c0_i32 : i32, i32
  }
  func.func @transform_2(%arg0: i32, %arg1: i32) -> (i32, i32) {
    %c0_i32 = arith.constant 0 : i32
    %c0_i32_0 = arith.constant 0 : i32
    %c0_i32_1 = arith.constant 0 : i32
    return %c0_i32, %c0_i32_0 : i32, i32
  }
  func.func @transform_3(%arg0: i32, %arg1: i32) -> (i32, i32) {
    %c0_i32 = arith.constant 0 : i32
    %c0_i32_0 = arith.constant 0 : i32
    return %arg0, %c0_i32 : i32, i32
  }
}

module attributes {stable_mosaic.version = 11 : i64} {
  func.func @_matmul_bias_act_kernel(%arg0: i32, %arg1: i32, %arg2: memref<128x256xbf16, #tpu.memory_space<vmem>>, %arg3: memref<256x256xbf16, #tpu.memory_space<vmem>>, %arg4: memref<1x256xf32, #tpu.memory_space<vmem>>, %arg5: memref<128x256xf32, #tpu.memory_space<vmem>>, %arg6: memref<128x256xf32, #tpu.memory_space<vmem>>) attributes {dimension_semantics = [#tpu.dimension_semantics<parallel>, #tpu.dimension_semantics<arbitrary>], iteration_bounds = array<i64: 1, 9>, scalar_prefetch = 0 : i64, scratch_operands = 1 : i64, tpu.core_type = #tpu.core_type<tc>, window_params = [{transform_indices = @transform_0, window_bounds = array<i64: 128, 256>}, {transform_indices = @transform_1, window_bounds = array<i64: 256, 256>}, {pipeline_mode = #tpu.pipeline_mode<synchronous>, transform_indices = @transform_2, window_bounds = array<i64: 1, 256>}, {transform_indices = @transform_3, window_bounds = array<i64: 128, 256>}]} {
    %c0_i32 = arith.constant 0 : i32
    %0 = arith.cmpi eq, %arg1, %c0_i32 : i32
    %1 = arith.extui %0 : i1 to i32
    %c0_i32_0 = arith.constant 0 : i32
    %2 = arith.cmpi ne, %1, %c0_i32_0 : i32
    scf.if %2 {
      %cst_9 = arith.constant 0.000000e+00 : f32
      %12 = vector.broadcast %cst_9 : f32 to vector<128x256xf32>
      %c0_10 = arith.constant 0 : index
      %c0_11 = arith.constant 0 : index
      %13 = vector.load %arg6[%c0_10, %c0_11] : memref<128x256xf32, #tpu.memory_space<vmem>>, vector<128x256xf32>
      tpu.vector_store %arg6[%c0_10, %c0_11], %12 {strides = array<i32>} : memref<128x256xf32, #tpu.memory_space<vmem>>, vector<128x256xf32>,
    } else {
    }
    %c0 = arith.constant 0 : index
    %c0_1 = arith.constant 0 : index
    %3 = vector.load %arg6[%c0, %c0_1] : memref<128x256xf32, #tpu.memory_space<vmem>>, vector<128x256xf32>
    %c0_2 = arith.constant 0 : index
    %c0_3 = arith.constant 0 : index
    %4 = vector.load %arg2[%c0_2, %c0_3] : memref<128x256xbf16, #tpu.memory_space<vmem>>, vector<128x256xbf16>
    %c0_4 = arith.constant 0 : index
    %c0_5 = arith.constant 0 : index
    %5 = vector.load %arg3[%c0_4, %c0_5] : memref<256x256xbf16, #tpu.memory_space<vmem>>, vector<256x256xbf16>
    %cst = arith.constant dense<0.000000e+00> : vector<128x256xf32>
    %6 = tpu.matmul %4, %5, %cst {dimension_numbers = #tpu.dot_dimension_numbers<[1], [0], [0], [1], [0, 0, 1, 1], [], []>} : vector<128x256xbf16>, vector<256x256xbf16>, vector<128x256xf32> -> vector<128x256xf32>
    %7 = arith.addf %3, %6 : vector<128x256xf32>
    %c0_6 = arith.constant 0 : index
    %c0_7 = arith.constant 0 : index
    %8 = vector.load %arg6[%c0_6, %c0_7] : memref<128x256xf32, #tpu.memory_space<vmem>>, vector<128x256xf32>
    tpu.vector_store %arg6[%c0_6, %c0_7], %7 {strides = array<i32>} : memref<128x256xf32, #tpu.memory_space<vmem>>, vector<128x256xf32>,
    %c8_i32 = arith.constant 8 : i32
    %9 = arith.cmpi eq, %arg1, %c8_i32 : i32
    %10 = arith.extui %9 : i1 to i32
    %c0_i32_8 = arith.constant 0 : i32
    %11 = arith.cmpi ne, %10, %c0_i32_8 : i32
    scf.if %11 {
      %c0_9 = arith.constant 0 : index
      %c0_10 = arith.constant 0 : index
      %12 = vector.load %arg6[%c0_9, %c0_10] : memref<128x256xf32, #tpu.memory_space<vmem>>, vector<128x256xf32>
      %c0_11 = arith.constant 0 : index
      %c0_12 = arith.constant 0 : index
      %13 = vector.load %arg4[%c0_11, %c0_12] : memref<1x256xf32, #tpu.memory_space<vmem>>, vector<1x256xf32>
      %14 = vector.broadcast %13 : vector<1x256xf32> to vector<128x256xf32>
      %15 = arith.addf %12, %14 : vector<128x256xf32>
      %cst_13 = arith.constant 0.000000e+00 : f32
      %16 = vector.broadcast %cst_13 : f32 to vector<128x256xf32>
      %17 = arith.cmpf oge, %15, %16 : vector<128x256xf32>
      %cst_14 = arith.constant 1.000000e-01 : f32
      %18 = vector.broadcast %cst_14 : f32 to vector<128x256xf32>
      %19 = arith.mulf %18, %15 : vector<128x256xf32>
      %20 = arith.select %17, %15, %19 : vector<128x256xi1>, vector<128x256xf32>
      %c0_15 = arith.constant 0 : index
      %c0_16 = arith.constant 0 : index
      %21 = vector.load %arg5[%c0_15, %c0_16] : memref<128x256xf32, #tpu.memory_space<vmem>>, vector<128x256xf32>
      tpu.vector_store %arg5[%c0_15, %c0_16], %20 {strides = array<i32>} : memref<128x256xf32, #tpu.memory_space<vmem>>, vector<128x256xf32>,
    } else {
    }
    return
  }
  func.func @transform_0(%arg0: i32, %arg1: i32) -> (i32, i32) {
    %c0_i32 = arith.constant 0 : i32
    return %arg0, %arg1 : i32, i32
  }
  func.func @transform_1(%arg0: i32, %arg1: i32) -> (i32, i32) {
    %c0_i32 = arith.constant 0 : i32
    %c0_i32_0 = arith.constant 0 : i32
    return %arg1, %c0_i32 : i32, i32
  }
  func.func @transform_2(%arg0: i32, %arg1: i32) -> (i32, i32) {
    %c0_i32 = arith.constant 0 : i32
    %c0_i32_0 = arith.constant 0 : i32
    %c0_i32_1 = arith.constant 0 : i32
    return %c0_i32, %c0_i32_0 : i32, i32
  }
  func.func @transform_3(%arg0: i32, %arg1: i32) -> (i32, i32) {
    %c0_i32 = arith.constant 0 : i32
    %c0_i32_0 = arith.constant 0 : i32
    return %arg0, %c0_i32 : i32, i32
  }
}

module attributes {stable_mosaic.version = 11 : i64} {
  func.func @_matmul_bias_act_kernel(%arg0: i32, %arg1: i32, %arg2: memref<32x256xbf16, #tpu.memory_space<vmem>>, %arg3: memref<256x256xbf16, #tpu.memory_space<vmem>>, %arg4: memref<1x256xf32, #tpu.memory_space<vmem>>, %arg5: memref<32x256xf32, #tpu.memory_space<vmem>>, %arg6: memref<32x256xf32, #tpu.memory_space<vmem>>) attributes {dimension_semantics = [#tpu.dimension_semantics<parallel>, #tpu.dimension_semantics<arbitrary>], iteration_bounds = array<i64: 1, 9>, scalar_prefetch = 0 : i64, scratch_operands = 1 : i64, tpu.core_type = #tpu.core_type<tc>, window_params = [{transform_indices = @transform_0, window_bounds = array<i64: 32, 256>}, {transform_indices = @transform_1, window_bounds = array<i64: 256, 256>}, {pipeline_mode = #tpu.pipeline_mode<synchronous>, transform_indices = @transform_2, window_bounds = array<i64: 1, 256>}, {transform_indices = @transform_3, window_bounds = array<i64: 32, 256>}]} {
    %c0_i32 = arith.constant 0 : i32
    %0 = arith.cmpi eq, %arg1, %c0_i32 : i32
    %1 = arith.extui %0 : i1 to i32
    %c0_i32_0 = arith.constant 0 : i32
    %2 = arith.cmpi ne, %1, %c0_i32_0 : i32
    scf.if %2 {
      %cst_9 = arith.constant 0.000000e+00 : f32
      %12 = vector.broadcast %cst_9 : f32 to vector<32x256xf32>
      %c0_10 = arith.constant 0 : index
      %c0_11 = arith.constant 0 : index
      %13 = vector.load %arg6[%c0_10, %c0_11] : memref<32x256xf32, #tpu.memory_space<vmem>>, vector<32x256xf32>
      tpu.vector_store %arg6[%c0_10, %c0_11], %12 {strides = array<i32>} : memref<32x256xf32, #tpu.memory_space<vmem>>, vector<32x256xf32>,
    } else {
    }
    %c0 = arith.constant 0 : index
    %c0_1 = arith.constant 0 : index
    %3 = vector.load %arg6[%c0, %c0_1] : memref<32x256xf32, #tpu.memory_space<vmem>>, vector<32x256xf32>
    %c0_2 = arith.constant 0 : index
    %c0_3 = arith.constant 0 : index
    %4 = vector.load %arg2[%c0_2, %c0_3] : memref<32x256xbf16, #tpu.memory_space<vmem>>, vector<32x256xbf16>
    %c0_4 = arith.constant 0 : index
    %c0_5 = arith.constant 0 : index
    %5 = vector.load %arg3[%c0_4, %c0_5] : memref<256x256xbf16, #tpu.memory_space<vmem>>, vector<256x256xbf16>
    %cst = arith.constant dense<0.000000e+00> : vector<32x256xf32>
    %6 = tpu.matmul %4, %5, %cst {dimension_numbers = #tpu.dot_dimension_numbers<[1], [0], [0], [1], [0, 0, 1, 1], [], []>} : vector<32x256xbf16>, vector<256x256xbf16>, vector<32x256xf32> -> vector<32x256xf32>
    %7 = arith.addf %3, %6 : vector<32x256xf32>
    %c0_6 = arith.constant 0 : index
    %c0_7 = arith.constant 0 : index
    %8 = vector.load %arg6[%c0_6, %c0_7] : memref<32x256xf32, #tpu.memory_space<vmem>>, vector<32x256xf32>
    tpu.vector_store %arg6[%c0_6, %c0_7], %7 {strides = array<i32>} : memref<32x256xf32, #tpu.memory_space<vmem>>, vector<32x256xf32>,
    %c8_i32 = arith.constant 8 : i32
    %9 = arith.cmpi eq, %arg1, %c8_i32 : i32
    %10 = arith.extui %9 : i1 to i32
    %c0_i32_8 = arith.constant 0 : i32
    %11 = arith.cmpi ne, %10, %c0_i32_8 : i32
    scf.if %11 {
      %c0_9 = arith.constant 0 : index
      %c0_10 = arith.constant 0 : index
      %12 = vector.load %arg6[%c0_9, %c0_10] : memref<32x256xf32, #tpu.memory_space<vmem>>, vector<32x256xf32>
      %c0_11 = arith.constant 0 : index
      %c0_12 = arith.constant 0 : index
      %13 = vector.load %arg4[%c0_11, %c0_12] : memref<1x256xf32, #tpu.memory_space<vmem>>, vector<1x256xf32>
      %14 = vector.broadcast %13 : vector<1x256xf32> to vector<32x256xf32>
      %15 = arith.addf %12, %14 : vector<32x256xf32>
      %cst_13 = arith.constant 0.000000e+00 : f32
      %16 = vector.broadcast %cst_13 : f32 to vector<32x256xf32>
      %17 = arith.cmpf oge, %15, %16 : vector<32x256xf32>
      %cst_14 = arith.constant 1.000000e-01 : f32
      %18 = vector.broadcast %cst_14 : f32 to vector<32x256xf32>
      %19 = arith.mulf %18, %15 : vector<32x256xf32>
      %20 = arith.select %17, %15, %19 : vector<32x256xi1>, vector<32x256xf32>
      %c0_15 = arith.constant 0 : index
      %c0_16 = arith.constant 0 : index
      %21 = vector.load %arg5[%c0_15, %c0_16] : memref<32x256xf32, #tpu.memory_space<vmem>>, vector<32x256xf32>
      tpu.vector_store %arg5[%c0_15, %c0_16], %20 {strides = array<i32>} : memref<32x256xf32, #tpu.memory_space<vmem>>, vector<32x256xf32>,
    } else {
    }
    return
  }
  func.func @transform_0(%arg0: i32, %arg1: i32) -> (i32, i32) {
    %c0_i32 = arith.constant 0 : i32
    return %arg0, %arg1 : i32, i32
  }
  func.func @transform_1(%arg0: i32, %arg1: i32) -> (i32, i32) {
    %c0_i32 = arith.constant 0 : i32
    %c0_i32_0 = arith.constant 0 : i32
    return %arg1, %c0_i32 : i32, i32
  }
  func.func @transform_2(%arg0: i32, %arg1: i32) -> (i32, i32) {
    %c0_i32 = arith.constant 0 : i32
    %c0_i32_0 = arith.constant 0 : i32
    %c0_i32_1 = arith.constant 0 : i32
    return %c0_i32, %c0_i32_0 : i32, i32
  }
  func.func @transform_3(%arg0: i32, %arg1: i32) -> (i32, i32) {
    %c0_i32 = arith.constant 0 : i32
    %c0_i32_0 = arith.constant 0 : i32
    return %arg0, %c0_i32 : i32, i32
  }
}

module attributes {stable_mosaic.version = 11 : i64} {
  func.func @_matmul_bias_act_kernel(%arg0: i32, %arg1: i32, %arg2: memref<16x256xbf16, #tpu.memory_space<vmem>>, %arg3: memref<256x256xbf16, #tpu.memory_space<vmem>>, %arg4: memref<1x256xf32, #tpu.memory_space<vmem>>, %arg5: memref<16x256xf32, #tpu.memory_space<vmem>>, %arg6: memref<16x256xf32, #tpu.memory_space<vmem>>) attributes {dimension_semantics = [#tpu.dimension_semantics<parallel>, #tpu.dimension_semantics<arbitrary>], iteration_bounds = array<i64: 1, 9>, scalar_prefetch = 0 : i64, scratch_operands = 1 : i64, tpu.core_type = #tpu.core_type<tc>, window_params = [{transform_indices = @transform_0, window_bounds = array<i64: 16, 256>}, {transform_indices = @transform_1, window_bounds = array<i64: 256, 256>}, {pipeline_mode = #tpu.pipeline_mode<synchronous>, transform_indices = @transform_2, window_bounds = array<i64: 1, 256>}, {transform_indices = @transform_3, window_bounds = array<i64: 16, 256>}]} {
    %c0_i32 = arith.constant 0 : i32
    %0 = arith.cmpi eq, %arg1, %c0_i32 : i32
    %1 = arith.extui %0 : i1 to i32
    %c0_i32_0 = arith.constant 0 : i32
    %2 = arith.cmpi ne, %1, %c0_i32_0 : i32
    scf.if %2 {
      %cst_9 = arith.constant 0.000000e+00 : f32
      %12 = vector.broadcast %cst_9 : f32 to vector<16x256xf32>
      %c0_10 = arith.constant 0 : index
      %c0_11 = arith.constant 0 : index
      %13 = vector.load %arg6[%c0_10, %c0_11] : memref<16x256xf32, #tpu.memory_space<vmem>>, vector<16x256xf32>
      tpu.vector_store %arg6[%c0_10, %c0_11], %12 {strides = array<i32>} : memref<16x256xf32, #tpu.memory_space<vmem>>, vector<16x256xf32>,
    } else {
    }
    %c0 = arith.constant 0 : index
    %c0_1 = arith.constant 0 : index
    %3 = vector.load %arg6[%c0, %c0_1] : memref<16x256xf32, #tpu.memory_space<vmem>>, vector<16x256xf32>
    %c0_2 = arith.constant 0 : index
    %c0_3 = arith.constant 0 : index
    %4 = vector.load %arg2[%c0_2, %c0_3] : memref<16x256xbf16, #tpu.memory_space<vmem>>, vector<16x256xbf16>
    %c0_4 = arith.constant 0 : index
    %c0_5 = arith.constant 0 : index
    %5 = vector.load %arg3[%c0_4, %c0_5] : memref<256x256xbf16, #tpu.memory_space<vmem>>, vector<256x256xbf16>
    %cst = arith.constant dense<0.000000e+00> : vector<16x256xf32>
    %6 = tpu.matmul %4, %5, %cst {dimension_numbers = #tpu.dot_dimension_numbers<[1], [0], [0], [1], [0, 0, 1, 1], [], []>} : vector<16x256xbf16>, vector<256x256xbf16>, vector<16x256xf32> -> vector<16x256xf32>
    %7 = arith.addf %3, %6 : vector<16x256xf32>
    %c0_6 = arith.constant 0 : index
    %c0_7 = arith.constant 0 : index
    %8 = vector.load %arg6[%c0_6, %c0_7] : memref<16x256xf32, #tpu.memory_space<vmem>>, vector<16x256xf32>
    tpu.vector_store %arg6[%c0_6, %c0_7], %7 {strides = array<i32>} : memref<16x256xf32, #tpu.memory_space<vmem>>, vector<16x256xf32>,
    %c8_i32 = arith.constant 8 : i32
    %9 = arith.cmpi eq, %arg1, %c8_i32 : i32
    %10 = arith.extui %9 : i1 to i32
    %c0_i32_8 = arith.constant 0 : i32
    %11 = arith.cmpi ne, %10, %c0_i32_8 : i32
    scf.if %11 {
      %c0_9 = arith.constant 0 : index
      %c0_10 = arith.constant 0 : index
      %12 = vector.load %arg6[%c0_9, %c0_10] : memref<16x256xf32, #tpu.memory_space<vmem>>, vector<16x256xf32>
      %c0_11 = arith.constant 0 : index
      %c0_12 = arith.constant 0 : index
      %13 = vector.load %arg4[%c0_11, %c0_12] : memref<1x256xf32, #tpu.memory_space<vmem>>, vector<1x256xf32>
      %14 = vector.broadcast %13 : vector<1x256xf32> to vector<16x256xf32>
      %15 = arith.addf %12, %14 : vector<16x256xf32>
      %cst_13 = arith.constant 0.000000e+00 : f32
      %16 = vector.broadcast %cst_13 : f32 to vector<16x256xf32>
      %17 = arith.cmpf oge, %15, %16 : vector<16x256xf32>
      %cst_14 = arith.constant 1.000000e-01 : f32
      %18 = vector.broadcast %cst_14 : f32 to vector<16x256xf32>
      %19 = arith.mulf %18, %15 : vector<16x256xf32>
      %20 = arith.select %17, %15, %19 : vector<16x256xi1>, vector<16x256xf32>
      %c0_15 = arith.constant 0 : index
      %c0_16 = arith.constant 0 : index
      %21 = vector.load %arg5[%c0_15, %c0_16] : memref<16x256xf32, #tpu.memory_space<vmem>>, vector<16x256xf32>
      tpu.vector_store %arg5[%c0_15, %c0_16], %20 {strides = array<i32>} : memref<16x256xf32, #tpu.memory_space<vmem>>, vector<16x256xf32>,
    } else {
    }
    return
  }
  func.func @transform_0(%arg0: i32, %arg1: i32) -> (i32, i32) {
    %c0_i32 = arith.constant 0 : i32
    return %arg0, %arg1 : i32, i32
  }
  func.func @transform_1(%arg0: i32, %arg1: i32) -> (i32, i32) {
    %c0_i32 = arith.constant 0 : i32
    %c0_i32_0 = arith.constant 0 : i32
    return %arg1, %c0_i32 : i32, i32
  }
  func.func @transform_2(%arg0: i32, %arg1: i32) -> (i32, i32) {
    %c0_i32 = arith.constant 0 : i32
    %c0_i32_0 = arith.constant 0 : i32
    %c0_i32_1 = arith.constant 0 : i32
    return %c0_i32, %c0_i32_0 : i32, i32
  }
  func.func @transform_3(%arg0: i32, %arg1: i32) -> (i32, i32) {
    %c0_i32 = arith.constant 0 : i32
    %c0_i32_0 = arith.constant 0 : i32
    return %arg0, %c0_i32 : i32, i32
  }
}

module attributes {stable_mosaic.version = 11 : i64} {
  func.func @_head_fused_kernel(%arg0: i32, %arg1: memref<16x256xbf16, #tpu.memory_space<vmem>>, %arg2: memref<256x256xbf16, #tpu.memory_space<vmem>>, %arg3: memref<1x256xf32, #tpu.memory_space<vmem>>, %arg4: memref<256x128xf32, #tpu.memory_space<vmem>>, %arg5: memref<1x128xf32, #tpu.memory_space<vmem>>, %arg6: memref<16x128xf32, #tpu.memory_space<vmem>>) attributes {dimension_semantics = [#tpu.dimension_semantics<parallel>], iteration_bounds = array<i64: 1>, scalar_prefetch = 0 : i64, scratch_operands = 0 : i64, tpu.core_type = #tpu.core_type<tc>, window_params = [{transform_indices = @transform_0, window_bounds = array<i64: 16, 256>}, {pipeline_mode = #tpu.pipeline_mode<synchronous>, transform_indices = @transform_1, window_bounds = array<i64: 256, 256>}, {pipeline_mode = #tpu.pipeline_mode<synchronous>, transform_indices = @transform_2, window_bounds = array<i64: 1, 256>}, {pipeline_mode = #tpu.pipeline_mode<synchronous>, transform_indices = @transform_3, window_bounds = array<i64: 256, 128>}, {pipeline_mode = #tpu.pipeline_mode<synchronous>, transform_indices = @transform_4, window_bounds = array<i64: 1, 128>}, {transform_indices = @transform_5, window_bounds = array<i64: 16, 128>}]} {
    %c0 = arith.constant 0 : index
    %c0_0 = arith.constant 0 : index
    %0 = vector.load %arg1[%c0, %c0_0] : memref<16x256xbf16, #tpu.memory_space<vmem>>, vector<16x256xbf16>
    %c0_1 = arith.constant 0 : index
    %c0_2 = arith.constant 0 : index
    %1 = vector.load %arg2[%c0_1, %c0_2] : memref<256x256xbf16, #tpu.memory_space<vmem>>, vector<256x256xbf16>
    %cst = arith.constant dense<0.000000e+00> : vector<16x256xf32>
    %2 = tpu.matmul %0, %1, %cst {dimension_numbers = #tpu.dot_dimension_numbers<[1], [0], [0], [1], [0, 0, 1, 1], [], []>} : vector<16x256xbf16>, vector<256x256xbf16>, vector<16x256xf32> -> vector<16x256xf32>
    %c0_3 = arith.constant 0 : index
    %c0_4 = arith.constant 0 : index
    %3 = vector.load %arg3[%c0_3, %c0_4] : memref<1x256xf32, #tpu.memory_space<vmem>>, vector<1x256xf32>
    %4 = vector.broadcast %3 : vector<1x256xf32> to vector<16x256xf32>
    %5 = arith.addf %2, %4 : vector<16x256xf32>
    %cst_5 = arith.constant 0.000000e+00 : f32
    %6 = vector.broadcast %cst_5 : f32 to vector<16x256xf32>
    %7 = arith.cmpf oge, %5, %6 : vector<16x256xf32>
    %cst_6 = arith.constant 1.000000e-01 : f32
    %8 = vector.broadcast %cst_6 : f32 to vector<16x256xf32>
    %9 = arith.mulf %8, %5 : vector<16x256xf32>
    %10 = arith.select %7, %5, %9 : vector<16x256xi1>, vector<16x256xf32>
    %c0_7 = arith.constant 0 : index
    %c0_8 = arith.constant 0 : index
    %11 = vector.load %arg4[%c0_7, %c0_8] : memref<256x128xf32, #tpu.memory_space<vmem>>, vector<256x128xf32>
    %cst_9 = arith.constant dense<0.000000e+00> : vector<16x128xf32>
    %12 = tpu.matmul %10, %11, %cst_9 {dimension_numbers = #tpu.dot_dimension_numbers<[1], [0], [0], [1], [0, 0, 1, 1], [], []>} : vector<16x256xf32>, vector<256x128xf32>, vector<16x128xf32> -> vector<16x128xf32>
    %c0_10 = arith.constant 0 : index
    %c0_11 = arith.constant 0 : index
    %13 = vector.load %arg5[%c0_10, %c0_11] : memref<1x128xf32, #tpu.memory_space<vmem>>, vector<1x128xf32>
    %14 = vector.broadcast %13 : vector<1x128xf32> to vector<16x128xf32>
    %15 = arith.addf %12, %14 : vector<16x128xf32>
    %c0_12 = arith.constant 0 : index
    %c0_13 = arith.constant 0 : index
    %16 = vector.load %arg6[%c0_12, %c0_13] : memref<16x128xf32, #tpu.memory_space<vmem>>, vector<16x128xf32>
    tpu.vector_store %arg6[%c0_12, %c0_13], %15 {strides = array<i32>} : memref<16x128xf32, #tpu.memory_space<vmem>>, vector<16x128xf32>,
    return
  }
  func.func @transform_0(%arg0: i32) -> (i32, i32) {
    %c0_i32 = arith.constant 0 : i32
    %c0_i32_0 = arith.constant 0 : i32
    return %arg0, %c0_i32 : i32, i32
  }
  func.func @transform_1(%arg0: i32) -> (i32, i32) {
    %c0_i32 = arith.constant 0 : i32
    %c0_i32_0 = arith.constant 0 : i32
    %c0_i32_1 = arith.constant 0 : i32
    return %c0_i32, %c0_i32_0 : i32, i32
  }
  func.func @transform_2(%arg0: i32) -> (i32, i32) {
    %c0_i32 = arith.constant 0 : i32
    %c0_i32_0 = arith.constant 0 : i32
    %c0_i32_1 = arith.constant 0 : i32
    return %c0_i32, %c0_i32_0 : i32, i32
  }
  func.func @transform_3(%arg0: i32) -> (i32, i32) {
    %c0_i32 = arith.constant 0 : i32
    %c0_i32_0 = arith.constant 0 : i32
    %c0_i32_1 = arith.constant 0 : i32
    return %c0_i32, %c0_i32_0 : i32, i32
  }
  func.func @transform_4(%arg0: i32) -> (i32, i32) {
    %c0_i32 = arith.constant 0 : i32
    %c0_i32_0 = arith.constant 0 : i32
    %c0_i32_1 = arith.constant 0 : i32
    return %c0_i32, %c0_i32_0 : i32, i32
  }
  func.func @transform_5(%arg0: i32) -> (i32, i32) {
    %c0_i32 = arith.constant 0 : i32
    %c0_i32_0 = arith.constant 0 : i32
    return %arg0, %c0_i32 : i32, i32
  }
}

</mosaic_0001>

<llo_original>
// kernel: classifier_forward.5
$region0: #{classifier_forward.5}
  #allocation0 [shape = 'u32[]', space=smem, size = 0x4, offset = 0x4, fixed_abs, tag = 'smem constant byte address 0x4 - core index']
  #allocation1 [shape = 'u32[72,128]{1,0:T(1,128)}', space=vmem, size = 0x9000, scoped, tag = 'internal scratch']
  #allocation2 [shape = 'f32[256,256]{1,0:T(8,128)}', space=vmem, size = 0x40000, scoped, tag = 'scratch operand']
  %s0 = inlined_call_operand.vmem [shape: bf16[512,2304], index: 0, kind: input, shape index: {}]
  %s1 = inlined_call_operand.vmem [shape: bf16[2304,256], index: 1, kind: input, shape index: {}]
  %s2 = inlined_call_operand.vmem [shape: f32[1,256], index: 2, kind: input, shape index: {}]
  %s3 = inlined_call_operand.vmem [shape: f32[512,256], index: 3, kind: output, shape index: {}]
  %s4 = sld [smem:[#allocation0]]
  $region91: #{classifier_forward.5} parent=0
    _
  %s6 = ssub.s32 1, %s4
  %s7 = scalar_select 0, %s6, %s4
  $region1: #{classifier_forward.5} parent=0
    #allocation3 [shape = 'u8[262144]{0}', space=vmem, size = 0x40000, scoped, tag = 'input window, operand 0']
    loop: start=0, step=1, limit=20
    $region2: #{classifier_forward.5} parent=1 // loop_pre_header
      _
    $region3: #{classifier_forward.5} parent=1 // loop_header
      %s9 = sphi 0, %s13
      %p10 = scmp.ge.s32.totalorder %s9, 20
      %s16 = sphi 0, %s28
      %s17 = sphi 0, %s24
      %s18 = sphi 0, %s16
      %s19 = sphi 0, %s17
      %s20 = sphi 0, %s18
      %s21 = sphi 0, %s19
      %s33 = sphi 0, %s35
      %s36 = sphi 0, %s33
      %s37 = sphi 0, %s36
      %s53 = sphi 0, %s37
      %s59 = sphi 0, %s61
      %s62 = sphi 0, %s59
      %s63 = sphi 0, %s62
      %s79 = sphi 0, %s63
      %s83 = sphi 0, %s83
      %s85 = sphi 0, %s83
      %s86 = sphi 0, %s85
      %s100 = sphi 0, %s86
      %s106 = sphi 0, %s108
      %s109 = sphi 0, %s106
      %s110 = sphi 0, %s109
      %s126 = sphi 0, %s110
    $region4: #{classifier_forward.5} parent=1 // loop_header_branch
      %12 = sbr.rel (%p10) target = $region8
    $region5: #{classifier_forward.5} parent=1 // loop_body
      %s14 = ssub.s32 %s9, 1
      %s15 = ssub.s32 %s9, 2
      %s22 = sadd.s32 1, %s17
      %p23 = scmp.ge.s32.totalorder %s22, 9
      %s24 = scalar_select %p23, 0, %s22
      %s25 = sadd.s32 1, %s16
      %s26 = scalar_select %p23, %s25, %s16
      %p27 = scmp.ge.s32.totalorder %s26, 2
      %s28 = scalar_select %p27, 0, %s26
      %s29 = ssub.s32 %s16, %s28
      %s30 = ssub.s32 %s17, %s24
      %s31 = sor.u32 %s29, %s30
      %p32 = scmp.eq.s32.totalorder %s31, 0
      %s34 = sadd.s32 %s33, 1
      %s35 = scalar_select %p32, %s33, %s34
      %p38 = pneg %p32
      %p39 = scmp.eq.s32.totalorder %s9, 17
      %p40 = por %p38, %p39
      %p41 = scmp.ne.s32.totalorder %s33, %s36
      %p42 = scmp.eq.s32.totalorder %s9, 0
      %p43 = por %p41, %p42
      %p44 = scmp.ne.s32.totalorder %s33, %s36
      %p45 = scmp.eq.s32.totalorder %s14, 17
      %p46 = por %p44, %p45
      %p47 = scmp.ne.s32.totalorder %s36, %s37
      %p48 = scmp.eq.s32.totalorder %s14, 0
      %p49 = por %p47, %p48
      %p50 = scmp.ne.s32.totalorder %s36, %s37
      %p51 = scmp.eq.s32.totalorder %s15, 17
      %p52 = por %p50, %p51
      %p54 = scmp.ne.s32.totalorder %s37, %s53
      %p55 = scmp.eq.s32.totalorder %s15, 0
      %p56 = por %p54, %p55
      %s57 = ssub.s32 %s17, %s24
      %p58 = scmp.eq.s32.totalorder %s57, 0
      %s60 = sadd.s32 %s59, 1
      %s61 = scalar_select %p58, %s59, %s60
      %p64 = pneg %p58
      %p65 = scmp.eq.s32.totalorder %s9, 17
      %p66 = por %p64, %p65
      %p67 = scmp.ne.s32.totalorder %s59, %s62
      %p68 = scmp.eq.s32.totalorder %s9, 0
      %p69 = por %p67, %p68
      %p70 = scmp.ne.s32.totalorder %s59, %s62
      %p71 = scmp.eq.s32.totalorder %s14, 17
      %p72 = por %p70, %p71
      %p73 = scmp.ne.s32.totalorder %s62, %s63
      %p74 = scmp.eq.s32.totalorder %s14, 0
      %p75 = por %p73, %p74
      %p76 = scmp.ne.s32.totalorder %s62, %s63
      %p77 = scmp.eq.s32.totalorder %s15, 17
      %p78 = por %p76, %p77
      %p80 = scmp.ne.s32.totalorder %s63, %s79
      %p81 = scmp.eq.s32.totalorder %s15, 0
      %p82 = por %p80, %p81
      %s84 = sadd.s32 %s83, 1
      %p87 = scmp.eq.s32.totalorder %s9, 17
      %p88 = scmp.ne.s32.totalorder %s83, %s85
      %p89 = scmp.eq.s32.totalorder %s9, 0
      %p90 = por %p88, %p89
      %p91 = scmp.ne.s32.totalorder %s83, %s85
      %p92 = scmp.eq.s32.totalorder %s14, 17
      %p93 = por %p91, %p92
      %p94 = scmp.ne.s32.totalorder %s85, %s86
      %p95 = scmp.eq.s32.totalorder %s14, 0
      %p96 = por %p94, %p95
      %p97 = scmp.ne.s32.totalorder %s85, %s86
      %p98 = scmp.eq.s32.totalorder %s15, 17
      %p99 = por %p97, %p98
      %p101 = scmp.ne.s32.totalorder %s86, %s100
      %p102 = scmp.eq.s32.totalorder %s15, 0
      %p103 = por %p101, %p102
      %s104 = ssub.s32 %s16, %s28
      %p105 = scmp.eq.s32.totalorder %s104, 0
      %s107 = sadd.s32 %s106, 1
      %s108 = scalar_select %p105, %s106, %s107
      %p111 = pneg %p105
      %p112 = scmp.eq.s32.totalorder %s9, 17
      %p113 = por %p111, %p112
      %p114 = scmp.ne.s32.totalorder %s106, %s109
      %p115 = scmp.eq.s32.totalorder %s9, 0
      %p116 = por %p114, %p115
      %p117 = scmp.ne.s32.totalorder %s106, %s109
      %p118 = scmp.eq.s32.totalorder %s14, 17
      %p119 = por %p117, %p118
      %p120 = scmp.ne.s32.totalorder %s109, %s110
      %p121 = scmp.eq.s32.totalorder %s14, 0
      %p122 = por %p120, %p121
      %p123 = scmp.ne.s32.totalorder %s109, %s110
      %p124 = scmp.eq.s32.totalorder %s15, 17
      %p125 = por %p123, %p124
      %p127 = scmp.ne.s32.totalorder %s110, %s126
      %p128 = scmp.eq.s32.totalorder %s15, 0
      %p129 = por %p127, %p128
      %p130 = scmp.le.s32.totalorder 1, %s9
      %p131 = scmp.lt.s32.totalorder %s9, 19
      %p132 = pnand %p130, %p131
      %p133 = pneg %p132
      // Predicated region
      $region9: #{classifier_forward.5} parent=5 // pred_check
        _
      $region10: #{classifier_forward.5} parent=5 // pred_check_branch
        %135 = sbr.rel (%p132) target = $region12
      $region11: #{classifier_forward.5} parent=5 // pred_region
        %s136 = ssub.s32 %s9, 1
        // Predicated region
        $region13: #{classifier_forward.5} parent=11 // pred_check
          %p137 = pneg %p96
        $region14: #{classifier_forward.5} parent=11 // pred_check_branch
          %139 = sbr.rel (%p137) target = $region16
        $region15: #{classifier_forward.5} parent=11 // pred_region
          _
        $region16: #{classifier_forward.5} parent=11 // pred_fallthru
          _
      $region12: #{classifier_forward.5} parent=5 // pred_fallthru
        _
      %p140 = scmp.lt.s32.totalorder %s9, 18
      // Predicated region
      $region17: #{classifier_forward.5} parent=5 // pred_check
        %p141 = pneg %p140
      $region18: #{classifier_forward.5} parent=5 // pred_check_branch
        %143 = sbr.rel (%p141) target = $region20
      $region19: #{classifier_forward.5} parent=5 // pred_region
        // Predicated region
        $region21: #{classifier_forward.5} parent=19 // pred_check
          %p144 = pneg %p43
        $region22: #{classifier_forward.5} parent=19 // pred_check_branch
          %146 = sbr.rel (%p144) target = $region24
        $region23: #{classifier_forward.5} parent=19 // pred_region
          %s147 = sand.u32 %s33, 1
          %s148 = sand.u32 %s33, 1
          %s149 = smul.addr %s148, 256
          %s150 = scalar_lea.vmem [#allocation3], %s149
          %s151 = smul.u32 32, %s16
          %s152 = smul.u32 2, %s17
          %s153 = smul.addr %s151, 18
          %s154 = sadd.s32 %s152, %s153
          %s155 = smul.addr %s154, 4
          %s156 = scalar_lea.vmem %s0, %s155
          // Predicated region
          $region25: #{classifier_forward.5} parent=23 // pred_check
            _
          $region26: #{classifier_forward.5} parent=23 // pred_check_branch
            %158 = sbr.rel (0) target = $region28
          $region27: #{classifier_forward.5} parent=23 // pred_region
            // Predicated region
            $region29: #{classifier_forward.5} parent=27 // pred_check
              _
            $region30: #{classifier_forward.5} parent=27 // pred_check_branch
              %160 = sbr.rel (0) target = $region32
            $region31: #{classifier_forward.5} parent=27 // pred_region
              // Predicated region
              $region44: #{classifier_forward.5} parent=31 // pred_check
                _
              $region45: #{classifier_forward.5} parent=31 // pred_check_branch
                %238 = sbr.rel (0) target = $region47
              $region46: #{classifier_forward.5} parent=31 // pred_region
                loop: start=0, step=1, limit=1
                $region48: #{classifier_forward.5} parent=46 // loop_pre_header
                  _
                $region49: #{classifier_forward.5} parent=46 // loop_header
                  %s240 = sphi 0, %s244
                  %p241 = scmp.ge.s32.totalorder %s240, 1
                  %s245 = sphi %s156, %s156
                  %s246 = sphi %s150, %s150
                $region50: #{classifier_forward.5} parent=46 // loop_header_branch
                  %243 = sbr.rel (%p241) target = $region54
                $region51: #{classifier_forward.5} parent=46 // loop_body
                  %v247 = vld [vmem:[%s245] sm:$0xff]
                  %248 = vst [vmem:[%s246] sm:$0xff] %v247
                  %v249 = vld [vmem:[%s245 + $0x48] sm:$0xff]
                  %250 = vst [vmem:[%s246 + $0x8] sm:$0xff] %v249
                  %v251 = vld [vmem:[%s245 + $0x90] sm:$0xff]
                  %252 = vst [vmem:[%s246 + $0x10] sm:$0xff] %v251
                  %v253 = vld [vmem:[%s245 + $0xd8] sm:$0xff]
                  %254 = vst [vmem:[%s246 + $0x18] sm:$0xff] %v253
                  %v255 = vld [vmem:[%s245 + $0x120] sm:$0xff]
                  %256 = vst [vmem:[%s246 + $0x20] sm:$0xff] %v255
                  %v257 = vld [vmem:[%s245 + $0x168] sm:$0xff]
                  %258 = vst [vmem:[%s246 + $0x28] sm:$0xff] %v257
                  %v259 = vld [vmem:[%s245 + $0x1b0] sm:$0xff]
                  %260 = vst [vmem:[%s246 + $0x30] sm:$0xff] %v259
                  %v261 = vld [vmem:[%s245 + $0x1f8] sm:$0xff]
                  %262 = vst [vmem:[%s246 + $0x38] sm:$0xff] %v261
                  %v263 = vld [vmem:[%s245 + $0x240] sm:$0xff]
                  %264 = vst [vmem:[%s246 + $0x40] sm:$0xff] %v263
                  %v265 = vld [vmem:[%s245 + $0x288] sm:$0xff]
                  %266 = vst [vmem:[%s246 + $0x48] sm:$0xff] %v265
                  %v267 = vld [vmem:[%s245 + $0x2d0] sm:$0xff]
                  %268 = vst [vmem:[%s246 + $0x50] sm:$0xff] %v267
                  %v269 = vld [vmem:[%s245 + $0x318] sm:$0xff]
                  %270 = vst [vmem:[%s246 + $0x58] sm:$0xff] %v269
                  %v271 = vld [vmem:[%s245 + $0x360] sm:$0xff]
                  %272 = vst [vmem:[%s246 + $0x60] sm:$0xff] %v271
                  %v273 = vld [vmem:[%s245 + $0x3a8] sm:$0xff]
                  %274 = vst [vmem:[%s246 + $0x68] sm:$0xff] %v273
                  %v275 = vld [vmem:[%s245 + $0x3f0] sm:$0xff]
                  %276 = vst [vmem:[%s246 + $0x70] sm:$0xff] %v275
                  %v277 = vld [vmem:[%s245 + $0x438] sm:$0xff]
                  %278 = vst [vmem:[%s246 + $0x78] sm:$0xff] %v277
                  %v279 = vld [vmem:[%s245 + $0x480] sm:$0xff]
                  %280 = vst [vmem:[%s246 + $0x80] sm:$0xff] %v279
                  %v281 = vld [vmem:[%s245 + $0x4c8] sm:$0xff]
                  %282 = vst [vmem:[%s246 + $0x88] sm:$0xff] %v281
                  %v283 = vld [vmem:[%s245 + $0x510] sm:$0xff]
                  %284 = vst [vmem:[%s246 + $0x90] sm:$0xff] %v283
                  %v285 = vld [vmem:[%s245 + $0x558] sm:$0xff]
                  %286 = vst [vmem:[%s246 + $0x98] sm:$0xff] %v285
                  %v287 = vld [vmem:[%s245 + $0x5a0] sm:$0xff]
                  %288 = vst [vmem:[%s246 + $0xa0] sm:$0xff] %v287
                  %v289 = vld [vmem:[%s245 + $0x5e8] sm:$0xff]
                  %290 = vst [vmem:[%s246 + $0xa8] sm:$0xff] %v289
                  %v291 = vld [vmem:[%s245 + $0x630] sm:$0xff]
                  %292 = vst [vmem:[%s246 + $0xb0] sm:$0xff] %v291
                  %v293 = vld [vmem:[%s245 + $0x678] sm:$0xff]
                  %294 = vst [vmem:[%s246 + $0xb8] sm:$0xff] %v293
                  %v295 = vld [vmem:[%s245 + $0x6c0] sm:$0xff]
                  %296 = vst [vmem:[%s246 + $0xc0] sm:$0xff] %v295
                  %v297 = vld [vmem:[%s245 + $0x708] sm:$0xff]
                  %298 = vst [vmem:[%s246 + $0xc8] sm:$0xff] %v297
                  %v299 = vld [vmem:[%s245 + $0x750] sm:$0xff]
                  %300 = vst [vmem:[%s246 + $0xd0] sm:$0xff] %v299
                  %v301 = vld [vmem:[%s245 + $0x798] sm:$0xff]
                  %302 = vst [vmem:[%s246 + $0xd8] sm:$0xff] %v301
                  %v303 = vld [vmem:[%s245 + $0x7e0] sm:$0xff]
                  %304 = vst [vmem:[%s246 + $0xe0] sm:$0xff] %v303
                  %v305 = vld [vmem:[%s245 + $0x828] sm:$0xff]
                  %306 = vst [vmem:[%s246 + $0xe8] sm:$0xff] %v305
                  %v307 = vld [vmem:[%s245 + $0x870] sm:$0xff]
                  %308 = vst [vmem:[%s246 + $0xf0] sm:$0xff] %v307
                  %v309 = vld [vmem:[%s245 + $0x8b8] sm:$0xff]
                  %310 = vst [vmem:[%s246 + $0xf8] sm:$0xff] %v309
                $region52: #{classifier_forward.5} parent=46 // loop_footer
                  %s244 = sadd.s32 1, %s240
                $region53: #{classifier_forward.5} parent=46 // loop_footer_branch
                  %239 = sbr.rel target = $region49
                $region54: #{classifier_forward.5} parent=46 // loop_exit
                  _
              $region47: #{classifier_forward.5} parent=31 // pred_fallthru
                _
              // Predicated region
              $region55: #{classifier_forward.5} parent=31 // pred_check
                _
              $region56: #{classifier_forward.5} parent=31 // pred_check_branch
                %312 = sbr.rel target = $region58
              $region57: #{classifier_forward.5} parent=31 // pred_region
                _
              $region58: #{classifier_forward.5} parent=31 // pred_fallthru
                _
            $region32: #{classifier_forward.5} parent=27 // pred_fallthru
              _
            // Predicated region
            $region33: #{classifier_forward.5} parent=27 // pred_check
              _
            $region34: #{classifier_forward.5} parent=27 // pred_check_branch
              %162 = sbr.rel target = $region36
            $region35: #{classifier_forward.5} parent=27 // pred_region
              %s164 = ssub.s32 256, 1
              loop: start=0, step=1, limit=1
              $region37: #{classifier_forward.5} parent=35 // loop_pre_header
                _
              $region38: #{classifier_forward.5} parent=35 // loop_header
                %s166 = sphi 0, %s170
                %p167 = scmp.ge.s32.totalorder %s166, 1
                %s171 = sphi %s156, %s156
                %s172 = sphi %s150, %s150
              $region39: #{classifier_forward.5} parent=35 // loop_header_branch
                %169 = sbr.rel (%p167) target = $region43
              $region40: #{classifier_forward.5} parent=35 // loop_body
                %v173 = vld [vmem:[%s171] sm:%s164]
                %174 = vst [vmem:[%s172] sm:%s164] %v173
                %v175 = vld [vmem:[%s171 + $0x48] sm:%s164]
                %176 = vst [vmem:[%s172 + $0x8] sm:%s164] %v175
                %v177 = vld [vmem:[%s171 + $0x90] sm:%s164]
                %178 = vst [vmem:[%s172 + $0x10] sm:%s164] %v177
                %v179 = vld [vmem:[%s171 + $0xd8] sm:%s164]
                %180 = vst [vmem:[%s172 + $0x18] sm:%s164] %v179
                %v181 = vld [vmem:[%s171 + $0x120] sm:%s164]
                %182 = vst [vmem:[%s172 + $0x20] sm:%s164] %v181
                %v183 = vld [vmem:[%s171 + $0x168] sm:%s164]
                %184 = vst [vmem:[%s172 + $0x28] sm:%s164] %v183
                %v185 = vld [vmem:[%s171 + $0x1b0] sm:%s164]
                %186 = vst [vmem:[%s172 + $0x30] sm:%s164] %v185
                %v187 = vld [vmem:[%s171 + $0x1f8] sm:%s164]
                %188 = vst [vmem:[%s172 + $0x38] sm:%s164] %v187
                %v189 = vld [vmem:[%s171 + $0x240] sm:%s164]
                %190 = vst [vmem:[%s172 + $0x40] sm:%s164] %v189
                %v191 = vld [vmem:[%s171 + $0x288] sm:%s164]
                %192 = vst [vmem:[%s172 + $0x48] sm:%s164] %v191
                %v193 = vld [vmem:[%s171 + $0x2d0] sm:%s164]
                %194 = vst [vmem:[%s172 + $0x50] sm:%s164] %v193
                %v195 = vld [vmem:[%s171 + $0x318] sm:%s164]
                %196 = vst [vmem:[%s172 + $0x58] sm:%s164] %v195
                %v197 = vld [vmem:[%s171 + $0x360] sm:%s164]
                %198 = vst [vmem:[%s172 + $0x60] sm:%s164] %v197
                %v199 = vld [vmem:[%s171 + $0x3a8] sm:%s164]
                %200 = vst [vmem:[%s172 + $0x68] sm:%s164] %v199
                %v201 = vld [vmem:[%s171 + $0x3f0] sm:%s164]
                %202 = vst [vmem:[%s172 + $0x70] sm:%s164] %v201
                %v203 = vld [vmem:[%s171 + $0x438] sm:%s164]
                %204 = vst [vmem:[%s172 + $0x78] sm:%s164] %v203
                %v205 = vld [vmem:[%s171 + $0x480] sm:%s164]
                %206 = vst [vmem:[%s172 + $0x80] sm:%s164] %v205
                %v207 = vld [vmem:[%s171 + $0x4c8] sm:%s164]
                %208 = vst [vmem:[%s172 + $0x88] sm:%s164] %v207
                %v209 = vld [vmem:[%s171 + $0x510] sm:%s164]
                %210 = vst [vmem:[%s172 + $0x90] sm:%s164] %v209
                %v211 = vld [vmem:[%s171 + $0x558] sm:%s164]
                %212 = vst [vmem:[%s172 + $0x98] sm:%s164] %v211
                %v213 = vld [vmem:[%s171 + $0x5a0] sm:%s164]
                %214 = vst [vmem:[%s172 + $0xa0] sm:%s164] %v213
                %v215 = vld [vmem:[%s171 + $0x5e8] sm:%s164]
                %216 = vst [vmem:[%s172 + $0xa8] sm:%s164] %v215
                %v217 = vld [vmem:[%s171 + $0x630] sm:%s164]
                %218 = vst [vmem:[%s172 + $0xb0] sm:%s164] %v217
                %v219 = vld [vmem:[%s171 + $0x678] sm:%s164]
                %220 = vst [vmem:[%s172 + $0xb8] sm:%s164] %v219
                %v221 = vld [vmem:[%s171 + $0x6c0] sm:%s164]
                %222 = vst [vmem:[%s172 + $0xc0] sm:%s164] %v221
                %v223 = vld [vmem:[%s171 + $0x708] sm:%s164]
                %224 = vst [vmem:[%s172 + $0xc8] sm:%s164] %v223
                %v225 = vld [vmem:[%s171 + $0x750] sm:%s164]
                %226 = vst [vmem:[%s172 + $0xd0] sm:%s164] %v225
                %v227 = vld [vmem:[%s171 + $0x798] sm:%s164]
                %228 = vst [vmem:[%s172 + $0xd8] sm:%s164] %v227
                %v229 = vld [vmem:[%s171 + $0x7e0] sm:%s164]
                %230 = vst [vmem:[%s172 + $0xe0] sm:%s164] %v229
                %v231 = vld [vmem:[%s171 + $0x828] sm:%s164]
                %232 = vst [vmem:[%s172 + $0xe8] sm:%s164] %v231
                %v233 = vld [vmem:[%s171 + $0x870] sm:%s164]
                %234 = vst [vmem:[%s172 + $0xf0] sm:%s164] %v233
                %v235 = vld [vmem:[%s171 + $0x8b8] sm:%s164]
                %236 = vst [vmem:[%s172 + $0xf8] sm:%s164] %v235
              $region41: #{classifier_forward.5} parent=35 // loop_footer
                %s170 = sadd.s32 1, %s166
              $region42: #{classifier_forward.5} parent=35 // loop_footer_branch
                %165 = sbr.rel target = $region38
              $region43: #{classifier_forward.5} parent=35 // loop_exit
                _
            $region36: #{classifier_forward.5} parent=27 // pred_fallthru
              _
          $region28: #{classifier_forward.5} parent=23 // pred_fallthru
            _
          %313 = vnop
        $region24: #{classifier_forward.5} parent=19 // pred_fallthru
          _
        // Predicated region
        $region59: #{classifier_forward.5} parent=19 // pred_check
          %p314 = pneg %p69
        $region60: #{classifier_forward.5} parent=19 // pred_check_branch
          %316 = sbr.rel (%p314) target = $region62
        $region61: #{classifier_forward.5} parent=19 // pred_region
          %s317 = smul.u32 32, %s17
          %p318 = scmp.lt.s32.totalorder %s317, 287
          %s319 = scalar_select %p318, %s317, 287
          %s320 = smul.addr %s319, 2
          %s321 = smul.addr %s320, 4
          %s322 = scalar_lea.vmem %s1, %s321
          %s323 = smul.u32 32, %s17
        $region62: #{classifier_forward.5} parent=19 // pred_fallthru
          _
      $region20: #{classifier_forward.5} parent=5 // pred_fallthru
        _
      %p324 = scmp.le.s32.totalorder 1, %s9
      %p325 = scmp.lt.s32.totalorder %s9, 19
      %p326 = pnand %p324, %p325
      %p327 = pneg %p326
      // Predicated region
      $region63: #{classifier_forward.5} parent=5 // pred_check
        _
      $region64: #{classifier_forward.5} parent=5 // pred_check_branch
        %329 = sbr.rel (%p326) target = $region66
      $region65: #{classifier_forward.5} parent=5 // pred_region
        %s330 = ssub.s32 %s9, 1
        %s331 = sand.u32 %s36, 1
        %s332 = sand.u32 %s36, 1
        %s333 = smul.addr %s332, 256
        %s334 = scalar_lea.vmem [#allocation3], %s333
        // Predicated region
        $region67: #{classifier_forward.5} parent=65 // pred_check
          %p335 = pneg %p49
        $region68: #{classifier_forward.5} parent=65 // pred_check_branch
          %337 = sbr.rel (%p335) target = $region70
        $region69: #{classifier_forward.5} parent=65 // pred_region
          _
        $region70: #{classifier_forward.5} parent=65 // pred_fallthru
          _
        %s338 = sand.u32 %s36, 1
        %s339 = sand.u32 %s36, 1
        %s340 = smul.addr %s339, 256
        %s341 = scalar_lea.vmem [#allocation3], %s340
        %p342 = pneg %p49
        %p343 = pneg %p46
        %s344 = smul.u32 32, %s19
        %p345 = scmp.lt.s32.totalorder %s344, 287
        %s346 = scalar_select %p345, %s344, 287
        %s347 = smul.addr %s346, 2
        %s348 = smul.addr %s347, 4
        %s349 = scalar_lea.vmem %s1, %s348
        %p350 = pneg %p75
        %p351 = pneg %p72
        %p352 = pneg %p96
        %p353 = pneg %p93
        %p354 = pneg %p122
        %p355 = pneg %p119
        %s356 = smul.u32 32, %s18
        %p357 = scmp.lt.s32.totalorder %s356, 63
        %s358 = scalar_select %p357, %s356, 63
        %s359 = smul.addr %s358, 2
        %s360 = smul.addr %s359, 8
        %s361 = scalar_lea.vmem %s3, %s360
        %s362 = smul.u32 32, %s18
        %s363 = smul.u32 2, %s19
        %s364 = smul.u32 32, %s19
        %p365 = scmp.lt.s32.totalorder %s364, 287
        %s366 = scalar_select %p365, %s364, 287
        %s367 = smul.addr %s366, 2
        %s368 = smul.addr %s367, 4
        %s369 = scalar_lea.vmem %s1, %s368
        %s370 = smul.u32 32, %s19
        %s371 = smul.u32 32, %s18
        %p372 = scmp.lt.s32.totalorder %s371, 63
        %s373 = scalar_select %p372, %s371, 63
        %s374 = smul.addr %s373, 2
        %s375 = smul.addr %s374, 8
        %s376 = scalar_lea.vmem %s3, %s375
        %s377 = smul.u32 32, %s18
        %p378 = scmp.eq.s32.totalorder %s19, 0
        // Predicated region
        $region71: #{classifier_forward.5} parent=65 // pred_check
          %p379 = pneg %p378
        $region72: #{classifier_forward.5} parent=65 // pred_check_branch
          %381 = sbr.rel (%p379) target = $region74
        $region73: #{classifier_forward.5} parent=65 // pred_region
          %382 = vst [vmem:[#allocation2] sm:$0xff] 0.0
          %383 = vst [vmem:[#allocation2 + $0x8] sm:$0xff] 0.0
          %384 = vst [vmem:[#allocation2 + $0x10] sm:$0xff] 0.0
          %385 = vst [vmem:[#allocation2 + $0x18] sm:$0xff] 0.0
          %386 = vst [vmem:[#allocation2 + $0x20] sm:$0xff] 0.0
          %387 = vst [vmem:[#allocation2 + $0x28] sm:$0xff] 0.0
          %388 = vst [vmem:[#allocation2 + $0x30] sm:$0xff] 0.0
          %389 = vst [vmem:[#allocation2 + $0x38] sm:$0xff] 0.0
          %390 = vst [vmem:[#allocation2 + $0x40] sm:$0xff] 0.0
          %391 = vst [vmem:[#allocation2 + $0x48] sm:$0xff] 0.0
          %392 = vst [vmem:[#allocation2 + $0x50] sm:$0xff] 0.0
          %393 = vst [vmem:[#allocation2 + $0x58] sm:$0xff] 0.0
          %394 = vst [vmem:[#allocation2 + $0x60] sm:$0xff] 0.0
          %395 = vst [vmem:[#allocation2 + $0x68] sm:$0xff] 0.0
          %396 = vst [vmem:[#allocation2 + $0x70] sm:$0xff] 0.0
          %397 = vst [vmem:[#allocation2 + $0x78] sm:$0xff] 0.0
          %398 = vst [vmem:[#allocation2 + $0x80] sm:$0xff] 0.0
          %399 = vst [vmem:[#allocation2 + $0x88] sm:$0xff] 0.0
          %400 = vst [vmem:[#allocation2 + $0x90] sm:$0xff] 0.0
          %401 = vst [vmem:[#allocation2 + $0x98] sm:$0xff] 0.0
          %402 = vst [vmem:[#allocation2 + $0xa0] sm:$0xff] 0.0
          %403 = vst [vmem:[#allocation2 + $0xa8] sm:$0xff] 0.0
          %404 = vst [vmem:[#allocation2 + $0xb0] sm:$0xff] 0.0
          %405 = vst [vmem:[#allocation2 + $0xb8] sm:$0xff] 0.0
          %406 = vst [vmem:[#allocation2 + $0xc0] sm:$0xff] 0.0
          %407 = vst [vmem:[#allocation2 + $0xc8] sm:$0xff] 0.0
          %408 = vst [vmem:[#allocation2 + $0xd0] sm:$0xff] 0.0
          %409 = vst [vmem:[#allocation2 + $0xd8] sm:$0xff] 0.0
          %410 = vst [vmem:[#allocation2 + $0xe0] sm:$0xff] 0.0
          %411 = vst [vmem:[#allocation2 + $0xe8] sm:$0xff] 0.0
          %412 = vst [vmem:[#allocation2 + $0xf0] sm:$0xff] 0.0
          %413 = vst [vmem:[#allocation2 + $0xf8] sm:$0xff] 0.0
          %414 = vst [vmem:[#allocation2 + $0x100] sm:$0xff] 0.0
          %415 = vst [vmem:[#allocation2 + $0x108] sm:$0xff] 0.0
          %416 = vst [vmem:[#allocation2 + $0x110] sm:$0xff] 0.0
          %417 = vst [vmem:[#allocation2 + $0x118] sm:$0xff] 0.0
          %418 = vst [vmem:[#allocation2 + $0x120] sm:$0xff] 0.0
          %419 = vst [vmem:[#allocation2 + $0x128] sm:$0xff] 0.0
          %420 = vst [vmem:[#allocation2 + $0x130] sm:$0xff] 0.0
          %421 = vst [vmem:[#allocation2 + $0x138] sm:$0xff] 0.0
          %422 = vst [vmem:[#allocation2 + $0x140] sm:$0xff] 0.0
          %423 = vst [vmem:[#allocation2 + $0x148] sm:$0xff] 0.0
          %424 = vst [vmem:[#allocation2 + $0x150] sm:$0xff] 0.0
          %425 = vst [vmem:[#allocation2 + $0x158] sm:$0xff] 0.0
          %426 = vst [vmem:[#allocation2 + $0x160] sm:$0xff] 0.0
          %427 = vst [vmem:[#allocation2 + $0x168] sm:$0xff] 0.0
          %428 = vst [vmem:[#allocation2 + $0x170] sm:$0xff] 0.0
          %429 = vst [vmem:[#allocation2 + $0x178] sm:$0xff] 0.0
          %430 = vst [vmem:[#allocation2 + $0x180] sm:$0xff] 0.0
          %431 = vst [vmem:[#allocation2 + $0x188] sm:$0xff] 0.0
          %432 = vst [vmem:[#allocation2 + $0x190] sm:$0xff] 0.0
          %433 = vst [vmem:[#allocation2 + $0x198] sm:$0xff] 0.0
          %434 = vst [vmem:[#allocation2 + $0x1a0] sm:$0xff] 0.0
          %435 = vst [vmem:[#allocation2 + $0x1a8] sm:$0xff] 0.0
          %436 = vst [vmem:[#allocation2 + $0x1b0] sm:$0xff] 0.0
          %437 = vst [vmem:[#allocation2 + $0x1b8] sm:$0xff] 0.0
          %438 = vst [vmem:[#allocation2 + $0x1c0] sm:$0xff] 0.0
          %439 = vst [vmem:[#allocation2 + $0x1c8] sm:$0xff] 0.0
          %440 = vst [vmem:[#allocation2 + $0x1d0] sm:$0xff] 0.0
          %441 = vst [vmem:[#allocation2 + $0x1d8] sm:$0xff] 0.0
          %442 = vst [vmem:[#allocation2 + $0x1e0] sm:$0xff] 0.0
          %443 = vst [vmem:[#allocation2 + $0x1e8] sm:$0xff] 0.0
          %444 = vst [vmem:[#allocation2 + $0x1f0] sm:$0xff] 0.0
          %445 = vst [vmem:[#allocation2 + $0x1f8] sm:$0xff] 0.0
        $region74: #{classifier_forward.5} parent=65 // pred_fallthru
          _
        %v446 = vld [vmem:[#allocation2] sm:$0xff]
        %v447 = vld [vmem:[#allocation2 + $0x8] sm:$0xff]
        %v448 = vld [vmem:[#allocation2 + $0x10] sm:$0xff]
        %v449 = vld [vmem:[#allocation2 + $0x18] sm:$0xff]
        %v450 = vld [vmem:[#allocation2 + $0x20] sm:$0xff]
        %v451 = vld [vmem:[#allocation2 + $0x28] sm:$0xff]
        %v452 = vld [vmem:[#allocation2 + $0x30] sm:$0xff]
        %v453 = vld [vmem:[#allocation2 + $0x38] sm:$0xff]
        %v454 = vld [vmem:[#allocation2 + $0x40] sm:$0xff]
        %v455 = vld [vmem:[#allocation2 + $0x48] sm:$0xff]
        %v456 = vld [vmem:[#allocation2 + $0x50] sm:$0xff]
        %v457 = vld [vmem:[#allocation2 + $0x58] sm:$0xff]
        %v458 = vld [vmem:[#allocation2 + $0x60] sm:$0xff]
        %v459 = vld [vmem:[#allocation2 + $0x68] sm:$0xff]
        %v460 = vld [vmem:[#allocation2 + $0x70] sm:$0xff]
        %v461 = vld [vmem:[#allocation2 + $0x78] sm:$0xff]
        %v462 = vld [vmem:[#allocation2 + $0x80] sm:$0xff]
        %v463 = vld [vmem:[#allocation2 + $0x88] sm:$0xff]
        %v464 = vld [vmem:[#allocation2 + $0x90] sm:$0xff]
        %v465 = vld [vmem:[#allocation2 + $0x98] sm:$0xff]
        %v466 = vld [vmem:[#allocation2 + $0xa0] sm:$0xff]
        %v467 = vld [vmem:[#allocation2 + $0xa8] sm:$0xff]
        %v468 = vld [vmem:[#allocation2 + $0xb0] sm:$0xff]
        %v469 = vld [vmem:[#allocation2 + $0xb8] sm:$0xff]
        %v470 = vld [vmem:[#allocation2 + $0xc0] sm:$0xff]
        %v471 = vld [vmem:[#allocation2 + $0xc8] sm:$0xff]
        %v472 = vld [vmem:[#allocation2 + $0xd0] sm:$0xff]
        %v473 = vld [vmem:[#allocation2 + $0xd8] sm:$0xff]
        %v474 = vld [vmem:[#allocation2 + $0xe0] sm:$0xff]
        %v475 = vld [vmem:[#allocation2 + $0xe8] sm:$0xff]
        %v476 = vld [vmem:[#allocation2 + $0xf0] sm:$0xff]
        %v477 = vld [vmem:[#allocation2 + $0xf8] sm:$0xff]
        %v478 = vld [vmem:[#allocation2 + $0x100] sm:$0xff]
        %v479 = vld [vmem:[#allocation2 + $0x108] sm:$0xff]
        %v480 = vld [vmem:[#allocation2 + $0x110] sm:$0xff]
        %v481 = vld [vmem:[#allocation2 + $0x118] sm:$0xff]
        %v482 = vld [vmem:[#allocation2 + $0x120] sm:$0xff]
        %v483 = vld [vmem:[#allocation2 + $0x128] sm:$0xff]
        %v484 = vld [vmem:[#allocation2 + $0x130] sm:$0xff]
        %v485 = vld [vmem:[#allocation2 + $0x138] sm:$0xff]
        %v486 = vld [vmem:[#allocation2 + $0x140] sm:$0xff]
        %v487 = vld [vmem:[#allocation2 + $0x148] sm:$0xff]
        %v488 = vld [vmem:[#allocation2 + $0x150] sm:$0xff]
        %v489 = vld [vmem:[#allocation2 + $0x158] sm:$0xff]
        %v490 = vld [vmem:[#allocation2 + $0x160] sm:$0xff]
        %v491 = vld [vmem:[#allocation2 + $0x168] sm:$0xff]
        %v492 = vld [vmem:[#allocation2 + $0x170] sm:$0xff]
        %v493 = vld [vmem:[#allocation2 + $0x178] sm:$0xff]
        %v494 = vld [vmem:[#allocation2 + $0x180] sm:$0xff]
        %v495 = vld [vmem:[#allocation2 + $0x188] sm:$0xff]
        %v496 = vld [vmem:[#allocation2 + $0x190] sm:$0xff]
        %v497 = vld [vmem:[#allocation2 + $0x198] sm:$0xff]
        %v498 = vld [vmem:[#allocation2 + $0x1a0] sm:$0xff]
        %v499 = vld [vmem:[#allocation2 + $0x1a8] sm:$0xff]
        %v500 = vld [vmem:[#allocation2 + $0x1b0] sm:$0xff]
        %v501 = vld [vmem:[#allocation2 + $0x1b8] sm:$0xff]
        %v502 = vld [vmem:[#allocation2 + $0x1c0] sm:$0xff]
        %v503 = vld [vmem:[#allocation2 + $0x1c8] sm:$0xff]
        %v504 = vld [vmem:[#allocation2 + $0x1d0] sm:$0xff]
        %v505 = vld [vmem:[#allocation2 + $0x1d8] sm:$0xff]
        %v506 = vld [vmem:[#allocation2 + $0x1e0] sm:$0xff]
        %v507 = vld [vmem:[#allocation2 + $0x1e8] sm:$0xff]
        %v508 = vld [vmem:[#allocation2 + $0x1f0] sm:$0xff]
        %v509 = vld [vmem:[#allocation2 + $0x1f8] sm:$0xff]
        %v510 = vld [vmem:[%s334] sm:$0xff]
        %v511 = vld [vmem:[%s334 + $0x8] sm:$0xff]
        %v512 = vld [vmem:[%s334 + $0x10] sm:$0xff]
        %v513 = vld [vmem:[%s334 + $0x18] sm:$0xff]
        %v514 = vld [vmem:[%s334 + $0x20] sm:$0xff]
        %v515 = vld [vmem:[%s334 + $0x28] sm:$0xff]
        %v516 = vld [vmem:[%s334 + $0x30] sm:$0xff]
        %v517 = vld [vmem:[%s334 + $0x38] sm:$0xff]
        %v518 = vld [vmem:[%s334 + $0x40] sm:$0xff]
        %v519 = vld [vmem:[%s334 + $0x48] sm:$0xff]
        %v520 = vld [vmem:[%s334 + $0x50] sm:$0xff]
        %v521 = vld [vmem:[%s334 + $0x58] sm:$0xff]
        %v522 = vld [vmem:[%s334 + $0x60] sm:$0xff]
        %v523 = vld [vmem:[%s334 + $0x68] sm:$0xff]
        %v524 = vld [vmem:[%s334 + $0x70] sm:$0xff]
        %v525 = vld [vmem:[%s334 + $0x78] sm:$0xff]
        %v526 = vld [vmem:[%s334 + $0x80] sm:$0xff]
        %v527 = vld [vmem:[%s334 + $0x88] sm:$0xff]
        %v528 = vld [vmem:[%s334 + $0x90] sm:$0xff]
        %v529 = vld [vmem:[%s334 + $0x98] sm:$0xff]
        %v530 = vld [vmem:[%s334 + $0xa0] sm:$0xff]
        %v531 = vld [vmem:[%s334 + $0xa8] sm:$0xff]
        %v532 = vld [vmem:[%s334 + $0xb0] sm:$0xff]
        %v533 = vld [vmem:[%s334 + $0xb8] sm:$0xff]
        %v534 = vld [vmem:[%s334 + $0xc0] sm:$0xff]
        %v535 = vld [vmem:[%s334 + $0xc8] sm:$0xff]
        %v536 = vld [vmem:[%s334 + $0xd0] sm:$0xff]
        %v537 = vld [vmem:[%s334 + $0xd8] sm:$0xff]
        %v538 = vld [vmem:[%s334 + $0xe0] sm:$0xff]
        %v539 = vld [vmem:[%s334 + $0xe8] sm:$0xff]
        %v540 = vld [vmem:[%s334 + $0xf0] sm:$0xff]
        %v541 = vld [vmem:[%s334 + $0xf8] sm:$0xff]
        %v542 = vld [vmem:[%s369] sm:$0xff]
        %v543 = vld [vmem:[%s369 + $0x8] sm:$0xff]
        %v544 = vld [vmem:[%s369 + $0x10] sm:$0xff]
        %v545 = vld [vmem:[%s369 + $0x18] sm:$0xff]
        %v546 = vld [vmem:[%s369 + $0x20] sm:$0xff]
        %v547 = vld [vmem:[%s369 + $0x28] sm:$0xff]
        %v548 = vld [vmem:[%s369 + $0x30] sm:$0xff]
        %v549 = vld [vmem:[%s369 + $0x38] sm:$0xff]
        %v550 = vld [vmem:[%s369 + $0x40] sm:$0xff]
        %v551 = vld [vmem:[%s369 + $0x48] sm:$0xff]
        %v552 = vld [vmem:[%s369 + $0x50] sm:$0xff]
        %v553 = vld [vmem:[%s369 + $0x58] sm:$0xff]
        %v554 = vld [vmem:[%s369 + $0x60] sm:$0xff]
        %v555 = vld [vmem:[%s369 + $0x68] sm:$0xff]
        %v556 = vld [vmem:[%s369 + $0x70] sm:$0xff]
        %v557 = vld [vmem:[%s369 + $0x78] sm:$0xff]
        %v558 = vld [vmem:[%s369 + $0x80] sm:$0xff]
        %v559 = vld [vmem:[%s369 + $0x88] sm:$0xff]
        %v560 = vld [vmem:[%s369 + $0x90] sm:$0xff]
        %v561 = vld [vmem:[%s369 + $0x98] sm:$0xff]
        %v562 = vld [vmem:[%s369 + $0xa0] sm:$0xff]
        %v563 = vld [vmem:[%s369 + $0xa8] sm:$0xff]
        %v564 = vld [vmem:[%s369 + $0xb0] sm:$0xff]
        %v565 = vld [vmem:[%s369 + $0xb8] sm:$0xff]
        %v566 = vld [vmem:[%s369 + $0xc0] sm:$0xff]
        %v567 = vld [vmem:[%s369 + $0xc8] sm:$0xff]
        %v568 = vld [vmem:[%s369 + $0xd0] sm:$0xff]
        %v569 = vld [vmem:[%s369 + $0xd8] sm:$0xff]
        %v570 = vld [vmem:[%s369 + $0xe0] sm:$0xff]
        %v571 = vld [vmem:[%s369 + $0xe8] sm:$0xff]
        %v572 = vld [vmem:[%s369 + $0xf0] sm:$0xff]
        %v573 = vld [vmem:[%s369 + $0xf8] sm:$0xff]
        %v606 = vunpack.c.l.b16 %v510
        %v607 = vunpack.c.h.b16 %v510
        %v608 = vunpack.c.l.b16 %v511
        %v609 = vunpack.c.h.b16 %v511
        %v610 = vunpack.c.l.b16 %v512
        %v611 = vunpack.c.h.b16 %v512
        %v612 = vunpack.c.l.b16 %v513
        %v613 = vunpack.c.h.b16 %v513
        %v614 = vunpack.c.l.b16 %v514
        %v615 = vunpack.c.h.b16 %v514
        %v616 = vunpack.c.l.b16 %v515
        %v617 = vunpack.c.h.b16 %v515
        %v618 = vunpack.c.l.b16 %v516
        %v619 = vunpack.c.h.b16 %v516
        %v620 = vunpack.c.l.b16 %v517
        %v621 = vunpack.c.h.b16 %v517
        %v622 = vunpack.c.l.b16 %v518
        %v623 = vunpack.c.h.b16 %v518
        %v624 = vunpack.c.l.b16 %v519
        %v625 = vunpack.c.h.b16 %v519
        %v626 = vunpack.c.l.b16 %v520
        %v627 = vunpack.c.h.b16 %v520
        %v628 = vunpack.c.l.b16 %v521
        %v629 = vunpack.c.h.b16 %v521
        %v630 = vunpack.c.l.b16 %v522
        %v631 = vunpack.c.h.b16 %v522
        %v632 = vunpack.c.l.b16 %v523
        %v633 = vunpack.c.h.b16 %v523
        %v634 = vunpack.c.l.b16 %v524
        %v635 = vunpack.c.h.b16 %v524
        %v636 = vunpack.c.l.b16 %v525
        %v637 = vunpack.c.h.b16 %v525
        %v638 = vunpack.c.l.b16 %v526
        %v639 = vunpack.c.h.b16 %v526
        %v640 = vunpack.c.l.b16 %v527
        %v641 = vunpack.c.h.b16 %v527
        %v642 = vunpack.c.l.b16 %v528
        %v643 = vunpack.c.h.b16 %v528
        %v644 = vunpack.c.l.b16 %v529
        %v645 = vunpack.c.h.b16 %v529
        %v646 = vunpack.c.l.b16 %v530
        %v647 = vunpack.c.h.b16 %v530
        %v648 = vunpack.c.l.b16 %v531
        %v649 = vunpack.c.h.b16 %v531
        %v650 = vunpack.c.l.b16 %v532
        %v651 = vunpack.c.h.b16 %v532
        %v652 = vunpack.c.l.b16 %v533
        %v653 = vunpack.c.h.b16 %v533
        %v654 = vunpack.c.l.b16 %v534
        %v655 = vunpack.c.h.b16 %v534
        %v656 = vunpack.c.l.b16 %v535
        %v657 = vunpack.c.h.b16 %v535
        %v658 = vunpack.c.l.b16 %v536
        %v659 = vunpack.c.h.b16 %v536
        %v660 = vunpack.c.l.b16 %v537
        %v661 = vunpack.c.h.b16 %v537
        %v662 = vunpack.c.l.b16 %v538
        %v663 = vunpack.c.h.b16 %v538
        %v664 = vunpack.c.l.b16 %v539
        %v665 = vunpack.c.h.b16 %v539
        %v666 = vunpack.c.l.b16 %v540
        %v667 = vunpack.c.h.b16 %v540
        %v668 = vunpack.c.l.b16 %v541
        %v669 = vunpack.c.h.b16 %v541
        %v670 = vpack.c.b16 %v608, %v606
        %v671 = vpack.c.b16 %v609, %v607
        %v672 = vpack.c.b16 %v612, %v610
        %v673 = vpack.c.b16 %v613, %v611
        %v674 = vpack.c.b16 %v616, %v614
        %v675 = vpack.c.b16 %v617, %v615
        %v676 = vpack.c.b16 %v620, %v618
        %v677 = vpack.c.b16 %v621, %v619
        %v678 = vpack.c.b16 %v624, %v622
        %v679 = vpack.c.b16 %v625, %v623
        %v680 = vpack.c.b16 %v628, %v626
        %v681 = vpack.c.b16 %v629, %v627
        %v682 = vpack.c.b16 %v632, %v630
        %v683 = vpack.c.b16 %v633, %v631
        %v684 = vpack.c.b16 %v636, %v634
        %v685 = vpack.c.b16 %v637, %v635
        %v686 = vpack.c.b16 %v640, %v638
        %v687 = vpack.c.b16 %v641, %v639
        %v688 = vpack.c.b16 %v644, %v642
        %v689 = vpack.c.b16 %v645, %v643
        %v690 = vpack.c.b16 %v648, %v646
        %v691 = vpack.c.b16 %v649, %v647
        %v692 = vpack.c.b16 %v652, %v650
        %v693 = vpack.c.b16 %v653, %v651
        %v694 = vpack.c.b16 %v656, %v654
        %v695 = vpack.c.b16 %v657, %v655
        %v696 = vpack.c.b16 %v660, %v658
        %v697 = vpack.c.b16 %v661, %v659
        %v698 = vpack.c.b16 %v664, %v662
        %v699 = vpack.c.b16 %v665, %v663
        %v700 = vpack.c.b16 %v668, %v666
        %v701 = vpack.c.b16 %v669, %v667
        %v766 = vunpack.c.l.b16 %v542
        %v767 = vunpack.c.h.b16 %v542
        %v768 = vunpack.c.l.b16 %v543
        %v769 = vunpack.c.h.b16 %v543
        %v770 = vunpack.c.l.b16 %v544
        %v771 = vunpack.c.h.b16 %v544
        %v772 = vunpack.c.l.b16 %v545
        %v773 = vunpack.c.h.b16 %v545
        %v774 = vunpack.c.l.b16 %v546
        %v775 = vunpack.c.h.b16 %v546
        %v776 = vunpack.c.l.b16 %v547
        %v777 = vunpack.c.h.b16 %v547
        %v778 = vunpack.c.l.b16 %v548
        %v779 = vunpack.c.h.b16 %v548
        %v780 = vunpack.c.l.b16 %v549
        %v781 = vunpack.c.h.b16 %v549
        %v782 = vunpack.c.l.b16 %v550
        %v783 = vunpack.c.h.b16 %v550
        %v784 = vunpack.c.l.b16 %v551
        %v785 = vunpack.c.h.b16 %v551
        %v786 = vunpack.c.l.b16 %v552
        %v787 = vunpack.c.h.b16 %v552
        %v788 = vunpack.c.l.b16 %v553
        %v789 = vunpack.c.h.b16 %v553
        %v790 = vunpack.c.l.b16 %v554
        %v791 = vunpack.c.h.b16 %v554
        %v792 = vunpack.c.l.b16 %v555
        %v793 = vunpack.c.h.b16 %v555
        %v794 = vunpack.c.l.b16 %v556
        %v795 = vunpack.c.h.b16 %v556
        %v796 = vunpack.c.l.b16 %v557
        %v797 = vunpack.c.h.b16 %v557
        %v798 = vunpack.c.l.b16 %v558
        %v799 = vunpack.c.h.b16 %v558
        %v800 = vunpack.c.l.b16 %v559
        %v801 = vunpack.c.h.b16 %v559
        %v802 = vunpack.c.l.b16 %v560
        %v803 = vunpack.c.h.b16 %v560
        %v804 = vunpack.c.l.b16 %v561
        %v805 = vunpack.c.h.b16 %v561
        %v806 = vunpack.c.l.b16 %v562
        %v807 = vunpack.c.h.b16 %v562
        %v808 = vunpack.c.l.b16 %v563
        %v809 = vunpack.c.h.b16 %v563
        %v810 = vunpack.c.l.b16 %v564
        %v811 = vunpack.c.h.b16 %v564
        %v812 = vunpack.c.l.b16 %v565
        %v813 = vunpack.c.h.b16 %v565
        %v814 = vunpack.c.l.b16 %v566
        %v815 = vunpack.c.h.b16 %v566
        %v816 = vunpack.c.l.b16 %v567
        %v817 = vunpack.c.h.b16 %v567
        %v818 = vunpack.c.l.b16 %v568
        %v819 = vunpack.c.h.b16 %v568
        %v820 = vunpack.c.l.b16 %v569
        %v821 = vunpack.c.h.b16 %v569
        %v822 = vunpack.c.l.b16 %v570
        %v823 = vunpack.c.h.b16 %v570
        %v824 = vunpack.c.l.b16 %v571
        %v825 = vunpack.c.h.b16 %v571
        %v826 = vunpack.c.l.b16 %v572
        %v827 = vunpack.c.h.b16 %v572
        %v828 = vunpack.c.l.b16 %v573
        %v829 = vunpack.c.h.b16 %v573
        %v830 = vpack.c.b16 %v768, %v766
        %v831 = vpack.c.b16 %v769, %v767
        %v832 = vpack.c.b16 %v772, %v770
        %v833 = vpack.c.b16 %v773, %v771
        %v834 = vpack.c.b16 %v776, %v774
        %v835 = vpack.c.b16 %v777, %v775
        %v836 = vpack.c.b16 %v780, %v778
        %v837 = vpack.c.b16 %v781, %v779
        %v838 = vpack.c.b16 %v784, %v782
        %v839 = vpack.c.b16 %v785, %v783
        %v840 = vpack.c.b16 %v788, %v786
        %v841 = vpack.c.b16 %v789, %v787
        %v842 = vpack.c.b16 %v792, %v790
        %v843 = vpack.c.b16 %v793, %v791
        %v844 = vpack.c.b16 %v796, %v794
        %v845 = vpack.c.b16 %v797, %v795
        %v846 = vpack.c.b16 %v800, %v798
        %v847 = vpack.c.b16 %v801, %v799
        %v848 = vpack.c.b16 %v804, %v802
        %v849 = vpack.c.b16 %v805, %v803
        %v850 = vpack.c.b16 %v808, %v806
        %v851 = vpack.c.b16 %v809, %v807
        %v852 = vpack.c.b16 %v812, %v810
        %v853 = vpack.c.b16 %v813, %v811
        %v854 = vpack.c.b16 %v816, %v814
        %v855 = vpack.c.b16 %v817, %v815
        %v856 = vpack.c.b16 %v820, %v818
        %v857 = vpack.c.b16 %v821, %v819
        %v858 = vpack.c.b16 %v824, %v822
        %v859 = vpack.c.b16 %v825, %v823
        %v860 = vpack.c.b16 %v828, %v826
        %v861 = vpack.c.b16 %v829, %v827
        %894 = vmatpush.bf16.msra.mxu0 %v844
        %895 = vmatpush.bf16.msra.mxu0 %v842
        %896 = vmatpush.bf16.msra.mxu0 %v840
        %897 = vmatpush.bf16.msra.mxu0 %v838
        %898 = vmatpush.bf16.msra.mxu0 %v836
        %899 = vmatpush.bf16.msra.mxu0 %v834
        %900 = vmatpush.bf16.msra.mxu0 %v832
        %901 = vmatpush.bf16.msra.mxu0 %v830
        %902 = vmatmul.bf16.gmra.mxu0 %v670
        %v903 = vpop.f32.mrf.mxu0
        %v904 = vadd.f32 0.0, %v903
        %v905 = vpop.f32.mrf.mxu0
        %v906 = vadd.f32 0.0, %v905
        %907 = vmatmul.bf16.gmra.mxu0 %v672
        %v908 = vpop.f32.mrf.mxu0
        %v909 = vadd.f32 0.0, %v908
        %v910 = vpop.f32.mrf.mxu0
        %v911 = vadd.f32 0.0, %v910
        %912 = vmatmul.bf16.gmra.mxu0 %v674
        %v913 = vpop.f32.mrf.mxu0
        %v914 = vadd.f32 0.0, %v913
        %v915 = vpop.f32.mrf.mxu0
        %v916 = vadd.f32 0.0, %v915
        %917 = vmatmul.bf16.gmra.mxu0 %v676
        %v918 = vpop.f32.mrf.mxu0
        %v919 = vadd.f32 0.0, %v918
        %v920 = vpop.f32.mrf.mxu0
        %v921 = vadd.f32 0.0, %v920
        %922 = vmatmul.bf16.gmra.mxu0 %v678
        %v923 = vpop.f32.mrf.mxu0
        %v924 = vadd.f32 0.0, %v923
        %v925 = vpop.f32.mrf.mxu0
        %v926 = vadd.f32 0.0, %v925
        %927 = vmatmul.bf16.gmra.mxu0 %v680
        %v928 = vpop.f32.mrf.mxu0
        %v929 = vadd.f32 0.0, %v928
        %v930 = vpop.f32.mrf.mxu0
        %v931 = vadd.f32 0.0, %v930
        %932 = vmatmul.bf16.gmra.mxu0 %v682
        %v933 = vpop.f32.mrf.mxu0
        %v934 = vadd.f32 0.0, %v933
        %v935 = vpop.f32.mrf.mxu0
        %v936 = vadd.f32 0.0, %v935
        %937 = vmatmul.bf16.gmra.mxu0 %v684
        %v938 = vpop.f32.mrf.mxu0
        %v939 = vadd.f32 0.0, %v938
        %v940 = vpop.f32.mrf.mxu0
        %v941 = vadd.f32 0.0, %v940
        %942 = vmatmul.bf16.gmra.mxu0 %v686
        %v943 = vpop.f32.mrf.mxu0
        %v944 = vadd.f32 0.0, %v943
        %v945 = vpop.f32.mrf.mxu0
        %v946 = vadd.f32 0.0, %v945
        %947 = vmatmul.bf16.gmra.mxu0 %v688
        %v948 = vpop.f32.mrf.mxu0
        %v949 = vadd.f32 0.0, %v948
        %v950 = vpop.f32.mrf.mxu0
        %v951 = vadd.f32 0.0, %v950
        %952 = vmatmul.bf16.gmra.mxu0 %v690
        %v953 = vpop.f32.mrf.mxu0
        %v954 = vadd.f32 0.0, %v953
        %v955 = vpop.f32.mrf.mxu0
        %v956 = vadd.f32 0.0, %v955
        %957 = vmatmul.bf16.gmra.mxu0 %v692
        %v958 = vpop.f32.mrf.mxu0
        %v959 = vadd.f32 0.0, %v958
        %v960 = vpop.f32.mrf.mxu0
        %v961 = vadd.f32 0.0, %v960
        %962 = vmatmul.bf16.gmra.mxu0 %v694
        %v963 = vpop.f32.mrf.mxu0
        %v964 = vadd.f32 0.0, %v963
        %v965 = vpop.f32.mrf.mxu0
        %v966 = vadd.f32 0.0, %v965
        %967 = vmatmul.bf16.gmra.mxu0 %v696
        %v968 = vpop.f32.mrf.mxu0
        %v969 = vadd.f32 0.0, %v968
        %v970 = vpop.f32.mrf.mxu0
        %v971 = vadd.f32 0.0, %v970
        %972 = vmatmul.bf16.gmra.mxu0 %v698
        %v973 = vpop.f32.mrf.mxu0
        %v974 = vadd.f32 0.0, %v973
        %v975 = vpop.f32.mrf.mxu0
        %v976 = vadd.f32 0.0, %v975
        %977 = vmatmul.bf16.gmra.mxu0 %v700
        %v978 = vpop.f32.mrf.mxu0
        %v979 = vadd.f32 0.0, %v978
        %v980 = vpop.f32.mrf.mxu0
        %v981 = vadd.f32 0.0, %v980
        %982 = vdwg.mxu0
        %983 = vmatpush.bf16.msra.mxu0 %v860
        %984 = vmatpush.bf16.msra.mxu0 %v858
        %985 = vmatpush.bf16.msra.mxu0 %v856
        %986 = vmatpush.bf16.msra.mxu0 %v854
        %987 = vmatpush.bf16.msra.mxu0 %v852
        %988 = vmatpush.bf16.msra.mxu0 %v850
        %989 = vmatpush.bf16.msra.mxu0 %v848
        %990 = vmatpush.bf16.msra.mxu0 %v846
        %991 = vmatmul.bf16.gmra.mxu0 %v671
        %v992 = vpop.f32.mrf.mxu0
        %v993 = vadd.f32 %v904, %v992
        %v994 = vpop.f32.mrf.mxu0
        %v995 = vadd.f32 %v906, %v994
        %996 = vmatmul.bf16.gmra.mxu0 %v673
        %v997 = vpop.f32.mrf.mxu0
        %v998 = vadd.f32 %v909, %v997
        %v999 = vpop.f32.mrf.mxu0
        %v1000 = vadd.f32 %v911, %v999
        %1001 = vmatmul.bf16.gmra.mxu0 %v675
        %v1002 = vpop.f32.mrf.mxu0
        %v1003 = vadd.f32 %v914, %v1002
        %v1004 = vpop.f32.mrf.mxu0
        %v1005 = vadd.f32 %v916, %v1004
        %1006 = vmatmul.bf16.gmra.mxu0 %v677
        %v1007 = vpop.f32.mrf.mxu0
        %v1008 = vadd.f32 %v919, %v1007
        %v1009 = vpop.f32.mrf.mxu0
        %v1010 = vadd.f32 %v921, %v1009
        %1011 = vmatmul.bf16.gmra.mxu0 %v679
        %v1012 = vpop.f32.mrf.mxu0
        %v1013 = vadd.f32 %v924, %v1012
        %v1014 = vpop.f32.mrf.mxu0
        %v1015 = vadd.f32 %v926, %v1014
        %1016 = vmatmul.bf16.gmra.mxu0 %v681
        %v1017 = vpop.f32.mrf.mxu0
        %v1018 = vadd.f32 %v929, %v1017
        %v1019 = vpop.f32.mrf.mxu0
        %v1020 = vadd.f32 %v931, %v1019
        %1021 = vmatmul.bf16.gmra.mxu0 %v683
        %v1022 = vpop.f32.mrf.mxu0
        %v1023 = vadd.f32 %v934, %v1022
        %v1024 = vpop.f32.mrf.mxu0
        %v1025 = vadd.f32 %v936, %v1024
        %1026 = vmatmul.bf16.gmra.mxu0 %v685
        %v1027 = vpop.f32.mrf.mxu0
        %v1028 = vadd.f32 %v939, %v1027
        %v1029 = vpop.f32.mrf.mxu0
        %v1030 = vadd.f32 %v941, %v1029
        %1031 = vmatmul.bf16.gmra.mxu0 %v687
        %v1032 = vpop.f32.mrf.mxu0
        %v1033 = vadd.f32 %v944, %v1032
        %v1034 = vpop.f32.mrf.mxu0
        %v1035 = vadd.f32 %v946, %v1034
        %1036 = vmatmul.bf16.gmra.mxu0 %v689
        %v1037 = vpop.f32.mrf.mxu0
        %v1038 = vadd.f32 %v949, %v1037
        %v1039 = vpop.f32.mrf.mxu0
        %v1040 = vadd.f32 %v951, %v1039
        %1041 = vmatmul.bf16.gmra.mxu0 %v691
        %v1042 = vpop.f32.mrf.mxu0
        %v1043 = vadd.f32 %v954, %v1042
        %v1044 = vpop.f32.mrf.mxu0
        %v1045 = vadd.f32 %v956, %v1044
        %1046 = vmatmul.bf16.gmra.mxu0 %v693
        %v1047 = vpop.f32.mrf.mxu0
        %v1048 = vadd.f32 %v959, %v1047
        %v1049 = vpop.f32.mrf.mxu0
        %v1050 = vadd.f32 %v961, %v1049
        %1051 = vmatmul.bf16.gmra.mxu0 %v695
        %v1052 = vpop.f32.mrf.mxu0
        %v1053 = vadd.f32 %v964, %v1052
        %v1054 = vpop.f32.mrf.mxu0
        %v1055 = vadd.f32 %v966, %v1054
        %1056 = vmatmul.bf16.gmra.mxu0 %v697
        %v1057 = vpop.f32.mrf.mxu0
        %v1058 = vadd.f32 %v969, %v1057
        %v1059 = vpop.f32.mrf.mxu0
        %v1060 = vadd.f32 %v971, %v1059
        %1061 = vmatmul.bf16.gmra.mxu0 %v699
        %v1062 = vpop.f32.mrf.mxu0
        %v1063 = vadd.f32 %v974, %v1062
        %v1064 = vpop.f32.mrf.mxu0
        %v1065 = vadd.f32 %v976, %v1064
        %1066 = vmatmul.bf16.gmra.mxu0 %v701
        %v1067 = vpop.f32.mrf.mxu0
        %v1068 = vadd.f32 %v979, %v1067
        %v1069 = vpop.f32.mrf.mxu0
        %v1070 = vadd.f32 %v981, %v1069
        %1071 = vdwg.mxu0
        %1072 = vmatpush.bf16.msra.mxu0 %v845
        %1073 = vmatpush.bf16.msra.mxu0 %v843
        %1074 = vmatpush.bf16.msra.mxu0 %v841
        %1075 = vmatpush.bf16.msra.mxu0 %v839
        %1076 = vmatpush.bf16.msra.mxu0 %v837
        %1077 = vmatpush.bf16.msra.mxu0 %v835
        %1078 = vmatpush.bf16.msra.mxu0 %v833
        %1079 = vmatpush.bf16.msra.mxu0 %v831
        %1080 = vmatmul.bf16.gmra.mxu0 %v670
        %v1081 = vpop.f32.mrf.mxu0
        %v1082 = vadd.f32 0.0, %v1081
        %v1083 = vpop.f32.mrf.mxu0
        %v1084 = vadd.f32 0.0, %v1083
        %1085 = vmatmul.bf16.gmra.mxu0 %v672
        %v1086 = vpop.f32.mrf.mxu0
        %v1087 = vadd.f32 0.0, %v1086
        %v1088 = vpop.f32.mrf.mxu0
        %v1089 = vadd.f32 0.0, %v1088
        %1090 = vmatmul.bf16.gmra.mxu0 %v674
        %v1091 = vpop.f32.mrf.mxu0
        %v1092 = vadd.f32 0.0, %v1091
        %v1093 = vpop.f32.mrf.mxu0
        %v1094 = vadd.f32 0.0, %v1093
        %1095 = vmatmul.bf16.gmra.mxu0 %v676
        %v1096 = vpop.f32.mrf.mxu0
        %v1097 = vadd.f32 0.0, %v1096
        %v1098 = vpop.f32.mrf.mxu0
        %v1099 = vadd.f32 0.0, %v1098
        %1100 = vmatmul.bf16.gmra.mxu0 %v678
        %v1101 = vpop.f32.mrf.mxu0
        %v1102 = vadd.f32 0.0, %v1101
        %v1103 = vpop.f32.mrf.mxu0
        %v1104 = vadd.f32 0.0, %v1103
        %1105 = vmatmul.bf16.gmra.mxu0 %v680
        %v1106 = vpop.f32.mrf.mxu0
        %v1107 = vadd.f32 0.0, %v1106
        %v1108 = vpop.f32.mrf.mxu0
        %v1109 = vadd.f32 0.0, %v1108
        %1110 = vmatmul.bf16.gmra.mxu0 %v682
        %v1111 = vpop.f32.mrf.mxu0
        %v1112 = vadd.f32 0.0, %v1111
        %v1113 = vpop.f32.mrf.mxu0
        %v1114 = vadd.f32 0.0, %v1113
        %1115 = vmatmul.bf16.gmra.mxu0 %v684
        %v1116 = vpop.f32.mrf.mxu0
        %v1117 = vadd.f32 0.0, %v1116
        %v1118 = vpop.f32.mrf.mxu0
        %v1119 = vadd.f32 0.0, %v1118
        %1120 = vmatmul.bf16.gmra.mxu0 %v686
        %v1121 = vpop.f32.mrf.mxu0
        %v1122 = vadd.f32 0.0, %v1121
        %v1123 = vpop.f32.mrf.mxu0
        %v1124 = vadd.f32 0.0, %v1123
        %1125 = vmatmul.bf16.gmra.mxu0 %v688
        %v1126 = vpop.f32.mrf.mxu0
        %v1127 = vadd.f32 0.0, %v1126
        %v1128 = vpop.f32.mrf.mxu0
        %v1129 = vadd.f32 0.0, %v1128
        %1130 = vmatmul.bf16.gmra.mxu0 %v690
        %v1131 = vpop.f32.mrf.mxu0
        %v1132 = vadd.f32 0.0, %v1131
        %v1133 = vpop.f32.mrf.mxu0
        %v1134 = vadd.f32 0.0, %v1133
        %1135 = vmatmul.bf16.gmra.mxu0 %v692
        %v1136 = vpop.f32.mrf.mxu0
        %v1137 = vadd.f32 0.0, %v1136
        %v1138 = vpop.f32.mrf.mxu0
        %v1139 = vadd.f32 0.0, %v1138
        %1140 = vmatmul.bf16.gmra.mxu0 %v694
        %v1141 = vpop.f32.mrf.mxu0
        %v1142 = vadd.f32 0.0, %v1141
        %v1143 = vpop.f32.mrf.mxu0
        %v1144 = vadd.f32 0.0, %v1143
        %1145 = vmatmul.bf16.gmra.mxu0 %v696
        %v1146 = vpop.f32.mrf.mxu0
        %v1147 = vadd.f32 0.0, %v1146
        %v1148 = vpop.f32.mrf.mxu0
        %v1149 = vadd.f32 0.0, %v1148
        %1150 = vmatmul.bf16.gmra.mxu0 %v698
        %v1151 = vpop.f32.mrf.mxu0
        %v1152 = vadd.f32 0.0, %v1151
        %v1153 = vpop.f32.mrf.mxu0
        %v1154 = vadd.f32 0.0, %v1153
        %1155 = vmatmul.bf16.gmra.mxu0 %v700
        %v1156 = vpop.f32.mrf.mxu0
        %v1157 = vadd.f32 0.0, %v1156
        %v1158 = vpop.f32.mrf.mxu0
        %v1159 = vadd.f32 0.0, %v1158
        %1160 = vdwg.mxu0
        %1161 = vmatpush.bf16.msra.mxu0 %v861
        %1162 = vmatpush.bf16.msra.mxu0 %v859
        %1163 = vmatpush.bf16.msra.mxu0 %v857
        %1164 = vmatpush.bf16.msra.mxu0 %v855
        %1165 = vmatpush.bf16.msra.mxu0 %v853
        %1166 = vmatpush.bf16.msra.mxu0 %v851
        %1167 = vmatpush.bf16.msra.mxu0 %v849
        %1168 = vmatpush.bf16.msra.mxu0 %v847
        %1169 = vmatmul.bf16.gmra.mxu0 %v671
        %v1170 = vpop.f32.mrf.mxu0
        %v1171 = vadd.f32 %v1082, %v1170
        %v1172 = vpop.f32.mrf.mxu0
        %v1173 = vadd.f32 %v1084, %v1172
        %1174 = vmatmul.bf16.gmra.mxu0 %v673
        %v1175 = vpop.f32.mrf.mxu0
        %v1176 = vadd.f32 %v1087, %v1175
        %v1177 = vpop.f32.mrf.mxu0
        %v1178 = vadd.f32 %v1089, %v1177
        %1179 = vmatmul.bf16.gmra.mxu0 %v675
        %v1180 = vpop.f32.mrf.mxu0
        %v1181 = vadd.f32 %v1092, %v1180
        %v1182 = vpop.f32.mrf.mxu0
        %v1183 = vadd.f32 %v1094, %v1182
        %1184 = vmatmul.bf16.gmra.mxu0 %v677
        %v1185 = vpop.f32.mrf.mxu0
        %v1186 = vadd.f32 %v1097, %v1185
        %v1187 = vpop.f32.mrf.mxu0
        %v1188 = vadd.f32 %v1099, %v1187
        %1189 = vmatmul.bf16.gmra.mxu0 %v679
        %v1190 = vpop.f32.mrf.mxu0
        %v1191 = vadd.f32 %v1102, %v1190
        %v1192 = vpop.f32.mrf.mxu0
        %v1193 = vadd.f32 %v1104, %v1192
        %1194 = vmatmul.bf16.gmra.mxu0 %v681
        %v1195 = vpop.f32.mrf.mxu0
        %v1196 = vadd.f32 %v1107, %v1195
        %v1197 = vpop.f32.mrf.mxu0
        %v1198 = vadd.f32 %v1109, %v1197
        %1199 = vmatmul.bf16.gmra.mxu0 %v683
        %v1200 = vpop.f32.mrf.mxu0
        %v1201 = vadd.f32 %v1112, %v1200
        %v1202 = vpop.f32.mrf.mxu0
        %v1203 = vadd.f32 %v1114, %v1202
        %1204 = vmatmul.bf16.gmra.mxu0 %v685
        %v1205 = vpop.f32.mrf.mxu0
        %v1206 = vadd.f32 %v1117, %v1205
        %v1207 = vpop.f32.mrf.mxu0
        %v1208 = vadd.f32 %v1119, %v1207
        %1209 = vmatmul.bf16.gmra.mxu0 %v687
        %v1210 = vpop.f32.mrf.mxu0
        %v1211 = vadd.f32 %v1122, %v1210
        %v1212 = vpop.f32.mrf.mxu0
        %v1213 = vadd.f32 %v1124, %v1212
        %1214 = vmatmul.bf16.gmra.mxu0 %v689
        %v1215 = vpop.f32.mrf.mxu0
        %v1216 = vadd.f32 %v1127, %v1215
        %v1217 = vpop.f32.mrf.mxu0
        %v1218 = vadd.f32 %v1129, %v1217
        %1219 = vmatmul.bf16.gmra.mxu0 %v691
        %v1220 = vpop.f32.mrf.mxu0
        %v1221 = vadd.f32 %v1132, %v1220
        %v1222 = vpop.f32.mrf.mxu0
        %v1223 = vadd.f32 %v1134, %v1222
        %1224 = vmatmul.bf16.gmra.mxu0 %v693
        %v1225 = vpop.f32.mrf.mxu0
        %v1226 = vadd.f32 %v1137, %v1225
        %v1227 = vpop.f32.mrf.mxu0
        %v1228 = vadd.f32 %v1139, %v1227
        %1229 = vmatmul.bf16.gmra.mxu0 %v695
        %v1230 = vpop.f32.mrf.mxu0
        %v1231 = vadd.f32 %v1142, %v1230
        %v1232 = vpop.f32.mrf.mxu0
        %v1233 = vadd.f32 %v1144, %v1232
        %1234 = vmatmul.bf16.gmra.mxu0 %v697
        %v1235 = vpop.f32.mrf.mxu0
        %v1236 = vadd.f32 %v1147, %v1235
        %v1237 = vpop.f32.mrf.mxu0
        %v1238 = vadd.f32 %v1149, %v1237
        %1239 = vmatmul.bf16.gmra.mxu0 %v699
        %v1240 = vpop.f32.mrf.mxu0
        %v1241 = vadd.f32 %v1152, %v1240
        %v1242 = vpop.f32.mrf.mxu0
        %v1243 = vadd.f32 %v1154, %v1242
        %1244 = vmatmul.bf16.gmra.mxu0 %v701
        %v1245 = vpop.f32.mrf.mxu0
        %v1246 = vadd.f32 %v1157, %v1245
        %v1247 = vpop.f32.mrf.mxu0
        %v1248 = vadd.f32 %v1159, %v1247
        %1249 = vdwg.mxu0
        %v1250 = vadd.f32 %v446, %v993
        %v1251 = vadd.f32 %v447, %v1171
        %v1252 = vadd.f32 %v448, %v995
        %v1253 = vadd.f32 %v449, %v1173
        %v1254 = vadd.f32 %v450, %v998
        %v1255 = vadd.f32 %v451, %v1176
        %v1256 = vadd.f32 %v452, %v1000
        %v1257 = vadd.f32 %v453, %v1178
        %v1258 = vadd.f32 %v454, %v1003
        %v1259 = vadd.f32 %v455, %v1181
        %v1260 = vadd.f32 %v456, %v1005
        %v1261 = vadd.f32 %v457, %v1183
        %v1262 = vadd.f32 %v458, %v1008
        %v1263 = vadd.f32 %v459, %v1186
        %v1264 = vadd.f32 %v460, %v1010
        %v1265 = vadd.f32 %v461, %v1188
        %v1266 = vadd.f32 %v462, %v1013
        %v1267 = vadd.f32 %v463, %v1191
        %v1268 = vadd.f32 %v464, %v1015
        %v1269 = vadd.f32 %v465, %v1193
        %v1270 = vadd.f32 %v466, %v1018
        %v1271 = vadd.f32 %v467, %v1196
        %v1272 = vadd.f32 %v468, %v1020
        %v1273 = vadd.f32 %v469, %v1198
        %v1274 = vadd.f32 %v470, %v1023
        %v1275 = vadd.f32 %v471, %v1201
        %v1276 = vadd.f32 %v472, %v1025
        %v1277 = vadd.f32 %v473, %v1203
        %v1278 = vadd.f32 %v474, %v1028
        %v1279 = vadd.f32 %v475, %v1206
        %v1280 = vadd.f32 %v476, %v1030
        %v1281 = vadd.f32 %v477, %v1208
        %v1282 = vadd.f32 %v478, %v1033
        %v1283 = vadd.f32 %v479, %v1211
        %v1284 = vadd.f32 %v480, %v1035
        %v1285 = vadd.f32 %v481, %v1213
        %v1286 = vadd.f32 %v482, %v1038
        %v1287 = vadd.f32 %v483, %v1216
        %v1288 = vadd.f32 %v484, %v1040
        %v1289 = vadd.f32 %v485, %v1218
        %v1290 = vadd.f32 %v486, %v1043
        %v1291 = vadd.f32 %v487, %v1221
        %v1292 = vadd.f32 %v488, %v1045
        %v1293 = vadd.f32 %v489, %v1223
        %v1294 = vadd.f32 %v490, %v1048
        %v1295 = vadd.f32 %v491, %v1226
        %v1296 = vadd.f32 %v492, %v1050
        %v1297 = vadd.f32 %v493, %v1228
        %v1298 = vadd.f32 %v494, %v1053
        %v1299 = vadd.f32 %v495, %v1231
        %v1300 = vadd.f32 %v496, %v1055
        %v1301 = vadd.f32 %v497, %v1233
        %v1302 = vadd.f32 %v498, %v1058
        %v1303 = vadd.f32 %v499, %v1236
        %v1304 = vadd.f32 %v500, %v1060
        %v1305 = vadd.f32 %v501, %v1238
        %v1306 = vadd.f32 %v502, %v1063
        %v1307 = vadd.f32 %v503, %v1241
        %v1308 = vadd.f32 %v504, %v1065
        %v1309 = vadd.f32 %v505, %v1243
        %v1310 = vadd.f32 %v506, %v1068
        %v1311 = vadd.f32 %v507, %v1246
        %v1312 = vadd.f32 %v508, %v1070
        %v1313 = vadd.f32 %v509, %v1248
        %1314 = vst [vmem:[#allocation2] sm:$0xff] %v1250
        %1315 = vst [vmem:[#allocation2 + $0x8] sm:$0xff] %v1251
        %1316 = vst [vmem:[#allocation2 + $0x10] sm:$0xff] %v1252
        %1317 = vst [vmem:[#allocation2 + $0x18] sm:$0xff] %v1253
        %1318 = vst [vmem:[#allocation2 + $0x20] sm:$0xff] %v1254
        %1319 = vst [vmem:[#allocation2 + $0x28] sm:$0xff] %v1255
        %1320 = vst [vmem:[#allocation2 + $0x30] sm:$0xff] %v1256
        %1321 = vst [vmem:[#allocation2 + $0x38] sm:$0xff] %v1257
        %1322 = vst [vmem:[#allocation2 + $0x40] sm:$0xff] %v1258
        %1323 = vst [vmem:[#allocation2 + $0x48] sm:$0xff] %v1259
        %1324 = vst [vmem:[#allocation2 + $0x50] sm:$0xff] %v1260
        %1325 = vst [vmem:[#allocation2 + $0x58] sm:$0xff] %v1261
        %1326 = vst [vmem:[#allocation2 + $0x60] sm:$0xff] %v1262
        %1327 = vst [vmem:[#allocation2 + $0x68] sm:$0xff] %v1263
        %1328 = vst [vmem:[#allocation2 + $0x70] sm:$0xff] %v1264
        %1329 = vst [vmem:[#allocation2 + $0x78] sm:$0xff] %v1265
        %1330 = vst [vmem:[#allocation2 + $0x80] sm:$0xff] %v1266
        %1331 = vst [vmem:[#allocation2 + $0x88] sm:$0xff] %v1267
        %1332 = vst [vmem:[#allocation2 + $0x90] sm:$0xff] %v1268
        %1333 = vst [vmem:[#allocation2 + $0x98] sm:$0xff] %v1269
        %1334 = vst [vmem:[#allocation2 + $0xa0] sm:$0xff] %v1270
        %1335 = vst [vmem:[#allocation2 + $0xa8] sm:$0xff] %v1271
        %1336 = vst [vmem:[#allocation2 + $0xb0] sm:$0xff] %v1272
        %1337 = vst [vmem:[#allocation2 + $0xb8] sm:$0xff] %v1273
        %1338 = vst [vmem:[#allocation2 + $0xc0] sm:$0xff] %v1274
        %1339 = vst [vmem:[#allocation2 + $0xc8] sm:$0xff] %v1275
        %1340 = vst [vmem:[#allocation2 + $0xd0] sm:$0xff] %v1276
        %1341 = vst [vmem:[#allocation2 + $0xd8] sm:$0xff] %v1277
        %1342 = vst [vmem:[#allocation2 + $0xe0] sm:$0xff] %v1278
        %1343 = vst [vmem:[#allocation2 + $0xe8] sm:$0xff] %v1279
        %1344 = vst [vmem:[#allocation2 + $0xf0] sm:$0xff] %v1280
        %1345 = vst [vmem:[#allocation2 + $0xf8] sm:$0xff] %v1281
        %1346 = vst [vmem:[#allocation2 + $0x100] sm:$0xff] %v1282
        %1347 = vst [vmem:[#allocation2 + $0x108] sm:$0xff] %v1283
        %1348 = vst [vmem:[#allocation2 + $0x110] sm:$0xff] %v1284
        %1349 = vst [vmem:[#allocation2 + $0x118] sm:$0xff] %v1285
        %1350 = vst [vmem:[#allocation2 + $0x120] sm:$0xff] %v1286
        %1351 = vst [vmem:[#allocation2 + $0x128] sm:$0xff] %v1287
        %1352 = vst [vmem:[#allocation2 + $0x130] sm:$0xff] %v1288
        %1353 = vst [vmem:[#allocation2 + $0x138] sm:$0xff] %v1289
        %1354 = vst [vmem:[#allocation2 + $0x140] sm:$0xff] %v1290
        %1355 = vst [vmem:[#allocation2 + $0x148] sm:$0xff] %v1291
        %1356 = vst [vmem:[#allocation2 + $0x150] sm:$0xff] %v1292
        %1357 = vst [vmem:[#allocation2 + $0x158] sm:$0xff] %v1293
        %1358 = vst [vmem:[#allocation2 + $0x160] sm:$0xff] %v1294
        %1359 = vst [vmem:[#allocation2 + $0x168] sm:$0xff] %v1295
        %1360 = vst [vmem:[#allocation2 + $0x170] sm:$0xff] %v1296
        %1361 = vst [vmem:[#allocation2 + $0x178] sm:$0xff] %v1297
        %1362 = vst [vmem:[#allocation2 + $0x180] sm:$0xff] %v1298
        %1363 = vst [vmem:[#allocation2 + $0x188] sm:$0xff] %v1299
        %1364 = vst [vmem:[#allocation2 + $0x190] sm:$0xff] %v1300
        %1365 = vst [vmem:[#allocation2 + $0x198] sm:$0xff] %v1301
        %1366 = vst [vmem:[#allocation2 + $0x1a0] sm:$0xff] %v1302
        %1367 = vst [vmem:[#allocation2 + $0x1a8] sm:$0xff] %v1303
        %1368 = vst [vmem:[#allocation2 + $0x1b0] sm:$0xff] %v1304
        %1369 = vst [vmem:[#allocation2 + $0x1b8] sm:$0xff] %v1305
        %1370 = vst [vmem:[#allocation2 + $0x1c0] sm:$0xff] %v1306
        %1371 = vst [vmem:[#allocation2 + $0x1c8] sm:$0xff] %v1307
        %1372 = vst [vmem:[#allocation2 + $0x1d0] sm:$0xff] %v1308
        %1373 = vst [vmem:[#allocation2 + $0x1d8] sm:$0xff] %v1309
        %1374 = vst [vmem:[#allocation2 + $0x1e0] sm:$0xff] %v1310
        %1375 = vst [vmem:[#allocation2 + $0x1e8] sm:$0xff] %v1311
        %1376 = vst [vmem:[#allocation2 + $0x1f0] sm:$0xff] %v1312
        %1377 = vst [vmem:[#allocation2 + $0x1f8] sm:$0xff] %v1313
        %p1378 = scmp.eq.s32.totalorder %s19, 8
        // Predicated region
        $region75: #{classifier_forward.5} parent=65 // pred_check
          %p1379 = pneg %p1378
        $region76: #{classifier_forward.5} parent=65 // pred_check_branch
          %1381 = sbr.rel (%p1379) target = $region78
        $region77: #{classifier_forward.5} parent=65 // pred_region
          %v1382 = vld [vmem:[#allocation2] sm:$0xff]
          %v1383 = vld [vmem:[#allocation2 + $0x8] sm:$0xff]
          %v1384 = vld [vmem:[#allocation2 + $0x10] sm:$0xff]
          %v1385 = vld [vmem:[#allocation2 + $0x18] sm:$0xff]
          %v1386 = vld [vmem:[#allocation2 + $0x20] sm:$0xff]
          %v1387 = vld [vmem:[#allocation2 + $0x28] sm:$0xff]
          %v1388 = vld [vmem:[#allocation2 + $0x30] sm:$0xff]
          %v1389 = vld [vmem:[#allocation2 + $0x38] sm:$0xff]
          %v1390 = vld [vmem:[#allocation2 + $0x40] sm:$0xff]
          %v1391 = vld [vmem:[#allocation2 + $0x48] sm:$0xff]
          %v1392 = vld [vmem:[#allocation2 + $0x50] sm:$0xff]
          %v1393 = vld [vmem:[#allocation2 + $0x58] sm:$0xff]
          %v1394 = vld [vmem:[#allocation2 + $0x60] sm:$0xff]
          %v1395 = vld [vmem:[#allocation2 + $0x68] sm:$0xff]
          %v1396 = vld [vmem:[#allocation2 + $0x70] sm:$0xff]
          %v1397 = vld [vmem:[#allocation2 + $0x78] sm:$0xff]
          %v1398 = vld [vmem:[#allocation2 + $0x80] sm:$0xff]
          %v1399 = vld [vmem:[#allocation2 + $0x88] sm:$0xff]
          %v1400 = vld [vmem:[#allocation2 + $0x90] sm:$0xff]
          %v1401 = vld [vmem:[#allocation2 + $0x98] sm:$0xff]
          %v1402 = vld [vmem:[#allocation2 + $0xa0] sm:$0xff]
          %v1403 = vld [vmem:[#allocation2 + $0xa8] sm:$0xff]
          %v1404 = vld [vmem:[#allocation2 + $0xb0] sm:$0xff]
          %v1405 = vld [vmem:[#allocation2 + $0xb8] sm:$0xff]
          %v1406 = vld [vmem:[#allocation2 + $0xc0] sm:$0xff]
          %v1407 = vld [vmem:[#allocation2 + $0xc8] sm:$0xff]
          %v1408 = vld [vmem:[#allocation2 + $0xd0] sm:$0xff]
          %v1409 = vld [vmem:[#allocation2 + $0xd8] sm:$0xff]
          %v1410 = vld [vmem:[#allocation2 + $0xe0] sm:$0xff]
          %v1411 = vld [vmem:[#allocation2 + $0xe8] sm:$0xff]
          %v1412 = vld [vmem:[#allocation2 + $0xf0] sm:$0xff]
          %v1413 = vld [vmem:[#allocation2 + $0xf8] sm:$0xff]
          %v1414 = vld [vmem:[#allocation2 + $0x100] sm:$0xff]
          %v1415 = vld [vmem:[#allocation2 + $0x108] sm:$0xff]
          %v1416 = vld [vmem:[#allocation2 + $0x110] sm:$0xff]
          %v1417 = vld [vmem:[#allocation2 + $0x118] sm:$0xff]
          %v1418 = vld [vmem:[#allocation2 + $0x120] sm:$0xff]
          %v1419 = vld [vmem:[#allocation2 + $0x128] sm:$0xff]
          %v1420 = vld [vmem:[#allocation2 + $0x130] sm:$0xff]
          %v1421 = vld [vmem:[#allocation2 + $0x138] sm:$0xff]
          %v1422 = vld [vmem:[#allocation2 + $0x140] sm:$0xff]
          %v1423 = vld [vmem:[#allocation2 + $0x148] sm:$0xff]
          %v1424 = vld [vmem:[#allocation2 + $0x150] sm:$0xff]
          %v1425 = vld [vmem:[#allocation2 + $0x158] sm:$0xff]
          %v1426 = vld [vmem:[#allocation2 + $0x160] sm:$0xff]
          %v1427 = vld [vmem:[#allocation2 + $0x168] sm:$0xff]
          %v1428 = vld [vmem:[#allocation2 + $0x170] sm:$0xff]
          %v1429 = vld [vmem:[#allocation2 + $0x178] sm:$0xff]
          %v1430 = vld [vmem:[#allocation2 + $0x180] sm:$0xff]
          %v1431 = vld [vmem:[#allocation2 + $0x188] sm:$0xff]
          %v1432 = vld [vmem:[#allocation2 + $0x190] sm:$0xff]
          %v1433 = vld [vmem:[#allocation2 + $0x198] sm:$0xff]
          %v1434 = vld [vmem:[#allocation2 + $0x1a0] sm:$0xff]
          %v1435 = vld [vmem:[#allocation2 + $0x1a8] sm:$0xff]
          %v1436 = vld [vmem:[#allocation2 + $0x1b0] sm:$0xff]
          %v1437 = vld [vmem:[#allocation2 + $0x1b8] sm:$0xff]
          %v1438 = vld [vmem:[#allocation2 + $0x1c0] sm:$0xff]
          %v1439 = vld [vmem:[#allocation2 + $0x1c8] sm:$0xff]
          %v1440 = vld [vmem:[#allocation2 + $0x1d0] sm:$0xff]
          %v1441 = vld [vmem:[#allocation2 + $0x1d8] sm:$0xff]
          %v1442 = vld [vmem:[#allocation2 + $0x1e0] sm:$0xff]
          %v1443 = vld [vmem:[#allocation2 + $0x1e8] sm:$0xff]
          %v1444 = vld [vmem:[#allocation2 + $0x1f0] sm:$0xff]
          %v1445 = vld [vmem:[#allocation2 + $0x1f8] sm:$0xff]
          %v1446 = vld [vmem:[%s2] sm:$0x3]
          %v1448 = vperm.slane %v1446, 0
          %v1449 = vperm.slane %v1446, 1
          %v1452 = vadd.f32 %v1382, %v1448
          %v1453 = vadd.f32 %v1383, %v1449
          %v1454 = vadd.f32 %v1384, %v1448
          %v1455 = vadd.f32 %v1385, %v1449
          %v1456 = vadd.f32 %v1386, %v1448
          %v1457 = vadd.f32 %v1387, %v1449
          %v1458 = vadd.f32 %v1388, %v1448
          %v1459 = vadd.f32 %v1389, %v1449
          %v1460 = vadd.f32 %v1390, %v1448
          %v1461 = vadd.f32 %v1391, %v1449
          %v1462 = vadd.f32 %v1392, %v1448
          %v1463 = vadd.f32 %v1393, %v1449
          %v1464 = vadd.f32 %v1394, %v1448
          %v1465 = vadd.f32 %v1395, %v1449
          %v1466 = vadd.f32 %v1396, %v1448
          %v1467 = vadd.f32 %v1397, %v1449
          %v1468 = vadd.f32 %v1398, %v1448
          %v1469 = vadd.f32 %v1399, %v1449
          %v1470 = vadd.f32 %v1400, %v1448
          %v1471 = vadd.f32 %v1401, %v1449
          %v1472 = vadd.f32 %v1402, %v1448
          %v1473 = vadd.f32 %v1403, %v1449
          %v1474 = vadd.f32 %v1404, %v1448
          %v1475 = vadd.f32 %v1405, %v1449
          %v1476 = vadd.f32 %v1406, %v1448
          %v1477 = vadd.f32 %v1407, %v1449
          %v1478 = vadd.f32 %v1408, %v1448
          %v1479 = vadd.f32 %v1409, %v1449
          %v1480 = vadd.f32 %v1410, %v1448
          %v1481 = vadd.f32 %v1411, %v1449
          %v1482 = vadd.f32 %v1412, %v1448
          %v1483 = vadd.f32 %v1413, %v1449
          %v1484 = vadd.f32 %v1414, %v1448
          %v1485 = vadd.f32 %v1415, %v1449
          %v1486 = vadd.f32 %v1416, %v1448
          %v1487 = vadd.f32 %v1417, %v1449
          %v1488 = vadd.f32 %v1418, %v1448
          %v1489 = vadd.f32 %v1419, %v1449
          %v1490 = vadd.f32 %v1420, %v1448
          %v1491 = vadd.f32 %v1421, %v1449
          %v1492 = vadd.f32 %v1422, %v1448
          %v1493 = vadd.f32 %v1423, %v1449
          %v1494 = vadd.f32 %v1424, %v1448
          %v1495 = vadd.f32 %v1425, %v1449
          %v1496 = vadd.f32 %v1426, %v1448
          %v1497 = vadd.f32 %v1427, %v1449
          %v1498 = vadd.f32 %v1428, %v1448
          %v1499 = vadd.f32 %v1429, %v1449
          %v1500 = vadd.f32 %v1430, %v1448
          %v1501 = vadd.f32 %v1431, %v1449
          %v1502 = vadd.f32 %v1432, %v1448
          %v1503 = vadd.f32 %v1433, %v1449
          %v1504 = vadd.f32 %v1434, %v1448
          %v1505 = vadd.f32 %v1435, %v1449
          %v1506 = vadd.f32 %v1436, %v1448
          %v1507 = vadd.f32 %v1437, %v1449
          %v1508 = vadd.f32 %v1438, %v1448
          %v1509 = vadd.f32 %v1439, %v1449
          %v1510 = vadd.f32 %v1440, %v1448
          %v1511 = vadd.f32 %v1441, %v1449
          %v1512 = vadd.f32 %v1442, %v1448
          %v1513 = vadd.f32 %v1443, %v1449
          %v1514 = vadd.f32 %v1444, %v1448
          %v1515 = vadd.f32 %v1445, %v1449
          %vm1516 = vcmp.ge.f32.partialorder %v1452, 0.0
          %vm1517 = vcmp.ge.f32.partialorder %v1453, 0.0
          %vm1518 = vcmp.ge.f32.partialorder %v1454, 0.0
          %vm1519 = vcmp.ge.f32.partialorder %v1455, 0.0
          %vm1520 = vcmp.ge.f32.partialorder %v1456, 0.0
          %vm1521 = vcmp.ge.f32.partialorder %v1457, 0.0
          %vm1522 = vcmp.ge.f32.partialorder %v1458, 0.0
          %vm1523 = vcmp.ge.f32.partialorder %v1459, 0.0
          %vm1524 = vcmp.ge.f32.partialorder %v1460, 0.0
          %vm1525 = vcmp.ge.f32.partialorder %v1461, 0.0
          %vm1526 = vcmp.ge.f32.partialorder %v1462, 0.0
          %vm1527 = vcmp.ge.f32.partialorder %v1463, 0.0
          %vm1528 = vcmp.ge.f32.partialorder %v1464, 0.0
          %vm1529 = vcmp.ge.f32.partialorder %v1465, 0.0
          %vm1530 = vcmp.ge.f32.partialorder %v1466, 0.0
          %vm1531 = vcmp.ge.f32.partialorder %v1467, 0.0
          %vm1532 = vcmp.ge.f32.partialorder %v1468, 0.0
          %vm1533 = vcmp.ge.f32.partialorder %v1469, 0.0
          %vm1534 = vcmp.ge.f32.partialorder %v1470, 0.0
          %vm1535 = vcmp.ge.f32.partialorder %v1471, 0.0
          %vm1536 = vcmp.ge.f32.partialorder %v1472, 0.0
          %vm1537 = vcmp.ge.f32.partialorder %v1473, 0.0
          %vm1538 = vcmp.ge.f32.partialorder %v1474, 0.0
          %vm1539 = vcmp.ge.f32.partialorder %v1475, 0.0
          %vm1540 = vcmp.ge.f32.partialorder %v1476, 0.0
          %vm1541 = vcmp.ge.f32.partialorder %v1477, 0.0
          %vm1542 = vcmp.ge.f32.partialorder %v1478, 0.0
          %vm1543 = vcmp.ge.f32.partialorder %v1479, 0.0
          %vm1544 = vcmp.ge.f32.partialorder %v1480, 0.0
          %vm1545 = vcmp.ge.f32.partialorder %v1481, 0.0
          %vm1546 = vcmp.ge.f32.partialorder %v1482, 0.0
          %vm1547 = vcmp.ge.f32.partialorder %v1483, 0.0
          %vm1548 = vcmp.ge.f32.partialorder %v1484, 0.0
          %vm1549 = vcmp.ge.f32.partialorder %v1485, 0.0
          %vm1550 = vcmp.ge.f32.partialorder %v1486, 0.0
          %vm1551 = vcmp.ge.f32.partialorder %v1487, 0.0
          %vm1552 = vcmp.ge.f32.partialorder %v1488, 0.0
          %vm1553 = vcmp.ge.f32.partialorder %v1489, 0.0
          %vm1554 = vcmp.ge.f32.partialorder %v1490, 0.0
          %vm1555 = vcmp.ge.f32.partialorder %v1491, 0.0
          %vm1556 = vcmp.ge.f32.partialorder %v1492, 0.0
          %vm1557 = vcmp.ge.f32.partialorder %v1493, 0.0
          %vm1558 = vcmp.ge.f32.partialorder %v1494, 0.0
          %vm1559 = vcmp.ge.f32.partialorder %v1495, 0.0
          %vm1560 = vcmp.ge.f32.partialorder %v1496, 0.0
          %vm1561 = vcmp.ge.f32.partialorder %v1497, 0.0
          %vm1562 = vcmp.ge.f32.partialorder %v1498, 0.0
          %vm1563 = vcmp.ge.f32.partialorder %v1499, 0.0
          %vm1564 = vcmp.ge.f32.partialorder %v1500, 0.0
          %vm1565 = vcmp.ge.f32.partialorder %v1501, 0.0
          %vm1566 = vcmp.ge.f32.partialorder %v1502, 0.0
          %vm1567 = vcmp.ge.f32.partialorder %v1503, 0.0
          %vm1568 = vcmp.ge.f32.partialorder %v1504, 0.0
          %vm1569 = vcmp.ge.f32.partialorder %v1505, 0.0
          %vm1570 = vcmp.ge.f32.partialorder %v1506, 0.0
          %vm1571 = vcmp.ge.f32.partialorder %v1507, 0.0
          %vm1572 = vcmp.ge.f32.partialorder %v1508, 0.0
          %vm1573 = vcmp.ge.f32.partialorder %v1509, 0.0
          %vm1574 = vcmp.ge.f32.partialorder %v1510, 0.0
          %vm1575 = vcmp.ge.f32.partialorder %v1511, 0.0
          %vm1576 = vcmp.ge.f32.partialorder %v1512, 0.0
          %vm1577 = vcmp.ge.f32.partialorder %v1513, 0.0
          %vm1578 = vcmp.ge.f32.partialorder %v1514, 0.0
          %vm1579 = vcmp.ge.f32.partialorder %v1515, 0.0
          %v1580 = vmul.f32 %v1452, 0.1
          %v1581 = vmul.f32 %v1453, 0.1
          %v1582 = vmul.f32 %v1454, 0.1
          %v1583 = vmul.f32 %v1455, 0.1
          %v1584 = vmul.f32 %v1456, 0.1
          %v1585 = vmul.f32 %v1457, 0.1
          %v1586 = vmul.f32 %v1458, 0.1
          %v1587 = vmul.f32 %v1459, 0.1
          %v1588 = vmul.f32 %v1460, 0.1
          %v1589 = vmul.f32 %v1461, 0.1
          %v1590 = vmul.f32 %v1462, 0.1
          %v1591 = vmul.f32 %v1463, 0.1
          %v1592 = vmul.f32 %v1464, 0.1
          %v1593 = vmul.f32 %v1465, 0.1
          %v1594 = vmul.f32 %v1466, 0.1
          %v1595 = vmul.f32 %v1467, 0.1
          %v1596 = vmul.f32 %v1468, 0.1
          %v1597 = vmul.f32 %v1469, 0.1
          %v1598 = vmul.f32 %v1470, 0.1
          %v1599 = vmul.f32 %v1471, 0.1
          %v1600 = vmul.f32 %v1472, 0.1
          %v1601 = vmul.f32 %v1473, 0.1
          %v1602 = vmul.f32 %v1474, 0.1
          %v1603 = vmul.f32 %v1475, 0.1
          %v1604 = vmul.f32 %v1476, 0.1
          %v1605 = vmul.f32 %v1477, 0.1
          %v1606 = vmul.f32 %v1478, 0.1
          %v1607 = vmul.f32 %v1479, 0.1
          %v1608 = vmul.f32 %v1480, 0.1
          %v1609 = vmul.f32 %v1481, 0.1
          %v1610 = vmul.f32 %v1482, 0.1
          %v1611 = vmul.f32 %v1483, 0.1
          %v1612 = vmul.f32 %v1484, 0.1
          %v1613 = vmul.f32 %v1485, 0.1
          %v1614 = vmul.f32 %v1486, 0.1
          %v1615 = vmul.f32 %v1487, 0.1
          %v1616 = vmul.f32 %v1488, 0.1
          %v1617 = vmul.f32 %v1489, 0.1
          %v1618 = vmul.f32 %v1490, 0.1
          %v1619 = vmul.f32 %v1491, 0.1
          %v1620 = vmul.f32 %v1492, 0.1
          %v1621 = vmul.f32 %v1493, 0.1
          %v1622 = vmul.f32 %v1494, 0.1
          %v1623 = vmul.f32 %v1495, 0.1
          %v1624 = vmul.f32 %v1496, 0.1
          %v1625 = vmul.f32 %v1497, 0.1
          %v1626 = vmul.f32 %v1498, 0.1
          %v1627 = vmul.f32 %v1499, 0.1
          %v1628 = vmul.f32 %v1500, 0.1
          %v1629 = vmul.f32 %v1501, 0.1
          %v1630 = vmul.f32 %v1502, 0.1
          %v1631 = vmul.f32 %v1503, 0.1
          %v1632 = vmul.f32 %v1504, 0.1
          %v1633 = vmul.f32 %v1505, 0.1
          %v1634 = vmul.f32 %v1506, 0.1
          %v1635 = vmul.f32 %v1507, 0.1
          %v1636 = vmul.f32 %v1508, 0.1
          %v1637 = vmul.f32 %v1509, 0.1
          %v1638 = vmul.f32 %v1510, 0.1
          %v1639 = vmul.f32 %v1511, 0.1
          %v1640 = vmul.f32 %v1512, 0.1
          %v1641 = vmul.f32 %v1513, 0.1
          %v1642 = vmul.f32 %v1514, 0.1
          %v1643 = vmul.f32 %v1515, 0.1
          %v1644 = vsel %vm1516, %v1452, %v1580
          %v1645 = vsel %vm1517, %v1453, %v1581
          %v1646 = vsel %vm1518, %v1454, %v1582
          %v1647 = vsel %vm1519, %v1455, %v1583
          %v1648 = vsel %vm1520, %v1456, %v1584
          %v1649 = vsel %vm1521, %v1457, %v1585
          %v1650 = vsel %vm1522, %v1458, %v1586
          %v1651 = vsel %vm1523, %v1459, %v1587
          %v1652 = vsel %vm1524, %v1460, %v1588
          %v1653 = vsel %vm1525, %v1461, %v1589
          %v1654 = vsel %vm1526, %v1462, %v1590
          %v1655 = vsel %vm1527, %v1463, %v1591
          %v1656 = vsel %vm1528, %v1464, %v1592
          %v1657 = vsel %vm1529, %v1465, %v1593
          %v1658 = vsel %vm1530, %v1466, %v1594
          %v1659 = vsel %vm1531, %v1467, %v1595
          %v1660 = vsel %vm1532, %v1468, %v1596
          %v1661 = vsel %vm1533, %v1469, %v1597
          %v1662 = vsel %vm1534, %v1470, %v1598
          %v1663 = vsel %vm1535, %v1471, %v1599
          %v1664 = vsel %vm1536, %v1472, %v1600
          %v1665 = vsel %vm1537, %v1473, %v1601
          %v1666 = vsel %vm1538, %v1474, %v1602
          %v1667 = vsel %vm1539, %v1475, %v1603
          %v1668 = vsel %vm1540, %v1476, %v1604
          %v1669 = vsel %vm1541, %v1477, %v1605
          %v1670 = vsel %vm1542, %v1478, %v1606
          %v1671 = vsel %vm1543, %v1479, %v1607
          %v1672 = vsel %vm1544, %v1480, %v1608
          %v1673 = vsel %vm1545, %v1481, %v1609
          %v1674 = vsel %vm1546, %v1482, %v1610
          %v1675 = vsel %vm1547, %v1483, %v1611
          %v1676 = vsel %vm1548, %v1484, %v1612
          %v1677 = vsel %vm1549, %v1485, %v1613
          %v1678 = vsel %vm1550, %v1486, %v1614
          %v1679 = vsel %vm1551, %v1487, %v1615
          %v1680 = vsel %vm1552, %v1488, %v1616
          %v1681 = vsel %vm1553, %v1489, %v1617
          %v1682 = vsel %vm1554, %v1490, %v1618
          %v1683 = vsel %vm1555, %v1491, %v1619
          %v1684 = vsel %vm1556, %v1492, %v1620
          %v1685 = vsel %vm1557, %v1493, %v1621
          %v1686 = vsel %vm1558, %v1494, %v1622
          %v1687 = vsel %vm1559, %v1495, %v1623
          %v1688 = vsel %vm1560, %v1496, %v1624
          %v1689 = vsel %vm1561, %v1497, %v1625
          %v1690 = vsel %vm1562, %v1498, %v1626
          %v1691 = vsel %vm1563, %v1499, %v1627
          %v1692 = vsel %vm1564, %v1500, %v1628
          %v1693 = vsel %vm1565, %v1501, %v1629
          %v1694 = vsel %vm1566, %v1502, %v1630
          %v1695 = vsel %vm1567, %v1503, %v1631
          %v1696 = vsel %vm1568, %v1504, %v1632
          %v1697 = vsel %vm1569, %v1505, %v1633
          %v1698 = vsel %vm1570, %v1506, %v1634
          %v1699 = vsel %vm1571, %v1507, %v1635
          %v1700 = vsel %vm1572, %v1508, %v1636
          %v1701 = vsel %vm1573, %v1509, %v1637
          %v1702 = vsel %vm1574, %v1510, %v1638
          %v1703 = vsel %vm1575, %v1511, %v1639
          %v1704 = vsel %vm1576, %v1512, %v1640
          %v1705 = vsel %vm1577, %v1513, %v1641
          %v1706 = vsel %vm1578, %v1514, %v1642
          %v1707 = vsel %vm1579, %v1515, %v1643
          %1708 = vst [vmem:[%s376] sm:$0xff] %v1644
          %1709 = vst [vmem:[%s376 + $0x8] sm:$0xff] %v1645
          %1710 = vst [vmem:[%s376 + $0x10] sm:$0xff] %v1646
          %1711 = vst [vmem:[%s376 + $0x18] sm:$0xff] %v1647
          %1712 = vst [vmem:[%s376 + $0x20] sm:$0xff] %v1648
          %1713 = vst [vmem:[%s376 + $0x28] sm:$0xff] %v1649
          %1714 = vst [vmem:[%s376 + $0x30] sm:$0xff] %v1650
          %1715 = vst [vmem:[%s376 + $0x38] sm:$0xff] %v1651
          %1716 = vst [vmem:[%s376 + $0x40] sm:$0xff] %v1652
          %1717 = vst [vmem:[%s376 + $0x48] sm:$0xff] %v1653
          %1718 = vst [vmem:[%s376 + $0x50] sm:$0xff] %v1654
          %1719 = vst [vmem:[%s376 + $0x58] sm:$0xff] %v1655
          %1720 = vst [vmem:[%s376 + $0x60] sm:$0xff] %v1656
          %1721 = vst [vmem:[%s376 + $0x68] sm:$0xff] %v1657
          %1722 = vst [vmem:[%s376 + $0x70] sm:$0xff] %v1658
          %1723 = vst [vmem:[%s376 + $0x78] sm:$0xff] %v1659
          %1724 = vst [vmem:[%s376 + $0x80] sm:$0xff] %v1660
          %1725 = vst [vmem:[%s376 + $0x88] sm:$0xff] %v1661
          %1726 = vst [vmem:[%s376 + $0x90] sm:$0xff] %v1662
          %1727 = vst [vmem:[%s376 + $0x98] sm:$0xff] %v1663
          %1728 = vst [vmem:[%s376 + $0xa0] sm:$0xff] %v1664
          %1729 = vst [vmem:[%s376 + $0xa8] sm:$0xff] %v1665
          %1730 = vst [vmem:[%s376 + $0xb0] sm:$0xff] %v1666
          %1731 = vst [vmem:[%s376 + $0xb8] sm:$0xff] %v1667
          %1732 = vst [vmem:[%s376 + $0xc0] sm:$0xff] %v1668
          %1733 = vst [vmem:[%s376 + $0xc8] sm:$0xff] %v1669
          %1734 = vst [vmem:[%s376 + $0xd0] sm:$0xff] %v1670
          %1735 = vst [vmem:[%s376 + $0xd8] sm:$0xff] %v1671
          %1736 = vst [vmem:[%s376 + $0xe0] sm:$0xff] %v1672
          %1737 = vst [vmem:[%s376 + $0xe8] sm:$0xff] %v1673
          %1738 = vst [vmem:[%s376 + $0xf0] sm:$0xff] %v1674
          %1739 = vst [vmem:[%s376 + $0xf8] sm:$0xff] %v1675
          %1740 = vst [vmem:[%s376 + $0x100] sm:$0xff] %v1676
          %1741 = vst [vmem:[%s376 + $0x108] sm:$0xff] %v1677
          %1742 = vst [vmem:[%s376 + $0x110] sm:$0xff] %v1678
          %1743 = vst [vmem:[%s376 + $0x118] sm:$0xff] %v1679
          %1744 = vst [vmem:[%s376 + $0x120] sm:$0xff] %v1680
          %1745 = vst [vmem:[%s376 + $0x128] sm:$0xff] %v1681
          %1746 = vst [vmem:[%s376 + $0x130] sm:$0xff] %v1682
          %1747 = vst [vmem:[%s376 + $0x138] sm:$0xff] %v1683
          %1748 = vst [vmem:[%s376 + $0x140] sm:$0xff] %v1684
          %1749 = vst [vmem:[%s376 + $0x148] sm:$0xff] %v1685
          %1750 = vst [vmem:[%s376 + $0x150] sm:$0xff] %v1686
          %1751 = vst [vmem:[%s376 + $0x158] sm:$0xff] %v1687
          %1752 = vst [vmem:[%s376 + $0x160] sm:$0xff] %v1688
          %1753 = vst [vmem:[%s376 + $0x168] sm:$0xff] %v1689
          %1754 = vst [vmem:[%s376 + $0x170] sm:$0xff] %v1690
          %1755 = vst [vmem:[%s376 + $0x178] sm:$0xff] %v1691
          %1756 = vst [vmem:[%s376 + $0x180] sm:$0xff] %v1692
          %1757 = vst [vmem:[%s376 + $0x188] sm:$0xff] %v1693
          %1758 = vst [vmem:[%s376 + $0x190] sm:$0xff] %v1694
          %1759 = vst [vmem:[%s376 + $0x198] sm:$0xff] %v1695
          %1760 = vst [vmem:[%s376 + $0x1a0] sm:$0xff] %v1696
          %1761 = vst [vmem:[%s376 + $0x1a8] sm:$0xff] %v1697
          %1762 = vst [vmem:[%s376 + $0x1b0] sm:$0xff] %v1698
          %1763 = vst [vmem:[%s376 + $0x1b8] sm:$0xff] %v1699
          %1764 = vst [vmem:[%s376 + $0x1c0] sm:$0xff] %v1700
          %1765 = vst [vmem:[%s376 + $0x1c8] sm:$0xff] %v1701
          %1766 = vst [vmem:[%s376 + $0x1d0] sm:$0xff] %v1702
          %1767 = vst [vmem:[%s376 + $0x1d8] sm:$0xff] %v1703
          %1768 = vst [vmem:[%s376 + $0x1e0] sm:$0xff] %v1704
          %1769 = vst [vmem:[%s376 + $0x1e8] sm:$0xff] %v1705
          %1770 = vst [vmem:[%s376 + $0x1f0] sm:$0xff] %v1706
          %1771 = vst [vmem:[%s376 + $0x1f8] sm:$0xff] %v1707
        $region78: #{classifier_forward.5} parent=65 // pred_fallthru
          _
        %s1772 = smul.u32 32, %s18
        %p1773 = scmp.lt.s32.totalorder %s1772, 63
        %s1774 = scalar_select %p1773, %s1772, 63
        %s1775 = smul.addr %s1774, 2
        %s1776 = smul.addr %s1775, 8
        %s1777 = scalar_lea.vmem %s3, %s1776
        // Predicated region
        $region79: #{classifier_forward.5} parent=65 // pred_check
          %p1778 = pneg %p119
        $region80: #{classifier_forward.5} parent=65 // pred_check_branch
          %1780 = sbr.rel (%p1778) target = $region82
        $region81: #{classifier_forward.5} parent=65 // pred_region
          %s1781 = smul.u32 32, %s18
        $region82: #{classifier_forward.5} parent=65 // pred_fallthru
          _
      $region66: #{classifier_forward.5} parent=5 // pred_fallthru
        _
      %p1782 = scmp.le.s32.totalorder 2, %s9
      // Predicated region
      $region83: #{classifier_forward.5} parent=5 // pred_check
        %p1783 = pneg %p1782
      $region84: #{classifier_forward.5} parent=5 // pred_check_branch
        %1785 = sbr.rel (%p1783) target = $region86
      $region85: #{classifier_forward.5} parent=5 // pred_region
        %s1786 = ssub.s32 %s9, 2
        // Predicated region
        $region87: #{classifier_forward.5} parent=85 // pred_check
          %p1787 = pneg %p125
        $region88: #{classifier_forward.5} parent=85 // pred_check_branch
          %1789 = sbr.rel (%p1787) target = $region90
        $region89: #{classifier_forward.5} parent=85 // pred_region
          %s1790 = smul.u32 32, %s20
          %p1791 = scmp.lt.s32.totalorder %s1790, 63
          %s1792 = scalar_select %p1791, %s1790, 63
          %s1793 = smul.addr %s1792, 2
          %s1794 = smul.addr %s1793, 8
          %s1795 = scalar_lea.vmem %s3, %s1794
        $region90: #{classifier_forward.5} parent=85 // pred_fallthru
          _
      $region86: #{classifier_forward.5} parent=5 // pred_fallthru
        _
    $region6: #{classifier_forward.5} parent=1 // loop_footer
      %s13 = sadd.s32 1, %s9
    $region7: #{classifier_forward.5} parent=1 // loop_footer_branch
      %8 = sbr.rel target = $region3
    $region8: #{classifier_forward.5} parent=1 // loop_exit
      _

// kernel: classifier_forward.6
$region0: #{classifier_forward.6}
  #allocation0 [shape = 'u32[]', space=smem, size = 0x4, offset = 0x4, fixed_abs, tag = 'smem constant byte address 0x4 - core index']
  #allocation1 [shape = 'u32[72,128]{1,0:T(1,128)}', space=vmem, size = 0x9000, scoped, tag = 'internal scratch']
  #allocation2 [shape = 'f32[128,256]{1,0:T(8,128)}', space=vmem, size = 0x20000, scoped, tag = 'scratch operand']
  %s0 = inlined_call_operand.vmem [shape: bf16[128,2304], index: 0, kind: input, shape index: {}]
  %s1 = inlined_call_operand.vmem [shape: bf16[2304,256], index: 1, kind: input, shape index: {}]
  %s2 = inlined_call_operand.vmem [shape: f32[1,256], index: 2, kind: input, shape index: {}]
  %s3 = inlined_call_operand.vmem [shape: f32[128,256], index: 3, kind: output, shape index: {}]
  %s4 = sld [smem:[#allocation0]]
  $region91: #{classifier_forward.6} parent=0
    _
  %s6 = ssub.s32 1, %s4
  %s7 = scalar_select 0, %s6, %s4
  $region1: #{classifier_forward.6} parent=0
    #allocation3 [shape = 'u8[131072]{0}', space=vmem, size = 0x20000, scoped, tag = 'input window, operand 0']
    loop: start=0, step=1, limit=11
    $region2: #{classifier_forward.6} parent=1 // loop_pre_header
      _
    $region3: #{classifier_forward.6} parent=1 // loop_header
      %s9 = sphi 0, %s13
      %p10 = scmp.ge.s32.totalorder %s9, 11
      %s16 = sphi 0, %s28
      %s17 = sphi 0, %s24
      %s18 = sphi 0, %s16
      %s19 = sphi 0, %s17
      %s20 = sphi 0, %s18
      %s21 = sphi 0, %s19
      %s33 = sphi 0, %s35
      %s36 = sphi 0, %s33
      %s37 = sphi 0, %s36
      %s53 = sphi 0, %s37
      %s59 = sphi 0, %s61
      %s62 = sphi 0, %s59
      %s63 = sphi 0, %s62
      %s79 = sphi 0, %s63
      %s83 = sphi 0, %s83
      %s85 = sphi 0, %s83
      %s86 = sphi 0, %s85
      %s100 = sphi 0, %s86
      %s106 = sphi 0, %s108
      %s109 = sphi 0, %s106
      %s110 = sphi 0, %s109
      %s126 = sphi 0, %s110
    $region4: #{classifier_forward.6} parent=1 // loop_header_branch
      %12 = sbr.rel (%p10) target = $region8
    $region5: #{classifier_forward.6} parent=1 // loop_body
      %s14 = ssub.s32 %s9, 1
      %s15 = ssub.s32 %s9, 2
      %s22 = sadd.s32 1, %s17
      %p23 = scmp.ge.s32.totalorder %s22, 9
      %s24 = scalar_select %p23, 0, %s22
      %s25 = sadd.s32 1, %s16
      %s26 = scalar_select %p23, %s25, %s16
      %p27 = scmp.ge.s32.totalorder %s26, 1
      %s28 = scalar_select %p27, 0, %s26
      %s29 = ssub.s32 %s16, %s28
      %s30 = ssub.s32 %s17, %s24
      %s31 = sor.u32 %s29, %s30
      %p32 = scmp.eq.s32.totalorder %s31, 0
      %s34 = sadd.s32 %s33, 1
      %s35 = scalar_select %p32, %s33, %s34
      %p38 = pneg %p32
      %p39 = scmp.eq.s32.totalorder %s9, 8
      %p40 = por %p38, %p39
      %p41 = scmp.ne.s32.totalorder %s33, %s36
      %p42 = scmp.eq.s32.totalorder %s9, 0
      %p43 = por %p41, %p42
      %p44 = scmp.ne.s32.totalorder %s33, %s36
      %p45 = scmp.eq.s32.totalorder %s14, 8
      %p46 = por %p44, %p45
      %p47 = scmp.ne.s32.totalorder %s36, %s37
      %p48 = scmp.eq.s32.totalorder %s14, 0
      %p49 = por %p47, %p48
      %p50 = scmp.ne.s32.totalorder %s36, %s37
      %p51 = scmp.eq.s32.totalorder %s15, 8
      %p52 = por %p50, %p51
      %p54 = scmp.ne.s32.totalorder %s37, %s53
      %p55 = scmp.eq.s32.totalorder %s15, 0
      %p56 = por %p54, %p55
      %s57 = ssub.s32 %s17, %s24
      %p58 = scmp.eq.s32.totalorder %s57, 0
      %s60 = sadd.s32 %s59, 1
      %s61 = scalar_select %p58, %s59, %s60
      %p64 = pneg %p58
      %p65 = scmp.eq.s32.totalorder %s9, 8
      %p66 = por %p64, %p65
      %p67 = scmp.ne.s32.totalorder %s59, %s62
      %p68 = scmp.eq.s32.totalorder %s9, 0
      %p69 = por %p67, %p68
      %p70 = scmp.ne.s32.totalorder %s59, %s62
      %p71 = scmp.eq.s32.totalorder %s14, 8
      %p72 = por %p70, %p71
      %p73 = scmp.ne.s32.totalorder %s62, %s63
      %p74 = scmp.eq.s32.totalorder %s14, 0
      %p75 = por %p73, %p74
      %p76 = scmp.ne.s32.totalorder %s62, %s63
      %p77 = scmp.eq.s32.totalorder %s15, 8
      %p78 = por %p76, %p77
      %p80 = scmp.ne.s32.totalorder %s63, %s79
      %p81 = scmp.eq.s32.totalorder %s15, 0
      %p82 = por %p80, %p81
      %s84 = sadd.s32 %s83, 1
      %p87 = scmp.eq.s32.totalorder %s9, 8
      %p88 = scmp.ne.s32.totalorder %s83, %s85
      %p89 = scmp.eq.s32.totalorder %s9, 0
      %p90 = por %p88, %p89
      %p91 = scmp.ne.s32.totalorder %s83, %s85
      %p92 = scmp.eq.s32.totalorder %s14, 8
      %p93 = por %p91, %p92
      %p94 = scmp.ne.s32.totalorder %s85, %s86
      %p95 = scmp.eq.s32.totalorder %s14, 0
      %p96 = por %p94, %p95
      %p97 = scmp.ne.s32.totalorder %s85, %s86
      %p98 = scmp.eq.s32.totalorder %s15, 8
      %p99 = por %p97, %p98
      %p101 = scmp.ne.s32.totalorder %s86, %s100
      %p102 = scmp.eq.s32.totalorder %s15, 0
      %p103 = por %p101, %p102
      %s104 = ssub.s32 %s16, %s28
      %p105 = scmp.eq.s32.totalorder %s104, 0
      %s107 = sadd.s32 %s106, 1
      %s108 = scalar_select %p105, %s106, %s107
      %p111 = pneg %p105
      %p112 = scmp.eq.s32.totalorder %s9, 8
      %p113 = por %p111, %p112
      %p114 = scmp.ne.s32.totalorder %s106, %s109
      %p115 = scmp.eq.s32.totalorder %s9, 0
      %p116 = por %p114, %p115
      %p117 = scmp.ne.s32.totalorder %s106, %s109
      %p118 = scmp.eq.s32.totalorder %s14, 8
      %p119 = por %p117, %p118
      %p120 = scmp.ne.s32.totalorder %s109, %s110
      %p121 = scmp.eq.s32.totalorder %s14, 0
      %p122 = por %p120, %p121
      %p123 = scmp.ne.s32.totalorder %s109, %s110
      %p124 = scmp.eq.s32.totalorder %s15, 8
      %p125 = por %p123, %p124
      %p127 = scmp.ne.s32.totalorder %s110, %s126
      %p128 = scmp.eq.s32.totalorder %s15, 0
      %p129 = por %p127, %p128
      %p130 = scmp.le.s32.totalorder 1, %s9
      %p131 = scmp.lt.s32.totalorder %s9, 10
      %p132 = pnand %p130, %p131
      %p133 = pneg %p132
      // Predicated region
      $region9: #{classifier_forward.6} parent=5 // pred_check
        _
      $region10: #{classifier_forward.6} parent=5 // pred_check_branch
        %135 = sbr.rel (%p132) target = $region12
      $region11: #{classifier_forward.6} parent=5 // pred_region
        %s136 = ssub.s32 %s9, 1
        // Predicated region
        $region13: #{classifier_forward.6} parent=11 // pred_check
          %p137 = pneg %p96
        $region14: #{classifier_forward.6} parent=11 // pred_check_branch
          %139 = sbr.rel (%p137) target = $region16
        $region15: #{classifier_forward.6} parent=11 // pred_region
          _
        $region16: #{classifier_forward.6} parent=11 // pred_fallthru
          _
      $region12: #{classifier_forward.6} parent=5 // pred_fallthru
        _
      %p140 = scmp.lt.s32.totalorder %s9, 9
      // Predicated region
      $region17: #{classifier_forward.6} parent=5 // pred_check
        %p141 = pneg %p140
      $region18: #{classifier_forward.6} parent=5 // pred_check_branch
        %143 = sbr.rel (%p141) target = $region20
      $region19: #{classifier_forward.6} parent=5 // pred_region
        // Predicated region
        $region21: #{classifier_forward.6} parent=19 // pred_check
          %p144 = pneg %p43
        $region22: #{classifier_forward.6} parent=19 // pred_check_branch
          %146 = sbr.rel (%p144) target = $region24
        $region23: #{classifier_forward.6} parent=19 // pred_region
          %s147 = sand.u32 %s33, 1
          %s148 = sand.u32 %s33, 1
          %s149 = smul.addr %s148, 128
          %s150 = scalar_lea.vmem [#allocation3], %s149
          %s151 = smul.u32 16, %s16
          %s152 = smul.u32 2, %s17
          %s153 = smul.addr %s151, 18
          %s154 = sadd.s32 %s152, %s153
          %s155 = smul.addr %s154, 4
          %s156 = scalar_lea.vmem %s0, %s155
          // Predicated region
          $region25: #{classifier_forward.6} parent=23 // pred_check
            _
          $region26: #{classifier_forward.6} parent=23 // pred_check_branch
            %158 = sbr.rel (0) target = $region28
          $region27: #{classifier_forward.6} parent=23 // pred_region
            // Predicated region
            $region29: #{classifier_forward.6} parent=27 // pred_check
              _
            $region30: #{classifier_forward.6} parent=27 // pred_check_branch
              %160 = sbr.rel (0) target = $region32
            $region31: #{classifier_forward.6} parent=27 // pred_region
              // Predicated region
              $region44: #{classifier_forward.6} parent=31 // pred_check
                _
              $region45: #{classifier_forward.6} parent=31 // pred_check_branch
                %206 = sbr.rel (0) target = $region47
              $region46: #{classifier_forward.6} parent=31 // pred_region
                loop: start=0, step=1, limit=1
                $region48: #{classifier_forward.6} parent=46 // loop_pre_header
                  _
                $region49: #{classifier_forward.6} parent=46 // loop_header
                  %s208 = sphi 0, %s212
                  %p209 = scmp.ge.s32.totalorder %s208, 1
                  %s213 = sphi %s156, %s156
                  %s214 = sphi %s150, %s150
                $region50: #{classifier_forward.6} parent=46 // loop_header_branch
                  %211 = sbr.rel (%p209) target = $region54
                $region51: #{classifier_forward.6} parent=46 // loop_body
                  %v215 = vld [vmem:[%s213] sm:$0xff]
                  %216 = vst [vmem:[%s214] sm:$0xff] %v215
                  %v217 = vld [vmem:[%s213 + $0x48] sm:$0xff]
                  %218 = vst [vmem:[%s214 + $0x8] sm:$0xff] %v217
                  %v219 = vld [vmem:[%s213 + $0x90] sm:$0xff]
                  %220 = vst [vmem:[%s214 + $0x10] sm:$0xff] %v219
                  %v221 = vld [vmem:[%s213 + $0xd8] sm:$0xff]
                  %222 = vst [vmem:[%s214 + $0x18] sm:$0xff] %v221
                  %v223 = vld [vmem:[%s213 + $0x120] sm:$0xff]
                  %224 = vst [vmem:[%s214 + $0x20] sm:$0xff] %v223
                  %v225 = vld [vmem:[%s213 + $0x168] sm:$0xff]
                  %226 = vst [vmem:[%s214 + $0x28] sm:$0xff] %v225
                  %v227 = vld [vmem:[%s213 + $0x1b0] sm:$0xff]
                  %228 = vst [vmem:[%s214 + $0x30] sm:$0xff] %v227
                  %v229 = vld [vmem:[%s213 + $0x1f8] sm:$0xff]
                  %230 = vst [vmem:[%s214 + $0x38] sm:$0xff] %v229
                  %v231 = vld [vmem:[%s213 + $0x240] sm:$0xff]
                  %232 = vst [vmem:[%s214 + $0x40] sm:$0xff] %v231
                  %v233 = vld [vmem:[%s213 + $0x288] sm:$0xff]
                  %234 = vst [vmem:[%s214 + $0x48] sm:$0xff] %v233
                  %v235 = vld [vmem:[%s213 + $0x2d0] sm:$0xff]
                  %236 = vst [vmem:[%s214 + $0x50] sm:$0xff] %v235
                  %v237 = vld [vmem:[%s213 + $0x318] sm:$0xff]
                  %238 = vst [vmem:[%s214 + $0x58] sm:$0xff] %v237
                  %v239 = vld [vmem:[%s213 + $0x360] sm:$0xff]
                  %240 = vst [vmem:[%s214 + $0x60] sm:$0xff] %v239
                  %v241 = vld [vmem:[%s213 + $0x3a8] sm:$0xff]
                  %242 = vst [vmem:[%s214 + $0x68] sm:$0xff] %v241
                  %v243 = vld [vmem:[%s213 + $0x3f0] sm:$0xff]
                  %244 = vst [vmem:[%s214 + $0x70] sm:$0xff] %v243
                  %v245 = vld [vmem:[%s213 + $0x438] sm:$0xff]
                  %246 = vst [vmem:[%s214 + $0x78] sm:$0xff] %v245
                $region52: #{classifier_forward.6} parent=46 // loop_footer
                  %s212 = sadd.s32 1, %s208
                $region53: #{classifier_forward.6} parent=46 // loop_footer_branch
                  %207 = sbr.rel target = $region49
                $region54: #{classifier_forward.6} parent=46 // loop_exit
                  _
              $region47: #{classifier_forward.6} parent=31 // pred_fallthru
                _
              // Predicated region
              $region55: #{classifier_forward.6} parent=31 // pred_check
                _
              $region56: #{classifier_forward.6} parent=31 // pred_check_branch
                %248 = sbr.rel target = $region58
              $region57: #{classifier_forward.6} parent=31 // pred_region
                _
              $region58: #{classifier_forward.6} parent=31 // pred_fallthru
                _
            $region32: #{classifier_forward.6} parent=27 // pred_fallthru
              _
            // Predicated region
            $region33: #{classifier_forward.6} parent=27 // pred_check
              _
            $region34: #{classifier_forward.6} parent=27 // pred_check_branch
              %162 = sbr.rel target = $region36
            $region35: #{classifier_forward.6} parent=27 // pred_region
              %s164 = ssub.s32 256, 1
              loop: start=0, step=1, limit=1
              $region37: #{classifier_forward.6} parent=35 // loop_pre_header
                _
              $region38: #{classifier_forward.6} parent=35 // loop_header
                %s166 = sphi 0, %s170
                %p167 = scmp.ge.s32.totalorder %s166, 1
                %s171 = sphi %s156, %s156
                %s172 = sphi %s150, %s150
              $region39: #{classifier_forward.6} parent=35 // loop_header_branch
                %169 = sbr.rel (%p167) target = $region43
              $region40: #{classifier_forward.6} parent=35 // loop_body
                %v173 = vld [vmem:[%s171] sm:%s164]
                %174 = vst [vmem:[%s172] sm:%s164] %v173
                %v175 = vld [vmem:[%s171 + $0x48] sm:%s164]
                %176 = vst [vmem:[%s172 + $0x8] sm:%s164] %v175
                %v177 = vld [vmem:[%s171 + $0x90] sm:%s164]
                %178 = vst [vmem:[%s172 + $0x10] sm:%s164] %v177
                %v179 = vld [vmem:[%s171 + $0xd8] sm:%s164]
                %180 = vst [vmem:[%s172 + $0x18] sm:%s164] %v179
                %v181 = vld [vmem:[%s171 + $0x120] sm:%s164]
                %182 = vst [vmem:[%s172 + $0x20] sm:%s164] %v181
                %v183 = vld [vmem:[%s171 + $0x168] sm:%s164]
                %184 = vst [vmem:[%s172 + $0x28] sm:%s164] %v183
                %v185 = vld [vmem:[%s171 + $0x1b0] sm:%s164]
                %186 = vst [vmem:[%s172 + $0x30] sm:%s164] %v185
                %v187 = vld [vmem:[%s171 + $0x1f8] sm:%s164]
                %188 = vst [vmem:[%s172 + $0x38] sm:%s164] %v187
                %v189 = vld [vmem:[%s171 + $0x240] sm:%s164]
                %190 = vst [vmem:[%s172 + $0x40] sm:%s164] %v189
                %v191 = vld [vmem:[%s171 + $0x288] sm:%s164]
                %192 = vst [vmem:[%s172 + $0x48] sm:%s164] %v191
                %v193 = vld [vmem:[%s171 + $0x2d0] sm:%s164]
                %194 = vst [vmem:[%s172 + $0x50] sm:%s164] %v193
                %v195 = vld [vmem:[%s171 + $0x318] sm:%s164]
                %196 = vst [vmem:[%s172 + $0x58] sm:%s164] %v195
                %v197 = vld [vmem:[%s171 + $0x360] sm:%s164]
                %198 = vst [vmem:[%s172 + $0x60] sm:%s164] %v197
                %v199 = vld [vmem:[%s171 + $0x3a8] sm:%s164]
                %200 = vst [vmem:[%s172 + $0x68] sm:%s164] %v199
                %v201 = vld [vmem:[%s171 + $0x3f0] sm:%s164]
                %202 = vst [vmem:[%s172 + $0x70] sm:%s164] %v201
                %v203 = vld [vmem:[%s171 + $0x438] sm:%s164]
                %204 = vst [vmem:[%s172 + $0x78] sm:%s164] %v203
              $region41: #{classifier_forward.6} parent=35 // loop_footer
                %s170 = sadd.s32 1, %s166
              $region42: #{classifier_forward.6} parent=35 // loop_footer_branch
                %165 = sbr.rel target = $region38
              $region43: #{classifier_forward.6} parent=35 // loop_exit
                _
            $region36: #{classifier_forward.6} parent=27 // pred_fallthru
              _
          $region28: #{classifier_forward.6} parent=23 // pred_fallthru
            _
          %249 = vnop
        $region24: #{classifier_forward.6} parent=19 // pred_fallthru
          _
        // Predicated region
        $region59: #{classifier_forward.6} parent=19 // pred_check
          %p250 = pneg %p69
        $region60: #{classifier_forward.6} parent=19 // pred_check_branch
          %252 = sbr.rel (%p250) target = $region62
        $region61: #{classifier_forward.6} parent=19 // pred_region
          %s253 = smul.u32 32, %s17
          %p254 = scmp.lt.s32.totalorder %s253, 287
          %s255 = scalar_select %p254, %s253, 287
          %s256 = smul.addr %s255, 2
          %s257 = smul.addr %s256, 4
          %s258 = scalar_lea.vmem %s1, %s257
          %s259 = smul.u32 32, %s17
        $region62: #{classifier_forward.6} parent=19 // pred_fallthru
          _
      $region20: #{classifier_forward.6} parent=5 // pred_fallthru
        _
      %p260 = scmp.le.s32.totalorder 1, %s9
      %p261 = scmp.lt.s32.totalorder %s9, 10
      %p262 = pnand %p260, %p261
      %p263 = pneg %p262
      // Predicated region
      $region63: #{classifier_forward.6} parent=5 // pred_check
        _
      $region64: #{classifier_forward.6} parent=5 // pred_check_branch
        %265 = sbr.rel (%p262) target = $region66
      $region65: #{classifier_forward.6} parent=5 // pred_region
        %s266 = ssub.s32 %s9, 1
        %s267 = sand.u32 %s36, 1
        %s268 = sand.u32 %s36, 1
        %s269 = smul.addr %s268, 128
        %s270 = scalar_lea.vmem [#allocation3], %s269
        // Predicated region
        $region67: #{classifier_forward.6} parent=65 // pred_check
          %p271 = pneg %p49
        $region68: #{classifier_forward.6} parent=65 // pred_check_branch
          %273 = sbr.rel (%p271) target = $region70
        $region69: #{classifier_forward.6} parent=65 // pred_region
          _
        $region70: #{classifier_forward.6} parent=65 // pred_fallthru
          _
        %s274 = sand.u32 %s36, 1
        %s275 = sand.u32 %s36, 1
        %s276 = smul.addr %s275, 128
        %s277 = scalar_lea.vmem [#allocation3], %s276
        %p278 = pneg %p49
        %p279 = pneg %p46
        %s280 = smul.u32 32, %s19
        %p281 = scmp.lt.s32.totalorder %s280, 287
        %s282 = scalar_select %p281, %s280, 287
        %s283 = smul.addr %s282, 2
        %s284 = smul.addr %s283, 4
        %s285 = scalar_lea.vmem %s1, %s284
        %p286 = pneg %p75
        %p287 = pneg %p72
        %p288 = pneg %p96
        %p289 = pneg %p93
        %p290 = pneg %p122
        %p291 = pneg %p119
        %s292 = smul.u32 16, %s18
        %p293 = scmp.lt.s32.totalorder %s292, 15
        %s294 = scalar_select %p293, %s292, 15
        %s295 = smul.addr %s294, 2
        %s296 = smul.addr %s295, 8
        %s297 = scalar_lea.vmem %s3, %s296
        %s298 = smul.u32 16, %s18
        %s299 = smul.u32 2, %s19
        %s300 = smul.u32 32, %s19
        %p301 = scmp.lt.s32.totalorder %s300, 287
        %s302 = scalar_select %p301, %s300, 287
        %s303 = smul.addr %s302, 2
        %s304 = smul.addr %s303, 4
        %s305 = scalar_lea.vmem %s1, %s304
        %s306 = smul.u32 32, %s19
        %s307 = smul.u32 16, %s18
        %p308 = scmp.lt.s32.totalorder %s307, 15
        %s309 = scalar_select %p308, %s307, 15
        %s310 = smul.addr %s309, 2
        %s311 = smul.addr %s310, 8
        %s312 = scalar_lea.vmem %s3, %s311
        %s313 = smul.u32 16, %s18
        %p314 = scmp.eq.s32.totalorder %s19, 0
        // Predicated region
        $region71: #{classifier_forward.6} parent=65 // pred_check
          %p315 = pneg %p314
        $region72: #{classifier_forward.6} parent=65 // pred_check_branch
          %317 = sbr.rel (%p315) target = $region74
        $region73: #{classifier_forward.6} parent=65 // pred_region
          %318 = vst [vmem:[#allocation2] sm:$0xff] 0.0
          %319 = vst [vmem:[#allocation2 + $0x8] sm:$0xff] 0.0
          %320 = vst [vmem:[#allocation2 + $0x10] sm:$0xff] 0.0
          %321 = vst [vmem:[#allocation2 + $0x18] sm:$0xff] 0.0
          %322 = vst [vmem:[#allocation2 + $0x20] sm:$0xff] 0.0
          %323 = vst [vmem:[#allocation2 + $0x28] sm:$0xff] 0.0
          %324 = vst [vmem:[#allocation2 + $0x30] sm:$0xff] 0.0
          %325 = vst [vmem:[#allocation2 + $0x38] sm:$0xff] 0.0
          %326 = vst [vmem:[#allocation2 + $0x40] sm:$0xff] 0.0
          %327 = vst [vmem:[#allocation2 + $0x48] sm:$0xff] 0.0
          %328 = vst [vmem:[#allocation2 + $0x50] sm:$0xff] 0.0
          %329 = vst [vmem:[#allocation2 + $0x58] sm:$0xff] 0.0
          %330 = vst [vmem:[#allocation2 + $0x60] sm:$0xff] 0.0
          %331 = vst [vmem:[#allocation2 + $0x68] sm:$0xff] 0.0
          %332 = vst [vmem:[#allocation2 + $0x70] sm:$0xff] 0.0
          %333 = vst [vmem:[#allocation2 + $0x78] sm:$0xff] 0.0
          %334 = vst [vmem:[#allocation2 + $0x80] sm:$0xff] 0.0
          %335 = vst [vmem:[#allocation2 + $0x88] sm:$0xff] 0.0
          %336 = vst [vmem:[#allocation2 + $0x90] sm:$0xff] 0.0
          %337 = vst [vmem:[#allocation2 + $0x98] sm:$0xff] 0.0
          %338 = vst [vmem:[#allocation2 + $0xa0] sm:$0xff] 0.0
          %339 = vst [vmem:[#allocation2 + $0xa8] sm:$0xff] 0.0
          %340 = vst [vmem:[#allocation2 + $0xb0] sm:$0xff] 0.0
          %341 = vst [vmem:[#allocation2 + $0xb8] sm:$0xff] 0.0
          %342 = vst [vmem:[#allocation2 + $0xc0] sm:$0xff] 0.0
          %343 = vst [vmem:[#allocation2 + $0xc8] sm:$0xff] 0.0
          %344 = vst [vmem:[#allocation2 + $0xd0] sm:$0xff] 0.0
          %345 = vst [vmem:[#allocation2 + $0xd8] sm:$0xff] 0.0
          %346 = vst [vmem:[#allocation2 + $0xe0] sm:$0xff] 0.0
          %347 = vst [vmem:[#allocation2 + $0xe8] sm:$0xff] 0.0
          %348 = vst [vmem:[#allocation2 + $0xf0] sm:$0xff] 0.0
          %349 = vst [vmem:[#allocation2 + $0xf8] sm:$0xff] 0.0
        $region74: #{classifier_forward.6} parent=65 // pred_fallthru
          _
        %v350 = vld [vmem:[#allocation2] sm:$0xff]
        %v351 = vld [vmem:[#allocation2 + $0x8] sm:$0xff]
        %v352 = vld [vmem:[#allocation2 + $0x10] sm:$0xff]
        %v353 = vld [vmem:[#allocation2 + $0x18] sm:$0xff]
        %v354 = vld [vmem:[#allocation2 + $0x20] sm:$0xff]
        %v355 = vld [vmem:[#allocation2 + $0x28] sm:$0xff]
        %v356 = vld [vmem:[#allocation2 + $0x30] sm:$0xff]
        %v357 = vld [vmem:[#allocation2 + $0x38] sm:$0xff]
        %v358 = vld [vmem:[#allocation2 + $0x40] sm:$0xff]
        %v359 = vld [vmem:[#allocation2 + $0x48] sm:$0xff]
        %v360 = vld [vmem:[#allocation2 + $0x50] sm:$0xff]
        %v361 = vld [vmem:[#allocation2 + $0x58] sm:$0xff]
        %v362 = vld [vmem:[#allocation2 + $0x60] sm:$0xff]
        %v363 = vld [vmem:[#allocation2 + $0x68] sm:$0xff]
        %v364 = vld [vmem:[#allocation2 + $0x70] sm:$0xff]
        %v365 = vld [vmem:[#allocation2 + $0x78] sm:$0xff]
        %v366 = vld [vmem:[#allocation2 + $0x80] sm:$0xff]
        %v367 = vld [vmem:[#allocation2 + $0x88] sm:$0xff]
        %v368 = vld [vmem:[#allocation2 + $0x90] sm:$0xff]
        %v369 = vld [vmem:[#allocation2 + $0x98] sm:$0xff]
        %v370 = vld [vmem:[#allocation2 + $0xa0] sm:$0xff]
        %v371 = vld [vmem:[#allocation2 + $0xa8] sm:$0xff]
        %v372 = vld [vmem:[#allocation2 + $0xb0] sm:$0xff]
        %v373 = vld [vmem:[#allocation2 + $0xb8] sm:$0xff]
        %v374 = vld [vmem:[#allocation2 + $0xc0] sm:$0xff]
        %v375 = vld [vmem:[#allocation2 + $0xc8] sm:$0xff]
        %v376 = vld [vmem:[#allocation2 + $0xd0] sm:$0xff]
        %v377 = vld [vmem:[#allocation2 + $0xd8] sm:$0xff]
        %v378 = vld [vmem:[#allocation2 + $0xe0] sm:$0xff]
        %v379 = vld [vmem:[#allocation2 + $0xe8] sm:$0xff]
        %v380 = vld [vmem:[#allocation2 + $0xf0] sm:$0xff]
        %v381 = vld [vmem:[#allocation2 + $0xf8] sm:$0xff]
        %v382 = vld [vmem:[%s270] sm:$0xff]
        %v383 = vld [vmem:[%s270 + $0x8] sm:$0xff]
        %v384 = vld [vmem:[%s270 + $0x10] sm:$0xff]
        %v385 = vld [vmem:[%s270 + $0x18] sm:$0xff]
        %v386 = vld [vmem:[%s270 + $0x20] sm:$0xff]
        %v387 = vld [vmem:[%s270 + $0x28] sm:$0xff]
        %v388 = vld [vmem:[%s270 + $0x30] sm:$0xff]
        %v389 = vld [vmem:[%s270 + $0x38] sm:$0xff]
        %v390 = vld [vmem:[%s270 + $0x40] sm:$0xff]
        %v391 = vld [vmem:[%s270 + $0x48] sm:$0xff]
        %v392 = vld [vmem:[%s270 + $0x50] sm:$0xff]
        %v393 = vld [vmem:[%s270 + $0x58] sm:$0xff]
        %v394 = vld [vmem:[%s270 + $0x60] sm:$0xff]
        %v395 = vld [vmem:[%s270 + $0x68] sm:$0xff]
        %v396 = vld [vmem:[%s270 + $0x70] sm:$0xff]
        %v397 = vld [vmem:[%s270 + $0x78] sm:$0xff]
        %v398 = vld [vmem:[%s305] sm:$0xff]
        %v399 = vld [vmem:[%s305 + $0x8] sm:$0xff]
        %v400 = vld [vmem:[%s305 + $0x10] sm:$0xff]
        %v401 = vld [vmem:[%s305 + $0x18] sm:$0xff]
        %v402 = vld [vmem:[%s305 + $0x20] sm:$0xff]
        %v403 = vld [vmem:[%s305 + $0x28] sm:$0xff]
        %v404 = vld [vmem:[%s305 + $0x30] sm:$0xff]
        %v405 = vld [vmem:[%s305 + $0x38] sm:$0xff]
        %v406 = vld [vmem:[%s305 + $0x40] sm:$0xff]
        %v407 = vld [vmem:[%s305 + $0x48] sm:$0xff]
        %v408 = vld [vmem:[%s305 + $0x50] sm:$0xff]
        %v409 = vld [vmem:[%s305 + $0x58] sm:$0xff]
        %v410 = vld [vmem:[%s305 + $0x60] sm:$0xff]
        %v411 = vld [vmem:[%s305 + $0x68] sm:$0xff]
        %v412 = vld [vmem:[%s305 + $0x70] sm:$0xff]
        %v413 = vld [vmem:[%s305 + $0x78] sm:$0xff]
        %v414 = vld [vmem:[%s305 + $0x80] sm:$0xff]
        %v415 = vld [vmem:[%s305 + $0x88] sm:$0xff]
        %v416 = vld [vmem:[%s305 + $0x90] sm:$0xff]
        %v417 = vld [vmem:[%s305 + $0x98] sm:$0xff]
        %v418 = vld [vmem:[%s305 + $0xa0] sm:$0xff]
        %v419 = vld [vmem:[%s305 + $0xa8] sm:$0xff]
        %v420 = vld [vmem:[%s305 + $0xb0] sm:$0xff]
        %v421 = vld [vmem:[%s305 + $0xb8] sm:$0xff]
        %v422 = vld [vmem:[%s305 + $0xc0] sm:$0xff]
        %v423 = vld [vmem:[%s305 + $0xc8] sm:$0xff]
        %v424 = vld [vmem:[%s305 + $0xd0] sm:$0xff]
        %v425 = vld [vmem:[%s305 + $0xd8] sm:$0xff]
        %v426 = vld [vmem:[%s305 + $0xe0] sm:$0xff]
        %v427 = vld [vmem:[%s305 + $0xe8] sm:$0xff]
        %v428 = vld [vmem:[%s305 + $0xf0] sm:$0xff]
        %v429 = vld [vmem:[%s305 + $0xf8] sm:$0xff]
        %v446 = vunpack.c.l.b16 %v382
        %v447 = vunpack.c.h.b16 %v382
        %v448 = vunpack.c.l.b16 %v383
        %v449 = vunpack.c.h.b16 %v383
        %v450 = vunpack.c.l.b16 %v384
        %v451 = vunpack.c.h.b16 %v384
        %v452 = vunpack.c.l.b16 %v385
        %v453 = vunpack.c.h.b16 %v385
        %v454 = vunpack.c.l.b16 %v386
        %v455 = vunpack.c.h.b16 %v386
        %v456 = vunpack.c.l.b16 %v387
        %v457 = vunpack.c.h.b16 %v387
        %v458 = vunpack.c.l.b16 %v388
        %v459 = vunpack.c.h.b16 %v388
        %v460 = vunpack.c.l.b16 %v389
        %v461 = vunpack.c.h.b16 %v389
        %v462 = vunpack.c.l.b16 %v390
        %v463 = vunpack.c.h.b16 %v390
        %v464 = vunpack.c.l.b16 %v391
        %v465 = vunpack.c.h.b16 %v391
        %v466 = vunpack.c.l.b16 %v392
        %v467 = vunpack.c.h.b16 %v392
        %v468 = vunpack.c.l.b16 %v393
        %v469 = vunpack.c.h.b16 %v393
        %v470 = vunpack.c.l.b16 %v394
        %v471 = vunpack.c.h.b16 %v394
        %v472 = vunpack.c.l.b16 %v395
        %v473 = vunpack.c.h.b16 %v395
        %v474 = vunpack.c.l.b16 %v396
        %v475 = vunpack.c.h.b16 %v396
        %v476 = vunpack.c.l.b16 %v397
        %v477 = vunpack.c.h.b16 %v397
        %v478 = vpack.c.b16 %v448, %v446
        %v479 = vpack.c.b16 %v449, %v447
        %v480 = vpack.c.b16 %v452, %v450
        %v481 = vpack.c.b16 %v453, %v451
        %v482 = vpack.c.b16 %v456, %v454
        %v483 = vpack.c.b16 %v457, %v455
        %v484 = vpack.c.b16 %v460, %v458
        %v485 = vpack.c.b16 %v461, %v459
        %v486 = vpack.c.b16 %v464, %v462
        %v487 = vpack.c.b16 %v465, %v463
        %v488 = vpack.c.b16 %v468, %v466
        %v489 = vpack.c.b16 %v469, %v467
        %v490 = vpack.c.b16 %v472, %v470
        %v491 = vpack.c.b16 %v473, %v471
        %v492 = vpack.c.b16 %v476, %v474
        %v493 = vpack.c.b16 %v477, %v475
        %v542 = vunpack.c.l.b16 %v398
        %v543 = vunpack.c.h.b16 %v398
        %v544 = vunpack.c.l.b16 %v399
        %v545 = vunpack.c.h.b16 %v399
        %v546 = vunpack.c.l.b16 %v400
        %v547 = vunpack.c.h.b16 %v400
        %v548 = vunpack.c.l.b16 %v401
        %v549 = vunpack.c.h.b16 %v401
        %v550 = vunpack.c.l.b16 %v402
        %v551 = vunpack.c.h.b16 %v402
        %v552 = vunpack.c.l.b16 %v403
        %v553 = vunpack.c.h.b16 %v403
        %v554 = vunpack.c.l.b16 %v404
        %v555 = vunpack.c.h.b16 %v404
        %v556 = vunpack.c.l.b16 %v405
        %v557 = vunpack.c.h.b16 %v405
        %v558 = vunpack.c.l.b16 %v406
        %v559 = vunpack.c.h.b16 %v406
        %v560 = vunpack.c.l.b16 %v407
        %v561 = vunpack.c.h.b16 %v407
        %v562 = vunpack.c.l.b16 %v408
        %v563 = vunpack.c.h.b16 %v408
        %v564 = vunpack.c.l.b16 %v409
        %v565 = vunpack.c.h.b16 %v409
        %v566 = vunpack.c.l.b16 %v410
        %v567 = vunpack.c.h.b16 %v410
        %v568 = vunpack.c.l.b16 %v411
        %v569 = vunpack.c.h.b16 %v411
        %v570 = vunpack.c.l.b16 %v412
        %v571 = vunpack.c.h.b16 %v412
        %v572 = vunpack.c.l.b16 %v413
        %v573 = vunpack.c.h.b16 %v413
        %v574 = vunpack.c.l.b16 %v414
        %v575 = vunpack.c.h.b16 %v414
        %v576 = vunpack.c.l.b16 %v415
        %v577 = vunpack.c.h.b16 %v415
        %v578 = vunpack.c.l.b16 %v416
        %v579 = vunpack.c.h.b16 %v416
        %v580 = vunpack.c.l.b16 %v417
        %v581 = vunpack.c.h.b16 %v417
        %v582 = vunpack.c.l.b16 %v418
        %v583 = vunpack.c.h.b16 %v418
        %v584 = vunpack.c.l.b16 %v419
        %v585 = vunpack.c.h.b16 %v419
        %v586 = vunpack.c.l.b16 %v420
        %v587 = vunpack.c.h.b16 %v420
        %v588 = vunpack.c.l.b16 %v421
        %v589 = vunpack.c.h.b16 %v421
        %v590 = vunpack.c.l.b16 %v422
        %v591 = vunpack.c.h.b16 %v422
        %v592 = vunpack.c.l.b16 %v423
        %v593 = vunpack.c.h.b16 %v423
        %v594 = vunpack.c.l.b16 %v424
        %v595 = vunpack.c.h.b16 %v424
        %v596 = vunpack.c.l.b16 %v425
        %v597 = vunpack.c.h.b16 %v425
        %v598 = vunpack.c.l.b16 %v426
        %v599 = vunpack.c.h.b16 %v426
        %v600 = vunpack.c.l.b16 %v427
        %v601 = vunpack.c.h.b16 %v427
        %v602 = vunpack.c.l.b16 %v428
        %v603 = vunpack.c.h.b16 %v428
        %v604 = vunpack.c.l.b16 %v429
        %v605 = vunpack.c.h.b16 %v429
        %v606 = vpack.c.b16 %v544, %v542
        %v607 = vpack.c.b16 %v545, %v543
        %v608 = vpack.c.b16 %v548, %v546
        %v609 = vpack.c.b16 %v549, %v547
        %v610 = vpack.c.b16 %v552, %v550
        %v611 = vpack.c.b16 %v553, %v551
        %v612 = vpack.c.b16 %v556, %v554
        %v613 = vpack.c.b16 %v557, %v555
        %v614 = vpack.c.b16 %v560, %v558
        %v615 = vpack.c.b16 %v561, %v559
        %v616 = vpack.c.b16 %v564, %v562
        %v617 = vpack.c.b16 %v565, %v563
        %v618 = vpack.c.b16 %v568, %v566
        %v619 = vpack.c.b16 %v569, %v567
        %v620 = vpack.c.b16 %v572, %v570
        %v621 = vpack.c.b16 %v573, %v571
        %v622 = vpack.c.b16 %v576, %v574
        %v623 = vpack.c.b16 %v577, %v575
        %v624 = vpack.c.b16 %v580, %v578
        %v625 = vpack.c.b16 %v581, %v579
        %v626 = vpack.c.b16 %v584, %v582
        %v627 = vpack.c.b16 %v585, %v583
        %v628 = vpack.c.b16 %v588, %v586
        %v629 = vpack.c.b16 %v589, %v587
        %v630 = vpack.c.b16 %v592, %v590
        %v631 = vpack.c.b16 %v593, %v591
        %v632 = vpack.c.b16 %v596, %v594
        %v633 = vpack.c.b16 %v597, %v595
        %v634 = vpack.c.b16 %v600, %v598
        %v635 = vpack.c.b16 %v601, %v599
        %v636 = vpack.c.b16 %v604, %v602
        %v637 = vpack.c.b16 %v605, %v603
        %670 = vmatpush.bf16.msra.mxu0 %v620
        %671 = vmatpush.bf16.msra.mxu0 %v618
        %672 = vmatpush.bf16.msra.mxu0 %v616
        %673 = vmatpush.bf16.msra.mxu0 %v614
        %674 = vmatpush.bf16.msra.mxu0 %v612
        %675 = vmatpush.bf16.msra.mxu0 %v610
        %676 = vmatpush.bf16.msra.mxu0 %v608
        %677 = vmatpush.bf16.msra.mxu0 %v606
        %678 = vmatmul.bf16.gmra.mxu0 %v478
        %v679 = vpop.f32.mrf.mxu0
        %v680 = vadd.f32 0.0, %v679
        %v681 = vpop.f32.mrf.mxu0
        %v682 = vadd.f32 0.0, %v681
        %683 = vmatmul.bf16.gmra.mxu0 %v480
        %v684 = vpop.f32.mrf.mxu0
        %v685 = vadd.f32 0.0, %v684
        %v686 = vpop.f32.mrf.mxu0
        %v687 = vadd.f32 0.0, %v686
        %688 = vmatmul.bf16.gmra.mxu0 %v482
        %v689 = vpop.f32.mrf.mxu0
        %v690 = vadd.f32 0.0, %v689
        %v691 = vpop.f32.mrf.mxu0
        %v692 = vadd.f32 0.0, %v691
        %693 = vmatmul.bf16.gmra.mxu0 %v484
        %v694 = vpop.f32.mrf.mxu0
        %v695 = vadd.f32 0.0, %v694
        %v696 = vpop.f32.mrf.mxu0
        %v697 = vadd.f32 0.0, %v696
        %698 = vmatmul.bf16.gmra.mxu0 %v486
        %v699 = vpop.f32.mrf.mxu0
        %v700 = vadd.f32 0.0, %v699
        %v701 = vpop.f32.mrf.mxu0
        %v702 = vadd.f32 0.0, %v701
        %703 = vmatmul.bf16.gmra.mxu0 %v488
        %v704 = vpop.f32.mrf.mxu0
        %v705 = vadd.f32 0.0, %v704
        %v706 = vpop.f32.mrf.mxu0
        %v707 = vadd.f32 0.0, %v706
        %708 = vmatmul.bf16.gmra.mxu0 %v490
        %v709 = vpop.f32.mrf.mxu0
        %v710 = vadd.f32 0.0, %v709
        %v711 = vpop.f32.mrf.mxu0
        %v712 = vadd.f32 0.0, %v711
        %713 = vmatmul.bf16.gmra.mxu0 %v492
        %v714 = vpop.f32.mrf.mxu0
        %v715 = vadd.f32 0.0, %v714
        %v716 = vpop.f32.mrf.mxu0
        %v717 = vadd.f32 0.0, %v716
        %718 = vdwg.mxu0
        %719 = vmatpush.bf16.msra.mxu0 %v636
        %720 = vmatpush.bf16.msra.mxu0 %v634
        %721 = vmatpush.bf16.msra.mxu0 %v632
        %722 = vmatpush.bf16.msra.mxu0 %v630
        %723 = vmatpush.bf16.msra.mxu0 %v628
        %724 = vmatpush.bf16.msra.mxu0 %v626
        %725 = vmatpush.bf16.msra.mxu0 %v624
        %726 = vmatpush.bf16.msra.mxu0 %v622
        %727 = vmatmul.bf16.gmra.mxu0 %v479
        %v728 = vpop.f32.mrf.mxu0
        %v729 = vadd.f32 %v680, %v728
        %v730 = vpop.f32.mrf.mxu0
        %v731 = vadd.f32 %v682, %v730
        %732 = vmatmul.bf16.gmra.mxu0 %v481
        %v733 = vpop.f32.mrf.mxu0
        %v734 = vadd.f32 %v685, %v733
        %v735 = vpop.f32.mrf.mxu0
        %v736 = vadd.f32 %v687, %v735
        %737 = vmatmul.bf16.gmra.mxu0 %v483
        %v738 = vpop.f32.mrf.mxu0
        %v739 = vadd.f32 %v690, %v738
        %v740 = vpop.f32.mrf.mxu0
        %v741 = vadd.f32 %v692, %v740
        %742 = vmatmul.bf16.gmra.mxu0 %v485
        %v743 = vpop.f32.mrf.mxu0
        %v744 = vadd.f32 %v695, %v743
        %v745 = vpop.f32.mrf.mxu0
        %v746 = vadd.f32 %v697, %v745
        %747 = vmatmul.bf16.gmra.mxu0 %v487
        %v748 = vpop.f32.mrf.mxu0
        %v749 = vadd.f32 %v700, %v748
        %v750 = vpop.f32.mrf.mxu0
        %v751 = vadd.f32 %v702, %v750
        %752 = vmatmul.bf16.gmra.mxu0 %v489
        %v753 = vpop.f32.mrf.mxu0
        %v754 = vadd.f32 %v705, %v753
        %v755 = vpop.f32.mrf.mxu0
        %v756 = vadd.f32 %v707, %v755
        %757 = vmatmul.bf16.gmra.mxu0 %v491
        %v758 = vpop.f32.mrf.mxu0
        %v759 = vadd.f32 %v710, %v758
        %v760 = vpop.f32.mrf.mxu0
        %v761 = vadd.f32 %v712, %v760
        %762 = vmatmul.bf16.gmra.mxu0 %v493
        %v763 = vpop.f32.mrf.mxu0
        %v764 = vadd.f32 %v715, %v763
        %v765 = vpop.f32.mrf.mxu0
        %v766 = vadd.f32 %v717, %v765
        %767 = vdwg.mxu0
        %768 = vmatpush.bf16.msra.mxu0 %v621
        %769 = vmatpush.bf16.msra.mxu0 %v619
        %770 = vmatpush.bf16.msra.mxu0 %v617
        %771 = vmatpush.bf16.msra.mxu0 %v615
        %772 = vmatpush.bf16.msra.mxu0 %v613
        %773 = vmatpush.bf16.msra.mxu0 %v611
        %774 = vmatpush.bf16.msra.mxu0 %v609
        %775 = vmatpush.bf16.msra.mxu0 %v607
        %776 = vmatmul.bf16.gmra.mxu0 %v478
        %v777 = vpop.f32.mrf.mxu0
        %v778 = vadd.f32 0.0, %v777
        %v779 = vpop.f32.mrf.mxu0
        %v780 = vadd.f32 0.0, %v779
        %781 = vmatmul.bf16.gmra.mxu0 %v480
        %v782 = vpop.f32.mrf.mxu0
        %v783 = vadd.f32 0.0, %v782
        %v784 = vpop.f32.mrf.mxu0
        %v785 = vadd.f32 0.0, %v784
        %786 = vmatmul.bf16.gmra.mxu0 %v482
        %v787 = vpop.f32.mrf.mxu0
        %v788 = vadd.f32 0.0, %v787
        %v789 = vpop.f32.mrf.mxu0
        %v790 = vadd.f32 0.0, %v789
        %791 = vmatmul.bf16.gmra.mxu0 %v484
        %v792 = vpop.f32.mrf.mxu0
        %v793 = vadd.f32 0.0, %v792
        %v794 = vpop.f32.mrf.mxu0
        %v795 = vadd.f32 0.0, %v794
        %796 = vmatmul.bf16.gmra.mxu0 %v486
        %v797 = vpop.f32.mrf.mxu0
        %v798 = vadd.f32 0.0, %v797
        %v799 = vpop.f32.mrf.mxu0
        %v800 = vadd.f32 0.0, %v799
        %801 = vmatmul.bf16.gmra.mxu0 %v488
        %v802 = vpop.f32.mrf.mxu0
        %v803 = vadd.f32 0.0, %v802
        %v804 = vpop.f32.mrf.mxu0
        %v805 = vadd.f32 0.0, %v804
        %806 = vmatmul.bf16.gmra.mxu0 %v490
        %v807 = vpop.f32.mrf.mxu0
        %v808 = vadd.f32 0.0, %v807
        %v809 = vpop.f32.mrf.mxu0
        %v810 = vadd.f32 0.0, %v809
        %811 = vmatmul.bf16.gmra.mxu0 %v492
        %v812 = vpop.f32.mrf.mxu0
        %v813 = vadd.f32 0.0, %v812
        %v814 = vpop.f32.mrf.mxu0
        %v815 = vadd.f32 0.0, %v814
        %816 = vdwg.mxu0
        %817 = vmatpush.bf16.msra.mxu0 %v637
        %818 = vmatpush.bf16.msra.mxu0 %v635
        %819 = vmatpush.bf16.msra.mxu0 %v633
        %820 = vmatpush.bf16.msra.mxu0 %v631
        %821 = vmatpush.bf16.msra.mxu0 %v629
        %822 = vmatpush.bf16.msra.mxu0 %v627
        %823 = vmatpush.bf16.msra.mxu0 %v625
        %824 = vmatpush.bf16.msra.mxu0 %v623
        %825 = vmatmul.bf16.gmra.mxu0 %v479
        %v826 = vpop.f32.mrf.mxu0
        %v827 = vadd.f32 %v778, %v826
        %v828 = vpop.f32.mrf.mxu0
        %v829 = vadd.f32 %v780, %v828
        %830 = vmatmul.bf16.gmra.mxu0 %v481
        %v831 = vpop.f32.mrf.mxu0
        %v832 = vadd.f32 %v783, %v831
        %v833 = vpop.f32.mrf.mxu0
        %v834 = vadd.f32 %v785, %v833
        %835 = vmatmul.bf16.gmra.mxu0 %v483
        %v836 = vpop.f32.mrf.mxu0
        %v837 = vadd.f32 %v788, %v836
        %v838 = vpop.f32.mrf.mxu0
        %v839 = vadd.f32 %v790, %v838
        %840 = vmatmul.bf16.gmra.mxu0 %v485
        %v841 = vpop.f32.mrf.mxu0
        %v842 = vadd.f32 %v793, %v841
        %v843 = vpop.f32.mrf.mxu0
        %v844 = vadd.f32 %v795, %v843
        %845 = vmatmul.bf16.gmra.mxu0 %v487
        %v846 = vpop.f32.mrf.mxu0
        %v847 = vadd.f32 %v798, %v846
        %v848 = vpop.f32.mrf.mxu0
        %v849 = vadd.f32 %v800, %v848
        %850 = vmatmul.bf16.gmra.mxu0 %v489
        %v851 = vpop.f32.mrf.mxu0
        %v852 = vadd.f32 %v803, %v851
        %v853 = vpop.f32.mrf.mxu0
        %v854 = vadd.f32 %v805, %v853
        %855 = vmatmul.bf16.gmra.mxu0 %v491
        %v856 = vpop.f32.mrf.mxu0
        %v857 = vadd.f32 %v808, %v856
        %v858 = vpop.f32.mrf.mxu0
        %v859 = vadd.f32 %v810, %v858
        %860 = vmatmul.bf16.gmra.mxu0 %v493
        %v861 = vpop.f32.mrf.mxu0
        %v862 = vadd.f32 %v813, %v861
        %v863 = vpop.f32.mrf.mxu0
        %v864 = vadd.f32 %v815, %v863
        %865 = vdwg.mxu0
        %v866 = vadd.f32 %v350, %v729
        %v867 = vadd.f32 %v351, %v827
        %v868 = vadd.f32 %v352, %v731
        %v869 = vadd.f32 %v353, %v829
        %v870 = vadd.f32 %v354, %v734
        %v871 = vadd.f32 %v355, %v832
        %v872 = vadd.f32 %v356, %v736
        %v873 = vadd.f32 %v357, %v834
        %v874 = vadd.f32 %v358, %v739
        %v875 = vadd.f32 %v359, %v837
        %v876 = vadd.f32 %v360, %v741
        %v877 = vadd.f32 %v361, %v839
        %v878 = vadd.f32 %v362, %v744
        %v879 = vadd.f32 %v363, %v842
        %v880 = vadd.f32 %v364, %v746
        %v881 = vadd.f32 %v365, %v844
        %v882 = vadd.f32 %v366, %v749
        %v883 = vadd.f32 %v367, %v847
        %v884 = vadd.f32 %v368, %v751
        %v885 = vadd.f32 %v369, %v849
        %v886 = vadd.f32 %v370, %v754
        %v887 = vadd.f32 %v371, %v852
        %v888 = vadd.f32 %v372, %v756
        %v889 = vadd.f32 %v373, %v854
        %v890 = vadd.f32 %v374, %v759
        %v891 = vadd.f32 %v375, %v857
        %v892 = vadd.f32 %v376, %v761
        %v893 = vadd.f32 %v377, %v859
        %v894 = vadd.f32 %v378, %v764
        %v895 = vadd.f32 %v379, %v862
        %v896 = vadd.f32 %v380, %v766
        %v897 = vadd.f32 %v381, %v864
        %898 = vst [vmem:[#allocation2] sm:$0xff] %v866
        %899 = vst [vmem:[#allocation2 + $0x8] sm:$0xff] %v867
        %900 = vst [vmem:[#allocation2 + $0x10] sm:$0xff] %v868
        %901 = vst [vmem:[#allocation2 + $0x18] sm:$0xff] %v869
        %902 = vst [vmem:[#allocation2 + $0x20] sm:$0xff] %v870
        %903 = vst [vmem:[#allocation2 + $0x28] sm:$0xff] %v871
        %904 = vst [vmem:[#allocation2 + $0x30] sm:$0xff] %v872
        %905 = vst [vmem:[#allocation2 + $0x38] sm:$0xff] %v873
        %906 = vst [vmem:[#allocation2 + $0x40] sm:$0xff] %v874
        %907 = vst [vmem:[#allocation2 + $0x48] sm:$0xff] %v875
        %908 = vst [vmem:[#allocation2 + $0x50] sm:$0xff] %v876
        %909 = vst [vmem:[#allocation2 + $0x58] sm:$0xff] %v877
        %910 = vst [vmem:[#allocation2 + $0x60] sm:$0xff] %v878
        %911 = vst [vmem:[#allocation2 + $0x68] sm:$0xff] %v879
        %912 = vst [vmem:[#allocation2 + $0x70] sm:$0xff] %v880
        %913 = vst [vmem:[#allocation2 + $0x78] sm:$0xff] %v881
        %914 = vst [vmem:[#allocation2 + $0x80] sm:$0xff] %v882
        %915 = vst [vmem:[#allocation2 + $0x88] sm:$0xff] %v883
        %916 = vst [vmem:[#allocation2 + $0x90] sm:$0xff] %v884
        %917 = vst [vmem:[#allocation2 + $0x98] sm:$0xff] %v885
        %918 = vst [vmem:[#allocation2 + $0xa0] sm:$0xff] %v886
        %919 = vst [vmem:[#allocation2 + $0xa8] sm:$0xff] %v887
        %920 = vst [vmem:[#allocation2 + $0xb0] sm:$0xff] %v888
        %921 = vst [vmem:[#allocation2 + $0xb8] sm:$0xff] %v889
        %922 = vst [vmem:[#allocation2 + $0xc0] sm:$0xff] %v890
        %923 = vst [vmem:[#allocation2 + $0xc8] sm:$0xff] %v891
        %924 = vst [vmem:[#allocation2 + $0xd0] sm:$0xff] %v892
        %925 = vst [vmem:[#allocation2 + $0xd8] sm:$0xff] %v893
        %926 = vst [vmem:[#allocation2 + $0xe0] sm:$0xff] %v894
        %927 = vst [vmem:[#allocation2 + $0xe8] sm:$0xff] %v895
        %928 = vst [vmem:[#allocation2 + $0xf0] sm:$0xff] %v896
        %929 = vst [vmem:[#allocation2 + $0xf8] sm:$0xff] %v897
        %p930 = scmp.eq.s32.totalorder %s19, 8
        // Predicated region
        $region75: #{classifier_forward.6} parent=65 // pred_check
          %p931 = pneg %p930
        $region76: #{classifier_forward.6} parent=65 // pred_check_branch
          %933 = sbr.rel (%p931) target = $region78
        $region77: #{classifier_forward.6} parent=65 // pred_region
          %v934 = vld [vmem:[#allocation2] sm:$0xff]
          %v935 = vld [vmem:[#allocation2 + $0x8] sm:$0xff]
          %v936 = vld [vmem:[#allocation2 + $0x10] sm:$0xff]
          %v937 = vld [vmem:[#allocation2 + $0x18] sm:$0xff]
          %v938 = vld [vmem:[#allocation2 + $0x20] sm:$0xff]
          %v939 = vld [vmem:[#allocation2 + $0x28] sm:$0xff]
          %v940 = vld [vmem:[#allocation2 + $0x30] sm:$0xff]
          %v941 = vld [vmem:[#allocation2 + $0x38] sm:$0xff]
          %v942 = vld [vmem:[#allocation2 + $0x40] sm:$0xff]
          %v943 = vld [vmem:[#allocation2 + $0x48] sm:$0xff]
          %v944 = vld [vmem:[#allocation2 + $0x50] sm:$0xff]
          %v945 = vld [vmem:[#allocation2 + $0x58] sm:$0xff]
          %v946 = vld [vmem:[#allocation2 + $0x60] sm:$0xff]
          %v947 = vld [vmem:[#allocation2 + $0x68] sm:$0xff]
          %v948 = vld [vmem:[#allocation2 + $0x70] sm:$0xff]
          %v949 = vld [vmem:[#allocation2 + $0x78] sm:$0xff]
          %v950 = vld [vmem:[#allocation2 + $0x80] sm:$0xff]
          %v951 = vld [vmem:[#allocation2 + $0x88] sm:$0xff]
          %v952 = vld [vmem:[#allocation2 + $0x90] sm:$0xff]
          %v953 = vld [vmem:[#allocation2 + $0x98] sm:$0xff]
          %v954 = vld [vmem:[#allocation2 + $0xa0] sm:$0xff]
          %v955 = vld [vmem:[#allocation2 + $0xa8] sm:$0xff]
          %v956 = vld [vmem:[#allocation2 + $0xb0] sm:$0xff]
          %v957 = vld [vmem:[#allocation2 + $0xb8] sm:$0xff]
          %v958 = vld [vmem:[#allocation2 + $0xc0] sm:$0xff]
          %v959 = vld [vmem:[#allocation2 + $0xc8] sm:$0xff]
          %v960 = vld [vmem:[#allocation2 + $0xd0] sm:$0xff]
          %v961 = vld [vmem:[#allocation2 + $0xd8] sm:$0xff]
          %v962 = vld [vmem:[#allocation2 + $0xe0] sm:$0xff]
          %v963 = vld [vmem:[#allocation2 + $0xe8] sm:$0xff]
          %v964 = vld [vmem:[#allocation2 + $0xf0] sm:$0xff]
          %v965 = vld [vmem:[#allocation2 + $0xf8] sm:$0xff]
          %v966 = vld [vmem:[%s2] sm:$0x3]
          %v968 = vperm.slane %v966, 0
          %v969 = vperm.slane %v966, 1
          %v972 = vadd.f32 %v934, %v968
          %v973 = vadd.f32 %v935, %v969
          %v974 = vadd.f32 %v936, %v968
          %v975 = vadd.f32 %v937, %v969
          %v976 = vadd.f32 %v938, %v968
          %v977 = vadd.f32 %v939, %v969
          %v978 = vadd.f32 %v940, %v968
          %v979 = vadd.f32 %v941, %v969
          %v980 = vadd.f32 %v942, %v968
          %v981 = vadd.f32 %v943, %v969
          %v982 = vadd.f32 %v944, %v968
          %v983 = vadd.f32 %v945, %v969
          %v984 = vadd.f32 %v946, %v968
          %v985 = vadd.f32 %v947, %v969
          %v986 = vadd.f32 %v948, %v968
          %v987 = vadd.f32 %v949, %v969
          %v988 = vadd.f32 %v950, %v968
          %v989 = vadd.f32 %v951, %v969
          %v990 = vadd.f32 %v952, %v968
          %v991 = vadd.f32 %v953, %v969
          %v992 = vadd.f32 %v954, %v968
          %v993 = vadd.f32 %v955, %v969
          %v994 = vadd.f32 %v956, %v968
          %v995 = vadd.f32 %v957, %v969
          %v996 = vadd.f32 %v958, %v968
          %v997 = vadd.f32 %v959, %v969
          %v998 = vadd.f32 %v960, %v968
          %v999 = vadd.f32 %v961, %v969
          %v1000 = vadd.f32 %v962, %v968
          %v1001 = vadd.f32 %v963, %v969
          %v1002 = vadd.f32 %v964, %v968
          %v1003 = vadd.f32 %v965, %v969
          %vm1004 = vcmp.ge.f32.partialorder %v972, 0.0
          %vm1005 = vcmp.ge.f32.partialorder %v973, 0.0
          %vm1006 = vcmp.ge.f32.partialorder %v974, 0.0
          %vm1007 = vcmp.ge.f32.partialorder %v975, 0.0
          %vm1008 = vcmp.ge.f32.partialorder %v976, 0.0
          %vm1009 = vcmp.ge.f32.partialorder %v977, 0.0
          %vm1010 = vcmp.ge.f32.partialorder %v978, 0.0
          %vm1011 = vcmp.ge.f32.partialorder %v979, 0.0
          %vm1012 = vcmp.ge.f32.partialorder %v980, 0.0
          %vm1013 = vcmp.ge.f32.partialorder %v981, 0.0
          %vm1014 = vcmp.ge.f32.partialorder %v982, 0.0
          %vm1015 = vcmp.ge.f32.partialorder %v983, 0.0
          %vm1016 = vcmp.ge.f32.partialorder %v984, 0.0
          %vm1017 = vcmp.ge.f32.partialorder %v985, 0.0
          %vm1018 = vcmp.ge.f32.partialorder %v986, 0.0
          %vm1019 = vcmp.ge.f32.partialorder %v987, 0.0
          %vm1020 = vcmp.ge.f32.partialorder %v988, 0.0
          %vm1021 = vcmp.ge.f32.partialorder %v989, 0.0
          %vm1022 = vcmp.ge.f32.partialorder %v990, 0.0
          %vm1023 = vcmp.ge.f32.partialorder %v991, 0.0
          %vm1024 = vcmp.ge.f32.partialorder %v992, 0.0
          %vm1025 = vcmp.ge.f32.partialorder %v993, 0.0
          %vm1026 = vcmp.ge.f32.partialorder %v994, 0.0
          %vm1027 = vcmp.ge.f32.partialorder %v995, 0.0
          %vm1028 = vcmp.ge.f32.partialorder %v996, 0.0
          %vm1029 = vcmp.ge.f32.partialorder %v997, 0.0
          %vm1030 = vcmp.ge.f32.partialorder %v998, 0.0
          %vm1031 = vcmp.ge.f32.partialorder %v999, 0.0
          %vm1032 = vcmp.ge.f32.partialorder %v1000, 0.0
          %vm1033 = vcmp.ge.f32.partialorder %v1001, 0.0
          %vm1034 = vcmp.ge.f32.partialorder %v1002, 0.0
          %vm1035 = vcmp.ge.f32.partialorder %v1003, 0.0
          %v1036 = vmul.f32 %v972, 0.1
          %v1037 = vmul.f32 %v973, 0.1
          %v1038 = vmul.f32 %v974, 0.1
          %v1039 = vmul.f32 %v975, 0.1
          %v1040 = vmul.f32 %v976, 0.1
          %v1041 = vmul.f32 %v977, 0.1
          %v1042 = vmul.f32 %v978, 0.1
          %v1043 = vmul.f32 %v979, 0.1
          %v1044 = vmul.f32 %v980, 0.1
          %v1045 = vmul.f32 %v981, 0.1
          %v1046 = vmul.f32 %v982, 0.1
          %v1047 = vmul.f32 %v983, 0.1
          %v1048 = vmul.f32 %v984, 0.1
          %v1049 = vmul.f32 %v985, 0.1
          %v1050 = vmul.f32 %v986, 0.1
          %v1051 = vmul.f32 %v987, 0.1
          %v1052 = vmul.f32 %v988, 0.1
          %v1053 = vmul.f32 %v989, 0.1
          %v1054 = vmul.f32 %v990, 0.1
          %v1055 = vmul.f32 %v991, 0.1
          %v1056 = vmul.f32 %v992, 0.1
          %v1057 = vmul.f32 %v993, 0.1
          %v1058 = vmul.f32 %v994, 0.1
          %v1059 = vmul.f32 %v995, 0.1
          %v1060 = vmul.f32 %v996, 0.1
          %v1061 = vmul.f32 %v997, 0.1
          %v1062 = vmul.f32 %v998, 0.1
          %v1063 = vmul.f32 %v999, 0.1
          %v1064 = vmul.f32 %v1000, 0.1
          %v1065 = vmul.f32 %v1001, 0.1
          %v1066 = vmul.f32 %v1002, 0.1
          %v1067 = vmul.f32 %v1003, 0.1
          %v1068 = vsel %vm1004, %v972, %v1036
          %v1069 = vsel %vm1005, %v973, %v1037
          %v1070 = vsel %vm1006, %v974, %v1038
          %v1071 = vsel %vm1007, %v975, %v1039
          %v1072 = vsel %vm1008, %v976, %v1040
          %v1073 = vsel %vm1009, %v977, %v1041
          %v1074 = vsel %vm1010, %v978, %v1042
          %v1075 = vsel %vm1011, %v979, %v1043
          %v1076 = vsel %vm1012, %v980, %v1044
          %v1077 = vsel %vm1013, %v981, %v1045
          %v1078 = vsel %vm1014, %v982, %v1046
          %v1079 = vsel %vm1015, %v983, %v1047
          %v1080 = vsel %vm1016, %v984, %v1048
          %v1081 = vsel %vm1017, %v985, %v1049
          %v1082 = vsel %vm1018, %v986, %v1050
          %v1083 = vsel %vm1019, %v987, %v1051
          %v1084 = vsel %vm1020, %v988, %v1052
          %v1085 = vsel %vm1021, %v989, %v1053
          %v1086 = vsel %vm1022, %v990, %v1054
          %v1087 = vsel %vm1023, %v991, %v1055
          %v1088 = vsel %vm1024, %v992, %v1056
          %v1089 = vsel %vm1025, %v993, %v1057
          %v1090 = vsel %vm1026, %v994, %v1058
          %v1091 = vsel %vm1027, %v995, %v1059
          %v1092 = vsel %vm1028, %v996, %v1060
          %v1093 = vsel %vm1029, %v997, %v1061
          %v1094 = vsel %vm1030, %v998, %v1062
          %v1095 = vsel %vm1031, %v999, %v1063
          %v1096 = vsel %vm1032, %v1000, %v1064
          %v1097 = vsel %vm1033, %v1001, %v1065
          %v1098 = vsel %vm1034, %v1002, %v1066
          %v1099 = vsel %vm1035, %v1003, %v1067
          %1100 = vst [vmem:[%s312] sm:$0xff] %v1068
          %1101 = vst [vmem:[%s312 + $0x8] sm:$0xff] %v1069
          %1102 = vst [vmem:[%s312 + $0x10] sm:$0xff] %v1070
          %1103 = vst [vmem:[%s312 + $0x18] sm:$0xff] %v1071
          %1104 = vst [vmem:[%s312 + $0x20] sm:$0xff] %v1072
          %1105 = vst [vmem:[%s312 + $0x28] sm:$0xff] %v1073
          %1106 = vst [vmem:[%s312 + $0x30] sm:$0xff] %v1074
          %1107 = vst [vmem:[%s312 + $0x38] sm:$0xff] %v1075
          %1108 = vst [vmem:[%s312 + $0x40] sm:$0xff] %v1076
          %1109 = vst [vmem:[%s312 + $0x48] sm:$0xff] %v1077
          %1110 = vst [vmem:[%s312 + $0x50] sm:$0xff] %v1078
          %1111 = vst [vmem:[%s312 + $0x58] sm:$0xff] %v1079
          %1112 = vst [vmem:[%s312 + $0x60] sm:$0xff] %v1080
          %1113 = vst [vmem:[%s312 + $0x68] sm:$0xff] %v1081
          %1114 = vst [vmem:[%s312 + $0x70] sm:$0xff] %v1082
          %1115 = vst [vmem:[%s312 + $0x78] sm:$0xff] %v1083
          %1116 = vst [vmem:[%s312 + $0x80] sm:$0xff] %v1084
          %1117 = vst [vmem:[%s312 + $0x88] sm:$0xff] %v1085
          %1118 = vst [vmem:[%s312 + $0x90] sm:$0xff] %v1086
          %1119 = vst [vmem:[%s312 + $0x98] sm:$0xff] %v1087
          %1120 = vst [vmem:[%s312 + $0xa0] sm:$0xff] %v1088
          %1121 = vst [vmem:[%s312 + $0xa8] sm:$0xff] %v1089
          %1122 = vst [vmem:[%s312 + $0xb0] sm:$0xff] %v1090
          %1123 = vst [vmem:[%s312 + $0xb8] sm:$0xff] %v1091
          %1124 = vst [vmem:[%s312 + $0xc0] sm:$0xff] %v1092
          %1125 = vst [vmem:[%s312 + $0xc8] sm:$0xff] %v1093
          %1126 = vst [vmem:[%s312 + $0xd0] sm:$0xff] %v1094
          %1127 = vst [vmem:[%s312 + $0xd8] sm:$0xff] %v1095
          %1128 = vst [vmem:[%s312 + $0xe0] sm:$0xff] %v1096
          %1129 = vst [vmem:[%s312 + $0xe8] sm:$0xff] %v1097
          %1130 = vst [vmem:[%s312 + $0xf0] sm:$0xff] %v1098
          %1131 = vst [vmem:[%s312 + $0xf8] sm:$0xff] %v1099
        $region78: #{classifier_forward.6} parent=65 // pred_fallthru
          _
        %s1132 = smul.u32 16, %s18
        %p1133 = scmp.lt.s32.totalorder %s1132, 15
        %s1134 = scalar_select %p1133, %s1132, 15
        %s1135 = smul.addr %s1134, 2
        %s1136 = smul.addr %s1135, 8
        %s1137 = scalar_lea.vmem %s3, %s1136
        // Predicated region
        $region79: #{classifier_forward.6} parent=65 // pred_check
          %p1138 = pneg %p119
        $region80: #{classifier_forward.6} parent=65 // pred_check_branch
          %1140 = sbr.rel (%p1138) target = $region82
        $region81: #{classifier_forward.6} parent=65 // pred_region
          %s1141 = smul.u32 16, %s18
        $region82: #{classifier_forward.6} parent=65 // pred_fallthru
          _
        // Predicated region
        $region83: #{classifier_forward.6} parent=65 // pred_check
          %p1142 = pneg %p119
        $region84: #{classifier_forward.6} parent=65 // pred_check_branch
          %1144 = sbr.rel (%p1142) target = $region86
        $region85: #{classifier_forward.6} parent=65 // pred_region
          %s1145 = smul.u32 16, %s18
          %p1146 = scmp.lt.s32.totalorder %s1145, 15
          %s1147 = scalar_select %p1146, %s1145, 15
          %s1148 = smul.addr %s1147, 2
          %s1149 = smul.addr %s1148, 8
          %s1150 = scalar_lea.vmem %s3, %s1149
        $region86: #{classifier_forward.6} parent=65 // pred_fallthru
          _
      $region66: #{classifier_forward.6} parent=5 // pred_fallthru
        _
      %p1151 = scmp.le.s32.totalorder 2, %s9
      // Predicated region
      $region87: #{classifier_forward.6} parent=5 // pred_check
        %p1152 = pneg %p1151
      $region88: #{classifier_forward.6} parent=5 // pred_check_branch
        %1154 = sbr.rel (%p1152) target = $region90
      $region89: #{classifier_forward.6} parent=5 // pred_region
        %s1155 = ssub.s32 %s9, 2
      $region90: #{classifier_forward.6} parent=5 // pred_fallthru
        _
    $region6: #{classifier_forward.6} parent=1 // loop_footer
      %s13 = sadd.s32 1, %s9
    $region7: #{classifier_forward.6} parent=1 // loop_footer_branch
      %8 = sbr.rel target = $region3
    $region8: #{classifier_forward.6} parent=1 // loop_exit
      _

// kernel: classifier_forward.7
$region0: #{classifier_forward.7}
  #allocation0 [shape = 'u32[]', space=smem, size = 0x4, offset = 0x4, fixed_abs, tag = 'smem constant byte address 0x4 - core index']
  #allocation1 [shape = 'u32[72,128]{1,0:T(1,128)}', space=vmem, size = 0x9000, scoped, tag = 'internal scratch']
  #allocation2 [shape = 'f32[32,256]{1,0:T(8,128)}', space=vmem, size = 0x8000, scoped, tag = 'scratch operand']
  %s0 = inlined_call_operand.vmem [shape: bf16[32,2304], index: 0, kind: input, shape index: {}]
  %s1 = inlined_call_operand.vmem [shape: bf16[2304,256], index: 1, kind: input, shape index: {}]
  %s2 = inlined_call_operand.vmem [shape: f32[1,256], index: 2, kind: input, shape index: {}]
  %s3 = inlined_call_operand.vmem [shape: f32[32,256], index: 3, kind: output, shape index: {}]
  %s4 = sld [smem:[#allocation0]]
  $region91: #{classifier_forward.7} parent=0
    _
  %s6 = ssub.s32 1, %s4
  %s7 = scalar_select 0, %s6, %s4
  $region1: #{classifier_forward.7} parent=0
    #allocation3 [shape = 'u8[32768]{0}', space=vmem, size = 0x8000, scoped, tag = 'input window, operand 0']
    loop: start=0, step=1, limit=11
    $region2: #{classifier_forward.7} parent=1 // loop_pre_header
      _
    $region3: #{classifier_forward.7} parent=1 // loop_header
      %s9 = sphi 0, %s13
      %p10 = scmp.ge.s32.totalorder %s9, 11
      %s16 = sphi 0, %s28
      %s17 = sphi 0, %s24
      %s18 = sphi 0, %s16
      %s19 = sphi 0, %s17
      %s20 = sphi 0, %s18
      %s21 = sphi 0, %s19
      %s33 = sphi 0, %s35
      %s36 = sphi 0, %s33
      %s37 = sphi 0, %s36
      %s53 = sphi 0, %s37
      %s59 = sphi 0, %s61
      %s62 = sphi 0, %s59
      %s63 = sphi 0, %s62
      %s79 = sphi 0, %s63
      %s83 = sphi 0, %s83
      %s85 = sphi 0, %s83
      %s86 = sphi 0, %s85
      %s100 = sphi 0, %s86
      %s106 = sphi 0, %s108
      %s109 = sphi 0, %s106
      %s110 = sphi 0, %s109
      %s126 = sphi 0, %s110
    $region4: #{classifier_forward.7} parent=1 // loop_header_branch
      %12 = sbr.rel (%p10) target = $region8
    $region5: #{classifier_forward.7} parent=1 // loop_body
      %s14 = ssub.s32 %s9, 1
      %s15 = ssub.s32 %s9, 2
      %s22 = sadd.s32 1, %s17
      %p23 = scmp.ge.s32.totalorder %s22, 9
      %s24 = scalar_select %p23, 0, %s22
      %s25 = sadd.s32 1, %s16
      %s26 = scalar_select %p23, %s25, %s16
      %p27 = scmp.ge.s32.totalorder %s26, 1
      %s28 = scalar_select %p27, 0, %s26
      %s29 = ssub.s32 %s16, %s28
      %s30 = ssub.s32 %s17, %s24
      %s31 = sor.u32 %s29, %s30
      %p32 = scmp.eq.s32.totalorder %s31, 0
      %s34 = sadd.s32 %s33, 1
      %s35 = scalar_select %p32, %s33, %s34
      %p38 = pneg %p32
      %p39 = scmp.eq.s32.totalorder %s9, 8
      %p40 = por %p38, %p39
      %p41 = scmp.ne.s32.totalorder %s33, %s36
      %p42 = scmp.eq.s32.totalorder %s9, 0
      %p43 = por %p41, %p42
      %p44 = scmp.ne.s32.totalorder %s33, %s36
      %p45 = scmp.eq.s32.totalorder %s14, 8
      %p46 = por %p44, %p45
      %p47 = scmp.ne.s32.totalorder %s36, %s37
      %p48 = scmp.eq.s32.totalorder %s14, 0
      %p49 = por %p47, %p48
      %p50 = scmp.ne.s32.totalorder %s36, %s37
      %p51 = scmp.eq.s32.totalorder %s15, 8
      %p52 = por %p50, %p51
      %p54 = scmp.ne.s32.totalorder %s37, %s53
      %p55 = scmp.eq.s32.totalorder %s15, 0
      %p56 = por %p54, %p55
      %s57 = ssub.s32 %s17, %s24
      %p58 = scmp.eq.s32.totalorder %s57, 0
      %s60 = sadd.s32 %s59, 1
      %s61 = scalar_select %p58, %s59, %s60
      %p64 = pneg %p58
      %p65 = scmp.eq.s32.totalorder %s9, 8
      %p66 = por %p64, %p65
      %p67 = scmp.ne.s32.totalorder %s59, %s62
      %p68 = scmp.eq.s32.totalorder %s9, 0
      %p69 = por %p67, %p68
      %p70 = scmp.ne.s32.totalorder %s59, %s62
      %p71 = scmp.eq.s32.totalorder %s14, 8
      %p72 = por %p70, %p71
      %p73 = scmp.ne.s32.totalorder %s62, %s63
      %p74 = scmp.eq.s32.totalorder %s14, 0
      %p75 = por %p73, %p74
      %p76 = scmp.ne.s32.totalorder %s62, %s63
      %p77 = scmp.eq.s32.totalorder %s15, 8
      %p78 = por %p76, %p77
      %p80 = scmp.ne.s32.totalorder %s63, %s79
      %p81 = scmp.eq.s32.totalorder %s15, 0
      %p82 = por %p80, %p81
      %s84 = sadd.s32 %s83, 1
      %p87 = scmp.eq.s32.totalorder %s9, 8
      %p88 = scmp.ne.s32.totalorder %s83, %s85
      %p89 = scmp.eq.s32.totalorder %s9, 0
      %p90 = por %p88, %p89
      %p91 = scmp.ne.s32.totalorder %s83, %s85
      %p92 = scmp.eq.s32.totalorder %s14, 8
      %p93 = por %p91, %p92
      %p94 = scmp.ne.s32.totalorder %s85, %s86
      %p95 = scmp.eq.s32.totalorder %s14, 0
      %p96 = por %p94, %p95
      %p97 = scmp.ne.s32.totalorder %s85, %s86
      %p98 = scmp.eq.s32.totalorder %s15, 8
      %p99 = por %p97, %p98
      %p101 = scmp.ne.s32.totalorder %s86, %s100
      %p102 = scmp.eq.s32.totalorder %s15, 0
      %p103 = por %p101, %p102
      %s104 = ssub.s32 %s16, %s28
      %p105 = scmp.eq.s32.totalorder %s104, 0
      %s107 = sadd.s32 %s106, 1
      %s108 = scalar_select %p105, %s106, %s107
      %p111 = pneg %p105
      %p112 = scmp.eq.s32.totalorder %s9, 8
      %p113 = por %p111, %p112
      %p114 = scmp.ne.s32.totalorder %s106, %s109
      %p115 = scmp.eq.s32.totalorder %s9, 0
      %p116 = por %p114, %p115
      %p117 = scmp.ne.s32.totalorder %s106, %s109
      %p118 = scmp.eq.s32.totalorder %s14, 8
      %p119 = por %p117, %p118
      %p120 = scmp.ne.s32.totalorder %s109, %s110
      %p121 = scmp.eq.s32.totalorder %s14, 0
      %p122 = por %p120, %p121
      %p123 = scmp.ne.s32.totalorder %s109, %s110
      %p124 = scmp.eq.s32.totalorder %s15, 8
      %p125 = por %p123, %p124
      %p127 = scmp.ne.s32.totalorder %s110, %s126
      %p128 = scmp.eq.s32.totalorder %s15, 0
      %p129 = por %p127, %p128
      %p130 = scmp.le.s32.totalorder 1, %s9
      %p131 = scmp.lt.s32.totalorder %s9, 10
      %p132 = pnand %p130, %p131
      %p133 = pneg %p132
      // Predicated region
      $region9: #{classifier_forward.7} parent=5 // pred_check
        _
      $region10: #{classifier_forward.7} parent=5 // pred_check_branch
        %135 = sbr.rel (%p132) target = $region12
      $region11: #{classifier_forward.7} parent=5 // pred_region
        %s136 = ssub.s32 %s9, 1
        // Predicated region
        $region13: #{classifier_forward.7} parent=11 // pred_check
          %p137 = pneg %p96
        $region14: #{classifier_forward.7} parent=11 // pred_check_branch
          %139 = sbr.rel (%p137) target = $region16
        $region15: #{classifier_forward.7} parent=11 // pred_region
          _
        $region16: #{classifier_forward.7} parent=11 // pred_fallthru
          _
      $region12: #{classifier_forward.7} parent=5 // pred_fallthru
        _
      %p140 = scmp.lt.s32.totalorder %s9, 9
      // Predicated region
      $region17: #{classifier_forward.7} parent=5 // pred_check
        %p141 = pneg %p140
      $region18: #{classifier_forward.7} parent=5 // pred_check_branch
        %143 = sbr.rel (%p141) target = $region20
      $region19: #{classifier_forward.7} parent=5 // pred_region
        // Predicated region
        $region21: #{classifier_forward.7} parent=19 // pred_check
          %p144 = pneg %p43
        $region22: #{classifier_forward.7} parent=19 // pred_check_branch
          %146 = sbr.rel (%p144) target = $region24
        $region23: #{classifier_forward.7} parent=19 // pred_region
          %s147 = sand.u32 %s33, 1
          %s148 = sand.u32 %s33, 1
          %s149 = smul.addr %s148, 32
          %s150 = scalar_lea.vmem [#allocation3], %s149
          %s151 = smul.u32 4, %s16
          %s152 = smul.u32 2, %s17
          %s153 = smul.addr %s151, 18
          %s154 = sadd.s32 %s152, %s153
          %s155 = smul.addr %s154, 4
          %s156 = scalar_lea.vmem %s0, %s155
          // Predicated region
          $region25: #{classifier_forward.7} parent=23 // pred_check
            _
          $region26: #{classifier_forward.7} parent=23 // pred_check_branch
            %158 = sbr.rel (0) target = $region28
          $region27: #{classifier_forward.7} parent=23 // pred_region
            // Predicated region
            $region29: #{classifier_forward.7} parent=27 // pred_check
              _
            $region30: #{classifier_forward.7} parent=27 // pred_check_branch
              %160 = sbr.rel (0) target = $region32
            $region31: #{classifier_forward.7} parent=27 // pred_region
              // Predicated region
              $region44: #{classifier_forward.7} parent=31 // pred_check
                _
              $region45: #{classifier_forward.7} parent=31 // pred_check_branch
                %182 = sbr.rel (0) target = $region47
              $region46: #{classifier_forward.7} parent=31 // pred_region
                loop: start=0, step=1, limit=1
                $region48: #{classifier_forward.7} parent=46 // loop_pre_header
                  _
                $region49: #{classifier_forward.7} parent=46 // loop_header
                  %s184 = sphi 0, %s188
                  %p185 = scmp.ge.s32.totalorder %s184, 1
                  %s189 = sphi %s156, %s156
                  %s190 = sphi %s150, %s150
                $region50: #{classifier_forward.7} parent=46 // loop_header_branch
                  %187 = sbr.rel (%p185) target = $region54
                $region51: #{classifier_forward.7} parent=46 // loop_body
                  %v191 = vld [vmem:[%s189] sm:$0xff]
                  %192 = vst [vmem:[%s190] sm:$0xff] %v191
                  %v193 = vld [vmem:[%s189 + $0x48] sm:$0xff]
                  %194 = vst [vmem:[%s190 + $0x8] sm:$0xff] %v193
                  %v195 = vld [vmem:[%s189 + $0x90] sm:$0xff]
                  %196 = vst [vmem:[%s190 + $0x10] sm:$0xff] %v195
                  %v197 = vld [vmem:[%s189 + $0xd8] sm:$0xff]
                  %198 = vst [vmem:[%s190 + $0x18] sm:$0xff] %v197
                $region52: #{classifier_forward.7} parent=46 // loop_footer
                  %s188 = sadd.s32 1, %s184
                $region53: #{classifier_forward.7} parent=46 // loop_footer_branch
                  %183 = sbr.rel target = $region49
                $region54: #{classifier_forward.7} parent=46 // loop_exit
                  _
              $region47: #{classifier_forward.7} parent=31 // pred_fallthru
                _
              // Predicated region
              $region55: #{classifier_forward.7} parent=31 // pred_check
                _
              $region56: #{classifier_forward.7} parent=31 // pred_check_branch
                %200 = sbr.rel target = $region58
              $region57: #{classifier_forward.7} parent=31 // pred_region
                _
              $region58: #{classifier_forward.7} parent=31 // pred_fallthru
                _
            $region32: #{classifier_forward.7} parent=27 // pred_fallthru
              _
            // Predicated region
            $region33: #{classifier_forward.7} parent=27 // pred_check
              _
            $region34: #{classifier_forward.7} parent=27 // pred_check_branch
              %162 = sbr.rel target = $region36
            $region35: #{classifier_forward.7} parent=27 // pred_region
              %s164 = ssub.s32 256, 1
              loop: start=0, step=1, limit=1
              $region37: #{classifier_forward.7} parent=35 // loop_pre_header
                _
              $region38: #{classifier_forward.7} parent=35 // loop_header
                %s166 = sphi 0, %s170
                %p167 = scmp.ge.s32.totalorder %s166, 1
                %s171 = sphi %s156, %s156
                %s172 = sphi %s150, %s150
              $region39: #{classifier_forward.7} parent=35 // loop_header_branch
                %169 = sbr.rel (%p167) target = $region43
              $region40: #{classifier_forward.7} parent=35 // loop_body
                %v173 = vld [vmem:[%s171] sm:%s164]
                %174 = vst [vmem:[%s172] sm:%s164] %v173
                %v175 = vld [vmem:[%s171 + $0x48] sm:%s164]
                %176 = vst [vmem:[%s172 + $0x8] sm:%s164] %v175
                %v177 = vld [vmem:[%s171 + $0x90] sm:%s164]
                %178 = vst [vmem:[%s172 + $0x10] sm:%s164] %v177
                %v179 = vld [vmem:[%s171 + $0xd8] sm:%s164]
                %180 = vst [vmem:[%s172 + $0x18] sm:%s164] %v179
              $region41: #{classifier_forward.7} parent=35 // loop_footer
                %s170 = sadd.s32 1, %s166
              $region42: #{classifier_forward.7} parent=35 // loop_footer_branch
                %165 = sbr.rel target = $region38
              $region43: #{classifier_forward.7} parent=35 // loop_exit
                _
            $region36: #{classifier_forward.7} parent=27 // pred_fallthru
              _
          $region28: #{classifier_forward.7} parent=23 // pred_fallthru
            _
          %201 = vnop
        $region24: #{classifier_forward.7} parent=19 // pred_fallthru
          _
        // Predicated region
        $region59: #{classifier_forward.7} parent=19 // pred_check
          %p202 = pneg %p69
        $region60: #{classifier_forward.7} parent=19 // pred_check_branch
          %204 = sbr.rel (%p202) target = $region62
        $region61: #{classifier_forward.7} parent=19 // pred_region
          %s205 = smul.u32 32, %s17
          %p206 = scmp.lt.s32.totalorder %s205, 287
          %s207 = scalar_select %p206, %s205, 287
          %s208 = smul.addr %s207, 2
          %s209 = smul.addr %s208, 4
          %s210 = scalar_lea.vmem %s1, %s209
          %s211 = smul.u32 32, %s17
        $region62: #{classifier_forward.7} parent=19 // pred_fallthru
          _
      $region20: #{classifier_forward.7} parent=5 // pred_fallthru
        _
      %p212 = scmp.le.s32.totalorder 1, %s9
      %p213 = scmp.lt.s32.totalorder %s9, 10
      %p214 = pnand %p212, %p213
      %p215 = pneg %p214
      // Predicated region
      $region63: #{classifier_forward.7} parent=5 // pred_check
        _
      $region64: #{classifier_forward.7} parent=5 // pred_check_branch
        %217 = sbr.rel (%p214) target = $region66
      $region65: #{classifier_forward.7} parent=5 // pred_region
        %s218 = ssub.s32 %s9, 1
        %s219 = sand.u32 %s36, 1
        %s220 = sand.u32 %s36, 1
        %s221 = smul.addr %s220, 32
        %s222 = scalar_lea.vmem [#allocation3], %s221
        // Predicated region
        $region67: #{classifier_forward.7} parent=65 // pred_check
          %p223 = pneg %p49
        $region68: #{classifier_forward.7} parent=65 // pred_check_branch
          %225 = sbr.rel (%p223) target = $region70
        $region69: #{classifier_forward.7} parent=65 // pred_region
          _
        $region70: #{classifier_forward.7} parent=65 // pred_fallthru
          _
        %s226 = sand.u32 %s36, 1
        %s227 = sand.u32 %s36, 1
        %s228 = smul.addr %s227, 32
        %s229 = scalar_lea.vmem [#allocation3], %s228
        %p230 = pneg %p49
        %p231 = pneg %p46
        %s232 = smul.u32 32, %s19
        %p233 = scmp.lt.s32.totalorder %s232, 287
        %s234 = scalar_select %p233, %s232, 287
        %s235 = smul.addr %s234, 2
        %s236 = smul.addr %s235, 4
        %s237 = scalar_lea.vmem %s1, %s236
        %p238 = pneg %p75
        %p239 = pneg %p72
        %p240 = pneg %p96
        %p241 = pneg %p93
        %p242 = pneg %p122
        %p243 = pneg %p119
        %s244 = smul.u32 4, %s18
        %p245 = scmp.lt.s32.totalorder %s244, 3
        %s246 = scalar_select %p245, %s244, 3
        %s247 = smul.addr %s246, 2
        %s248 = smul.addr %s247, 8
        %s249 = scalar_lea.vmem %s3, %s248
        %s250 = smul.u32 4, %s18
        %s251 = smul.u32 2, %s19
        %s252 = smul.u32 32, %s19
        %p253 = scmp.lt.s32.totalorder %s252, 287
        %s254 = scalar_select %p253, %s252, 287
        %s255 = smul.addr %s254, 2
        %s256 = smul.addr %s255, 4
        %s257 = scalar_lea.vmem %s1, %s256
        %s258 = smul.u32 32, %s19
        %s259 = smul.u32 4, %s18
        %p260 = scmp.lt.s32.totalorder %s259, 3
        %s261 = scalar_select %p260, %s259, 3
        %s262 = smul.addr %s261, 2
        %s263 = smul.addr %s262, 8
        %s264 = scalar_lea.vmem %s3, %s263
        %s265 = smul.u32 4, %s18
        %p266 = scmp.eq.s32.totalorder %s19, 0
        // Predicated region
        $region71: #{classifier_forward.7} parent=65 // pred_check
          %p267 = pneg %p266
        $region72: #{classifier_forward.7} parent=65 // pred_check_branch
          %269 = sbr.rel (%p267) target = $region74
        $region73: #{classifier_forward.7} parent=65 // pred_region
          %270 = vst [vmem:[#allocation2] sm:$0xff] 0.0
          %271 = vst [vmem:[#allocation2 + $0x8] sm:$0xff] 0.0
          %272 = vst [vmem:[#allocation2 + $0x10] sm:$0xff] 0.0
          %273 = vst [vmem:[#allocation2 + $0x18] sm:$0xff] 0.0
          %274 = vst [vmem:[#allocation2 + $0x20] sm:$0xff] 0.0
          %275 = vst [vmem:[#allocation2 + $0x28] sm:$0xff] 0.0
          %276 = vst [vmem:[#allocation2 + $0x30] sm:$0xff] 0.0
          %277 = vst [vmem:[#allocation2 + $0x38] sm:$0xff] 0.0
        $region74: #{classifier_forward.7} parent=65 // pred_fallthru
          _
        %v278 = vld [vmem:[#allocation2] sm:$0xff]
        %v279 = vld [vmem:[#allocation2 + $0x8] sm:$0xff]
        %v280 = vld [vmem:[#allocation2 + $0x10] sm:$0xff]
        %v281 = vld [vmem:[#allocation2 + $0x18] sm:$0xff]
        %v282 = vld [vmem:[#allocation2 + $0x20] sm:$0xff]
        %v283 = vld [vmem:[#allocation2 + $0x28] sm:$0xff]
        %v284 = vld [vmem:[#allocation2 + $0x30] sm:$0xff]
        %v285 = vld [vmem:[#allocation2 + $0x38] sm:$0xff]
        %v286 = vld [vmem:[%s222] sm:$0xff]
        %v287 = vld [vmem:[%s222 + $0x8] sm:$0xff]
        %v288 = vld [vmem:[%s222 + $0x10] sm:$0xff]
        %v289 = vld [vmem:[%s222 + $0x18] sm:$0xff]
        %v290 = vld [vmem:[%s257] sm:$0xff]
        %v291 = vld [vmem:[%s257 + $0x8] sm:$0xff]
        %v292 = vld [vmem:[%s257 + $0x10] sm:$0xff]
        %v293 = vld [vmem:[%s257 + $0x18] sm:$0xff]
        %v294 = vld [vmem:[%s257 + $0x20] sm:$0xff]
        %v295 = vld [vmem:[%s257 + $0x28] sm:$0xff]
        %v296 = vld [vmem:[%s257 + $0x30] sm:$0xff]
        %v297 = vld [vmem:[%s257 + $0x38] sm:$0xff]
        %v298 = vld [vmem:[%s257 + $0x40] sm:$0xff]
        %v299 = vld [vmem:[%s257 + $0x48] sm:$0xff]
        %v300 = vld [vmem:[%s257 + $0x50] sm:$0xff]
        %v301 = vld [vmem:[%s257 + $0x58] sm:$0xff]
        %v302 = vld [vmem:[%s257 + $0x60] sm:$0xff]
        %v303 = vld [vmem:[%s257 + $0x68] sm:$0xff]
        %v304 = vld [vmem:[%s257 + $0x70] sm:$0xff]
        %v305 = vld [vmem:[%s257 + $0x78] sm:$0xff]
        %v306 = vld [vmem:[%s257 + $0x80] sm:$0xff]
        %v307 = vld [vmem:[%s257 + $0x88] sm:$0xff]
        %v308 = vld [vmem:[%s257 + $0x90] sm:$0xff]
        %v309 = vld [vmem:[%s257 + $0x98] sm:$0xff]
        %v310 = vld [vmem:[%s257 + $0xa0] sm:$0xff]
        %v311 = vld [vmem:[%s257 + $0xa8] sm:$0xff]
        %v312 = vld [vmem:[%s257 + $0xb0] sm:$0xff]
        %v313 = vld [vmem:[%s257 + $0xb8] sm:$0xff]
        %v314 = vld [vmem:[%s257 + $0xc0] sm:$0xff]
        %v315 = vld [vmem:[%s257 + $0xc8] sm:$0xff]
        %v316 = vld [vmem:[%s257 + $0xd0] sm:$0xff]
        %v317 = vld [vmem:[%s257 + $0xd8] sm:$0xff]
        %v318 = vld [vmem:[%s257 + $0xe0] sm:$0xff]
        %v319 = vld [vmem:[%s257 + $0xe8] sm:$0xff]
        %v320 = vld [vmem:[%s257 + $0xf0] sm:$0xff]
        %v321 = vld [vmem:[%s257 + $0xf8] sm:$0xff]
        %v326 = vunpack.c.l.b16 %v286
        %v327 = vunpack.c.h.b16 %v286
        %v328 = vunpack.c.l.b16 %v287
        %v329 = vunpack.c.h.b16 %v287
        %v330 = vunpack.c.l.b16 %v288
        %v331 = vunpack.c.h.b16 %v288
        %v332 = vunpack.c.l.b16 %v289
        %v333 = vunpack.c.h.b16 %v289
        %v334 = vpack.c.b16 %v328, %v326
        %v335 = vpack.c.b16 %v329, %v327
        %v336 = vpack.c.b16 %v332, %v330
        %v337 = vpack.c.b16 %v333, %v331
        %v374 = vunpack.c.l.b16 %v290
        %v375 = vunpack.c.h.b16 %v290
        %v376 = vunpack.c.l.b16 %v291
        %v377 = vunpack.c.h.b16 %v291
        %v378 = vunpack.c.l.b16 %v292
        %v379 = vunpack.c.h.b16 %v292
        %v380 = vunpack.c.l.b16 %v293
        %v381 = vunpack.c.h.b16 %v293
        %v382 = vunpack.c.l.b16 %v294
        %v383 = vunpack.c.h.b16 %v294
        %v384 = vunpack.c.l.b16 %v295
        %v385 = vunpack.c.h.b16 %v295
        %v386 = vunpack.c.l.b16 %v296
        %v387 = vunpack.c.h.b16 %v296
        %v388 = vunpack.c.l.b16 %v297
        %v389 = vunpack.c.h.b16 %v297
        %v390 = vunpack.c.l.b16 %v298
        %v391 = vunpack.c.h.b16 %v298
        %v392 = vunpack.c.l.b16 %v299
        %v393 = vunpack.c.h.b16 %v299
        %v394 = vunpack.c.l.b16 %v300
        %v395 = vunpack.c.h.b16 %v300
        %v396 = vunpack.c.l.b16 %v301
        %v397 = vunpack.c.h.b16 %v301
        %v398 = vunpack.c.l.b16 %v302
        %v399 = vunpack.c.h.b16 %v302
        %v400 = vunpack.c.l.b16 %v303
        %v401 = vunpack.c.h.b16 %v303
        %v402 = vunpack.c.l.b16 %v304
        %v403 = vunpack.c.h.b16 %v304
        %v404 = vunpack.c.l.b16 %v305
        %v405 = vunpack.c.h.b16 %v305
        %v406 = vunpack.c.l.b16 %v306
        %v407 = vunpack.c.h.b16 %v306
        %v408 = vunpack.c.l.b16 %v307
        %v409 = vunpack.c.h.b16 %v307
        %v410 = vunpack.c.l.b16 %v308
        %v411 = vunpack.c.h.b16 %v308
        %v412 = vunpack.c.l.b16 %v309
        %v413 = vunpack.c.h.b16 %v309
        %v414 = vunpack.c.l.b16 %v310
        %v415 = vunpack.c.h.b16 %v310
        %v416 = vunpack.c.l.b16 %v311
        %v417 = vunpack.c.h.b16 %v311
        %v418 = vunpack.c.l.b16 %v312
        %v419 = vunpack.c.h.b16 %v312
        %v420 = vunpack.c.l.b16 %v313
        %v421 = vunpack.c.h.b16 %v313
        %v422 = vunpack.c.l.b16 %v314
        %v423 = vunpack.c.h.b16 %v314
        %v424 = vunpack.c.l.b16 %v315
        %v425 = vunpack.c.h.b16 %v315
        %v426 = vunpack.c.l.b16 %v316
        %v427 = vunpack.c.h.b16 %v316
        %v428 = vunpack.c.l.b16 %v317
        %v429 = vunpack.c.h.b16 %v317
        %v430 = vunpack.c.l.b16 %v318
        %v431 = vunpack.c.h.b16 %v318
        %v432 = vunpack.c.l.b16 %v319
        %v433 = vunpack.c.h.b16 %v319
        %v434 = vunpack.c.l.b16 %v320
        %v435 = vunpack.c.h.b16 %v320
        %v436 = vunpack.c.l.b16 %v321
        %v437 = vunpack.c.h.b16 %v321
        %v438 = vpack.c.b16 %v376, %v374
        %v439 = vpack.c.b16 %v377, %v375
        %v440 = vpack.c.b16 %v380, %v378
        %v441 = vpack.c.b16 %v381, %v379
        %v442 = vpack.c.b16 %v384, %v382
        %v443 = vpack.c.b16 %v385, %v383
        %v444 = vpack.c.b16 %v388, %v386
        %v445 = vpack.c.b16 %v389, %v387
        %v446 = vpack.c.b16 %v392, %v390
        %v447 = vpack.c.b16 %v393, %v391
        %v448 = vpack.c.b16 %v396, %v394
        %v449 = vpack.c.b16 %v397, %v395
        %v450 = vpack.c.b16 %v400, %v398
        %v451 = vpack.c.b16 %v401, %v399
        %v452 = vpack.c.b16 %v404, %v402
        %v453 = vpack.c.b16 %v405, %v403
        %v454 = vpack.c.b16 %v408, %v406
        %v455 = vpack.c.b16 %v409, %v407
        %v456 = vpack.c.b16 %v412, %v410
        %v457 = vpack.c.b16 %v413, %v411
        %v458 = vpack.c.b16 %v416, %v414
        %v459 = vpack.c.b16 %v417, %v415
        %v460 = vpack.c.b16 %v420, %v418
        %v461 = vpack.c.b16 %v421, %v419
        %v462 = vpack.c.b16 %v424, %v422
        %v463 = vpack.c.b16 %v425, %v423
        %v464 = vpack.c.b16 %v428, %v426
        %v465 = vpack.c.b16 %v429, %v427
        %v466 = vpack.c.b16 %v432, %v430
        %v467 = vpack.c.b16 %v433, %v431
        %v468 = vpack.c.b16 %v436, %v434
        %v469 = vpack.c.b16 %v437, %v435
        %502 = vmatpush.bf16.msra.mxu0 %v452
        %503 = vmatpush.bf16.msra.mxu0 %v450
        %504 = vmatpush.bf16.msra.mxu0 %v448
        %505 = vmatpush.bf16.msra.mxu0 %v446
        %506 = vmatpush.bf16.msra.mxu0 %v444
        %507 = vmatpush.bf16.msra.mxu0 %v442
        %508 = vmatpush.bf16.msra.mxu0 %v440
        %509 = vmatpush.bf16.msra.mxu0 %v438
        %510 = vmatmul.bf16.gmra.mxu0 %v334
        %v511 = vpop.f32.mrf.mxu0
        %v512 = vadd.f32 0.0, %v511
        %v513 = vpop.f32.mrf.mxu0
        %v514 = vadd.f32 0.0, %v513
        %515 = vmatmul.bf16.gmra.mxu0 %v336
        %v516 = vpop.f32.mrf.mxu0
        %v517 = vadd.f32 0.0, %v516
        %v518 = vpop.f32.mrf.mxu0
        %v519 = vadd.f32 0.0, %v518
        %520 = vdwg.mxu0
        %521 = vmatpush.bf16.msra.mxu0 %v468
        %522 = vmatpush.bf16.msra.mxu0 %v466
        %523 = vmatpush.bf16.msra.mxu0 %v464
        %524 = vmatpush.bf16.msra.mxu0 %v462
        %525 = vmatpush.bf16.msra.mxu0 %v460
        %526 = vmatpush.bf16.msra.mxu0 %v458
        %527 = vmatpush.bf16.msra.mxu0 %v456
        %528 = vmatpush.bf16.msra.mxu0 %v454
        %529 = vmatmul.bf16.gmra.mxu0 %v335
        %v530 = vpop.f32.mrf.mxu0
        %v531 = vadd.f32 %v512, %v530
        %v532 = vpop.f32.mrf.mxu0
        %v533 = vadd.f32 %v514, %v532
        %534 = vmatmul.bf16.gmra.mxu0 %v337
        %v535 = vpop.f32.mrf.mxu0
        %v536 = vadd.f32 %v517, %v535
        %v537 = vpop.f32.mrf.mxu0
        %v538 = vadd.f32 %v519, %v537
        %539 = vdwg.mxu0
        %540 = vmatpush.bf16.msra.mxu0 %v453
        %541 = vmatpush.bf16.msra.mxu0 %v451
        %542 = vmatpush.bf16.msra.mxu0 %v449
        %543 = vmatpush.bf16.msra.mxu0 %v447
        %544 = vmatpush.bf16.msra.mxu0 %v445
        %545 = vmatpush.bf16.msra.mxu0 %v443
        %546 = vmatpush.bf16.msra.mxu0 %v441
        %547 = vmatpush.bf16.msra.mxu0 %v439
        %548 = vmatmul.bf16.gmra.mxu0 %v334
        %v549 = vpop.f32.mrf.mxu0
        %v550 = vadd.f32 0.0, %v549
        %v551 = vpop.f32.mrf.mxu0
        %v552 = vadd.f32 0.0, %v551
        %553 = vmatmul.bf16.gmra.mxu0 %v336
        %v554 = vpop.f32.mrf.mxu0
        %v555 = vadd.f32 0.0, %v554
        %v556 = vpop.f32.mrf.mxu0
        %v557 = vadd.f32 0.0, %v556
        %558 = vdwg.mxu0
        %559 = vmatpush.bf16.msra.mxu0 %v469
        %560 = vmatpush.bf16.msra.mxu0 %v467
        %561 = vmatpush.bf16.msra.mxu0 %v465
        %562 = vmatpush.bf16.msra.mxu0 %v463
        %563 = vmatpush.bf16.msra.mxu0 %v461
        %564 = vmatpush.bf16.msra.mxu0 %v459
        %565 = vmatpush.bf16.msra.mxu0 %v457
        %566 = vmatpush.bf16.msra.mxu0 %v455
        %567 = vmatmul.bf16.gmra.mxu0 %v335
        %v568 = vpop.f32.mrf.mxu0
        %v569 = vadd.f32 %v550, %v568
        %v570 = vpop.f32.mrf.mxu0
        %v571 = vadd.f32 %v552, %v570
        %572 = vmatmul.bf16.gmra.mxu0 %v337
        %v573 = vpop.f32.mrf.mxu0
        %v574 = vadd.f32 %v555, %v573
        %v575 = vpop.f32.mrf.mxu0
        %v576 = vadd.f32 %v557, %v575
        %577 = vdwg.mxu0
        %v578 = vadd.f32 %v278, %v531
        %v579 = vadd.f32 %v279, %v569
        %v580 = vadd.f32 %v280, %v533
        %v581 = vadd.f32 %v281, %v571
        %v582 = vadd.f32 %v282, %v536
        %v583 = vadd.f32 %v283, %v574
        %v584 = vadd.f32 %v284, %v538
        %v585 = vadd.f32 %v285, %v576
        %586 = vst [vmem:[#allocation2] sm:$0xff] %v578
        %587 = vst [vmem:[#allocation2 + $0x8] sm:$0xff] %v579
        %588 = vst [vmem:[#allocation2 + $0x10] sm:$0xff] %v580
        %589 = vst [vmem:[#allocation2 + $0x18] sm:$0xff] %v581
        %590 = vst [vmem:[#allocation2 + $0x20] sm:$0xff] %v582
        %591 = vst [vmem:[#allocation2 + $0x28] sm:$0xff] %v583
        %592 = vst [vmem:[#allocation2 + $0x30] sm:$0xff] %v584
        %593 = vst [vmem:[#allocation2 + $0x38] sm:$0xff] %v585
        %p594 = scmp.eq.s32.totalorder %s19, 8
        // Predicated region
        $region75: #{classifier_forward.7} parent=65 // pred_check
          %p595 = pneg %p594
        $region76: #{classifier_forward.7} parent=65 // pred_check_branch
          %597 = sbr.rel (%p595) target = $region78
        $region77: #{classifier_forward.7} parent=65 // pred_region
          %v598 = vld [vmem:[#allocation2] sm:$0xff]
          %v599 = vld [vmem:[#allocation2 + $0x8] sm:$0xff]
          %v600 = vld [vmem:[#allocation2 + $0x10] sm:$0xff]
          %v601 = vld [vmem:[#allocation2 + $0x18] sm:$0xff]
          %v602 = vld [vmem:[#allocation2 + $0x20] sm:$0xff]
          %v603 = vld [vmem:[#allocation2 + $0x28] sm:$0xff]
          %v604 = vld [vmem:[#allocation2 + $0x30] sm:$0xff]
          %v605 = vld [vmem:[#allocation2 + $0x38] sm:$0xff]
          %v606 = vld [vmem:[%s2] sm:$0x3]
          %v608 = vperm.slane %v606, 0
          %v609 = vperm.slane %v606, 1
          %v612 = vadd.f32 %v598, %v608
          %v613 = vadd.f32 %v599, %v609
          %v614 = vadd.f32 %v600, %v608
          %v615 = vadd.f32 %v601, %v609
          %v616 = vadd.f32 %v602, %v608
          %v617 = vadd.f32 %v603, %v609
          %v618 = vadd.f32 %v604, %v608
          %v619 = vadd.f32 %v605, %v609
          %vm620 = vcmp.ge.f32.partialorder %v612, 0.0
          %vm621 = vcmp.ge.f32.partialorder %v613, 0.0
          %vm622 = vcmp.ge.f32.partialorder %v614, 0.0
          %vm623 = vcmp.ge.f32.partialorder %v615, 0.0
          %vm624 = vcmp.ge.f32.partialorder %v616, 0.0
          %vm625 = vcmp.ge.f32.partialorder %v617, 0.0
          %vm626 = vcmp.ge.f32.partialorder %v618, 0.0
          %vm627 = vcmp.ge.f32.partialorder %v619, 0.0
          %v628 = vmul.f32 %v612, 0.1
          %v629 = vmul.f32 %v613, 0.1
          %v630 = vmul.f32 %v614, 0.1
          %v631 = vmul.f32 %v615, 0.1
          %v632 = vmul.f32 %v616, 0.1
          %v633 = vmul.f32 %v617, 0.1
          %v634 = vmul.f32 %v618, 0.1
          %v635 = vmul.f32 %v619, 0.1
          %v636 = vsel %vm620, %v612, %v628
          %v637 = vsel %vm621, %v613, %v629
          %v638 = vsel %vm622, %v614, %v630
          %v639 = vsel %vm623, %v615, %v631
          %v640 = vsel %vm624, %v616, %v632
          %v641 = vsel %vm625, %v617, %v633
          %v642 = vsel %vm626, %v618, %v634
          %v643 = vsel %vm627, %v619, %v635
          %644 = vst [vmem:[%s264] sm:$0xff] %v636
          %645 = vst [vmem:[%s264 + $0x8] sm:$0xff] %v637
          %646 = vst [vmem:[%s264 + $0x10] sm:$0xff] %v638
          %647 = vst [vmem:[%s264 + $0x18] sm:$0xff] %v639
          %648 = vst [vmem:[%s264 + $0x20] sm:$0xff] %v640
          %649 = vst [vmem:[%s264 + $0x28] sm:$0xff] %v641
          %650 = vst [vmem:[%s264 + $0x30] sm:$0xff] %v642
          %651 = vst [vmem:[%s264 + $0x38] sm:$0xff] %v643
        $region78: #{classifier_forward.7} parent=65 // pred_fallthru
          _
        %s652 = smul.u32 4, %s18
        %p653 = scmp.lt.s32.totalorder %s652, 3
        %s654 = scalar_select %p653, %s652, 3
        %s655 = smul.addr %s654, 2
        %s656 = smul.addr %s655, 8
        %s657 = scalar_lea.vmem %s3, %s656
        // Predicated region
        $region79: #{classifier_forward.7} parent=65 // pred_check
          %p658 = pneg %p119
        $region80: #{classifier_forward.7} parent=65 // pred_check_branch
          %660 = sbr.rel (%p658) target = $region82
        $region81: #{classifier_forward.7} parent=65 // pred_region
          %s661 = smul.u32 4, %s18
        $region82: #{classifier_forward.7} parent=65 // pred_fallthru
          _
        // Predicated region
        $region83: #{classifier_forward.7} parent=65 // pred_check
          %p662 = pneg %p119
        $region84: #{classifier_forward.7} parent=65 // pred_check_branch
          %664 = sbr.rel (%p662) target = $region86
        $region85: #{classifier_forward.7} parent=65 // pred_region
          %s665 = smul.u32 4, %s18
          %p666 = scmp.lt.s32.totalorder %s665, 3
          %s667 = scalar_select %p666, %s665, 3
          %s668 = smul.addr %s667, 2
          %s669 = smul.addr %s668, 8
          %s670 = scalar_lea.vmem %s3, %s669
        $region86: #{classifier_forward.7} parent=65 // pred_fallthru
          _
      $region66: #{classifier_forward.7} parent=5 // pred_fallthru
        _
      %p671 = scmp.le.s32.totalorder 2, %s9
      // Predicated region
      $region87: #{classifier_forward.7} parent=5 // pred_check
        %p672 = pneg %p671
      $region88: #{classifier_forward.7} parent=5 // pred_check_branch
        %674 = sbr.rel (%p672) target = $region90
      $region89: #{classifier_forward.7} parent=5 // pred_region
        %s675 = ssub.s32 %s9, 2
      $region90: #{classifier_forward.7} parent=5 // pred_fallthru
        _
    $region6: #{classifier_forward.7} parent=1 // loop_footer
      %s13 = sadd.s32 1, %s9
    $region7: #{classifier_forward.7} parent=1 // loop_footer_branch
      %8 = sbr.rel target = $region3
    $region8: #{classifier_forward.7} parent=1 // loop_exit
      _

// kernel: classifier_forward.8
$region0: #{classifier_forward.8}
  #allocation0 [shape = 'u32[]', space=smem, size = 0x4, offset = 0x4, fixed_abs, tag = 'smem constant byte address 0x4 - core index']
  #allocation1 [shape = 'u32[72,128]{1,0:T(1,128)}', space=vmem, size = 0x9000, scoped, tag = 'internal scratch']
  #allocation2 [shape = 'f32[16,256]{1,0:T(8,128)}', space=vmem, size = 0x4000, scoped, tag = 'scratch operand']
  %s0 = inlined_call_operand.vmem [shape: bf16[16,2304], index: 0, kind: input, shape index: {}]
  %s1 = inlined_call_operand.vmem [shape: bf16[2304,256], index: 1, kind: input, shape index: {}]
  %s2 = inlined_call_operand.vmem [shape: f32[1,256], index: 2, kind: input, shape index: {}]
  %s3 = inlined_call_operand.vmem [shape: f32[16,256], index: 3, kind: output, shape index: {}]
  %s4 = sld [smem:[#allocation0]]
  $region91: #{classifier_forward.8} parent=0
    _
  %s6 = ssub.s32 1, %s4
  %s7 = scalar_select 0, %s6, %s4
  $region1: #{classifier_forward.8} parent=0
    #allocation3 [shape = 'u8[16384]{0}', space=vmem, size = 0x4000, scoped, tag = 'input window, operand 0']
    loop: start=0, step=1, limit=11
    $region2: #{classifier_forward.8} parent=1 // loop_pre_header
      _
    $region3: #{classifier_forward.8} parent=1 // loop_header
      %s9 = sphi 0, %s13
      %p10 = scmp.ge.s32.totalorder %s9, 11
      %s16 = sphi 0, %s28
      %s17 = sphi 0, %s24
      %s18 = sphi 0, %s16
      %s19 = sphi 0, %s17
      %s20 = sphi 0, %s18
      %s21 = sphi 0, %s19
      %s33 = sphi 0, %s35
      %s36 = sphi 0, %s33
      %s37 = sphi 0, %s36
      %s53 = sphi 0, %s37
      %s59 = sphi 0, %s61
      %s62 = sphi 0, %s59
      %s63 = sphi 0, %s62
      %s79 = sphi 0, %s63
      %s83 = sphi 0, %s83
      %s85 = sphi 0, %s83
      %s86 = sphi 0, %s85
      %s100 = sphi 0, %s86
      %s106 = sphi 0, %s108
      %s109 = sphi 0, %s106
      %s110 = sphi 0, %s109
      %s126 = sphi 0, %s110
    $region4: #{classifier_forward.8} parent=1 // loop_header_branch
      %12 = sbr.rel (%p10) target = $region8
    $region5: #{classifier_forward.8} parent=1 // loop_body
      %s14 = ssub.s32 %s9, 1
      %s15 = ssub.s32 %s9, 2
      %s22 = sadd.s32 1, %s17
      %p23 = scmp.ge.s32.totalorder %s22, 9
      %s24 = scalar_select %p23, 0, %s22
      %s25 = sadd.s32 1, %s16
      %s26 = scalar_select %p23, %s25, %s16
      %p27 = scmp.ge.s32.totalorder %s26, 1
      %s28 = scalar_select %p27, 0, %s26
      %s29 = ssub.s32 %s16, %s28
      %s30 = ssub.s32 %s17, %s24
      %s31 = sor.u32 %s29, %s30
      %p32 = scmp.eq.s32.totalorder %s31, 0
      %s34 = sadd.s32 %s33, 1
      %s35 = scalar_select %p32, %s33, %s34
      %p38 = pneg %p32
      %p39 = scmp.eq.s32.totalorder %s9, 8
      %p40 = por %p38, %p39
      %p41 = scmp.ne.s32.totalorder %s33, %s36
      %p42 = scmp.eq.s32.totalorder %s9, 0
      %p43 = por %p41, %p42
      %p44 = scmp.ne.s32.totalorder %s33, %s36
      %p45 = scmp.eq.s32.totalorder %s14, 8
      %p46 = por %p44, %p45
      %p47 = scmp.ne.s32.totalorder %s36, %s37
      %p48 = scmp.eq.s32.totalorder %s14, 0
      %p49 = por %p47, %p48
      %p50 = scmp.ne.s32.totalorder %s36, %s37
      %p51 = scmp.eq.s32.totalorder %s15, 8
      %p52 = por %p50, %p51
      %p54 = scmp.ne.s32.totalorder %s37, %s53
      %p55 = scmp.eq.s32.totalorder %s15, 0
      %p56 = por %p54, %p55
      %s57 = ssub.s32 %s17, %s24
      %p58 = scmp.eq.s32.totalorder %s57, 0
      %s60 = sadd.s32 %s59, 1
      %s61 = scalar_select %p58, %s59, %s60
      %p64 = pneg %p58
      %p65 = scmp.eq.s32.totalorder %s9, 8
      %p66 = por %p64, %p65
      %p67 = scmp.ne.s32.totalorder %s59, %s62
      %p68 = scmp.eq.s32.totalorder %s9, 0
      %p69 = por %p67, %p68
      %p70 = scmp.ne.s32.totalorder %s59, %s62
      %p71 = scmp.eq.s32.totalorder %s14, 8
      %p72 = por %p70, %p71
      %p73 = scmp.ne.s32.totalorder %s62, %s63
      %p74 = scmp.eq.s32.totalorder %s14, 0
      %p75 = por %p73, %p74
      %p76 = scmp.ne.s32.totalorder %s62, %s63
      %p77 = scmp.eq.s32.totalorder %s15, 8
      %p78 = por %p76, %p77
      %p80 = scmp.ne.s32.totalorder %s63, %s79
      %p81 = scmp.eq.s32.totalorder %s15, 0
      %p82 = por %p80, %p81
      %s84 = sadd.s32 %s83, 1
      %p87 = scmp.eq.s32.totalorder %s9, 8
      %p88 = scmp.ne.s32.totalorder %s83, %s85
      %p89 = scmp.eq.s32.totalorder %s9, 0
      %p90 = por %p88, %p89
      %p91 = scmp.ne.s32.totalorder %s83, %s85
      %p92 = scmp.eq.s32.totalorder %s14, 8
      %p93 = por %p91, %p92
      %p94 = scmp.ne.s32.totalorder %s85, %s86
      %p95 = scmp.eq.s32.totalorder %s14, 0
      %p96 = por %p94, %p95
      %p97 = scmp.ne.s32.totalorder %s85, %s86
      %p98 = scmp.eq.s32.totalorder %s15, 8
      %p99 = por %p97, %p98
      %p101 = scmp.ne.s32.totalorder %s86, %s100
      %p102 = scmp.eq.s32.totalorder %s15, 0
      %p103 = por %p101, %p102
      %s104 = ssub.s32 %s16, %s28
      %p105 = scmp.eq.s32.totalorder %s104, 0
      %s107 = sadd.s32 %s106, 1
      %s108 = scalar_select %p105, %s106, %s107
      %p111 = pneg %p105
      %p112 = scmp.eq.s32.totalorder %s9, 8
      %p113 = por %p111, %p112
      %p114 = scmp.ne.s32.totalorder %s106, %s109
      %p115 = scmp.eq.s32.totalorder %s9, 0
      %p116 = por %p114, %p115
      %p117 = scmp.ne.s32.totalorder %s106, %s109
      %p118 = scmp.eq.s32.totalorder %s14, 8
      %p119 = por %p117, %p118
      %p120 = scmp.ne.s32.totalorder %s109, %s110
      %p121 = scmp.eq.s32.totalorder %s14, 0
      %p122 = por %p120, %p121
      %p123 = scmp.ne.s32.totalorder %s109, %s110
      %p124 = scmp.eq.s32.totalorder %s15, 8
      %p125 = por %p123, %p124
      %p127 = scmp.ne.s32.totalorder %s110, %s126
      %p128 = scmp.eq.s32.totalorder %s15, 0
      %p129 = por %p127, %p128
      %p130 = scmp.le.s32.totalorder 1, %s9
      %p131 = scmp.lt.s32.totalorder %s9, 10
      %p132 = pnand %p130, %p131
      %p133 = pneg %p132
      // Predicated region
      $region9: #{classifier_forward.8} parent=5 // pred_check
        _
      $region10: #{classifier_forward.8} parent=5 // pred_check_branch
        %135 = sbr.rel (%p132) target = $region12
      $region11: #{classifier_forward.8} parent=5 // pred_region
        %s136 = ssub.s32 %s9, 1
        // Predicated region
        $region13: #{classifier_forward.8} parent=11 // pred_check
          %p137 = pneg %p96
        $region14: #{classifier_forward.8} parent=11 // pred_check_branch
          %139 = sbr.rel (%p137) target = $region16
        $region15: #{classifier_forward.8} parent=11 // pred_region
          _
        $region16: #{classifier_forward.8} parent=11 // pred_fallthru
          _
      $region12: #{classifier_forward.8} parent=5 // pred_fallthru
        _
      %p140 = scmp.lt.s32.totalorder %s9, 9
      // Predicated region
      $region17: #{classifier_forward.8} parent=5 // pred_check
        %p141 = pneg %p140
      $region18: #{classifier_forward.8} parent=5 // pred_check_branch
        %143 = sbr.rel (%p141) target = $region20
      $region19: #{classifier_forward.8} parent=5 // pred_region
        // Predicated region
        $region21: #{classifier_forward.8} parent=19 // pred_check
          %p144 = pneg %p43
        $region22: #{classifier_forward.8} parent=19 // pred_check_branch
          %146 = sbr.rel (%p144) target = $region24
        $region23: #{classifier_forward.8} parent=19 // pred_region
          %s147 = sand.u32 %s33, 1
          %s148 = sand.u32 %s33, 1
          %s149 = smul.addr %s148, 16
          %s150 = scalar_lea.vmem [#allocation3], %s149
          %s151 = smul.u32 2, %s16
          %s152 = smul.u32 2, %s17
          %s153 = smul.addr %s151, 18
          %s154 = sadd.s32 %s152, %s153
          %s155 = smul.addr %s154, 4
          %s156 = scalar_lea.vmem %s0, %s155
          // Predicated region
          $region25: #{classifier_forward.8} parent=23 // pred_check
            _
          $region26: #{classifier_forward.8} parent=23 // pred_check_branch
            %158 = sbr.rel (0) target = $region28
          $region27: #{classifier_forward.8} parent=23 // pred_region
            // Predicated region
            $region29: #{classifier_forward.8} parent=27 // pred_check
              _
            $region30: #{classifier_forward.8} parent=27 // pred_check_branch
              %160 = sbr.rel (0) target = $region32
            $region31: #{classifier_forward.8} parent=27 // pred_region
              // Predicated region
              $region44: #{classifier_forward.8} parent=31 // pred_check
                _
              $region45: #{classifier_forward.8} parent=31 // pred_check_branch
                %178 = sbr.rel (0) target = $region47
              $region46: #{classifier_forward.8} parent=31 // pred_region
                loop: start=0, step=1, limit=1
                $region48: #{classifier_forward.8} parent=46 // loop_pre_header
                  _
                $region49: #{classifier_forward.8} parent=46 // loop_header
                  %s180 = sphi 0, %s184
                  %p181 = scmp.ge.s32.totalorder %s180, 1
                  %s185 = sphi %s156, %s156
                  %s186 = sphi %s150, %s150
                $region50: #{classifier_forward.8} parent=46 // loop_header_branch
                  %183 = sbr.rel (%p181) target = $region54
                $region51: #{classifier_forward.8} parent=46 // loop_body
                  %v187 = vld [vmem:[%s185] sm:$0xff]
                  %188 = vst [vmem:[%s186] sm:$0xff] %v187
                  %v189 = vld [vmem:[%s185 + $0x48] sm:$0xff]
                  %190 = vst [vmem:[%s186 + $0x8] sm:$0xff] %v189
                $region52: #{classifier_forward.8} parent=46 // loop_footer
                  %s184 = sadd.s32 1, %s180
                $region53: #{classifier_forward.8} parent=46 // loop_footer_branch
                  %179 = sbr.rel target = $region49
                $region54: #{classifier_forward.8} parent=46 // loop_exit
                  _
              $region47: #{classifier_forward.8} parent=31 // pred_fallthru
                _
              // Predicated region
              $region55: #{classifier_forward.8} parent=31 // pred_check
                _
              $region56: #{classifier_forward.8} parent=31 // pred_check_branch
                %192 = sbr.rel target = $region58
              $region57: #{classifier_forward.8} parent=31 // pred_region
                _
              $region58: #{classifier_forward.8} parent=31 // pred_fallthru
                _
            $region32: #{classifier_forward.8} parent=27 // pred_fallthru
              _
            // Predicated region
            $region33: #{classifier_forward.8} parent=27 // pred_check
              _
            $region34: #{classifier_forward.8} parent=27 // pred_check_branch
              %162 = sbr.rel target = $region36
            $region35: #{classifier_forward.8} parent=27 // pred_region
              %s164 = ssub.s32 256, 1
              loop: start=0, step=1, limit=1
              $region37: #{classifier_forward.8} parent=35 // loop_pre_header
                _
              $region38: #{classifier_forward.8} parent=35 // loop_header
                %s166 = sphi 0, %s170
                %p167 = scmp.ge.s32.totalorder %s166, 1
                %s171 = sphi %s156, %s156
                %s172 = sphi %s150, %s150
              $region39: #{classifier_forward.8} parent=35 // loop_header_branch
                %169 = sbr.rel (%p167) target = $region43
              $region40: #{classifier_forward.8} parent=35 // loop_body
                %v173 = vld [vmem:[%s171] sm:%s164]
                %174 = vst [vmem:[%s172] sm:%s164] %v173
                %v175 = vld [vmem:[%s171 + $0x48] sm:%s164]
                %176 = vst [vmem:[%s172 + $0x8] sm:%s164] %v175
              $region41: #{classifier_forward.8} parent=35 // loop_footer
                %s170 = sadd.s32 1, %s166
              $region42: #{classifier_forward.8} parent=35 // loop_footer_branch
                %165 = sbr.rel target = $region38
              $region43: #{classifier_forward.8} parent=35 // loop_exit
                _
            $region36: #{classifier_forward.8} parent=27 // pred_fallthru
              _
          $region28: #{classifier_forward.8} parent=23 // pred_fallthru
            _
          %193 = vnop
        $region24: #{classifier_forward.8} parent=19 // pred_fallthru
          _
        // Predicated region
        $region59: #{classifier_forward.8} parent=19 // pred_check
          %p194 = pneg %p69
        $region60: #{classifier_forward.8} parent=19 // pred_check_branch
          %196 = sbr.rel (%p194) target = $region62
        $region61: #{classifier_forward.8} parent=19 // pred_region
          %s197 = smul.u32 32, %s17
          %p198 = scmp.lt.s32.totalorder %s197, 287
          %s199 = scalar_select %p198, %s197, 287
          %s200 = smul.addr %s199, 2
          %s201 = smul.addr %s200, 4
          %s202 = scalar_lea.vmem %s1, %s201
          %s203 = smul.u32 32, %s17
        $region62: #{classifier_forward.8} parent=19 // pred_fallthru
          _
      $region20: #{classifier_forward.8} parent=5 // pred_fallthru
        _
      %p204 = scmp.le.s32.totalorder 1, %s9
      %p205 = scmp.lt.s32.totalorder %s9, 10
      %p206 = pnand %p204, %p205
      %p207 = pneg %p206
      // Predicated region
      $region63: #{classifier_forward.8} parent=5 // pred_check
        _
      $region64: #{classifier_forward.8} parent=5 // pred_check_branch
        %209 = sbr.rel (%p206) target = $region66
      $region65: #{classifier_forward.8} parent=5 // pred_region
        %s210 = ssub.s32 %s9, 1
        %s211 = sand.u32 %s36, 1
        %s212 = sand.u32 %s36, 1
        %s213 = smul.addr %s212, 16
        %s214 = scalar_lea.vmem [#allocation3], %s213
        // Predicated region
        $region67: #{classifier_forward.8} parent=65 // pred_check
          %p215 = pneg %p49
        $region68: #{classifier_forward.8} parent=65 // pred_check_branch
          %217 = sbr.rel (%p215) target = $region70
        $region69: #{classifier_forward.8} parent=65 // pred_region
          _
        $region70: #{classifier_forward.8} parent=65 // pred_fallthru
          _
        %s218 = sand.u32 %s36, 1
        %s219 = sand.u32 %s36, 1
        %s220 = smul.addr %s219, 16
        %s221 = scalar_lea.vmem [#allocation3], %s220
        %p222 = pneg %p49
        %p223 = pneg %p46
        %s224 = smul.u32 32, %s19
        %p225 = scmp.lt.s32.totalorder %s224, 287
        %s226 = scalar_select %p225, %s224, 287
        %s227 = smul.addr %s226, 2
        %s228 = smul.addr %s227, 4
        %s229 = scalar_lea.vmem %s1, %s228
        %p230 = pneg %p75
        %p231 = pneg %p72
        %p232 = pneg %p96
        %p233 = pneg %p93
        %p234 = pneg %p122
        %p235 = pneg %p119
        %s236 = smul.u32 2, %s18
        %p237 = scmp.lt.s32.totalorder %s236, 1
        %s238 = scalar_select %p237, %s236, 1
        %s239 = smul.addr %s238, 2
        %s240 = smul.addr %s239, 8
        %s241 = scalar_lea.vmem %s3, %s240
        %s242 = smul.u32 2, %s18
        %s243 = smul.u32 2, %s19
        %s244 = smul.u32 32, %s19
        %p245 = scmp.lt.s32.totalorder %s244, 287
        %s246 = scalar_select %p245, %s244, 287
        %s247 = smul.addr %s246, 2
        %s248 = smul.addr %s247, 4
        %s249 = scalar_lea.vmem %s1, %s248
        %s250 = smul.u32 32, %s19
        %s251 = smul.u32 2, %s18
        %p252 = scmp.lt.s32.totalorder %s251, 1
        %s253 = scalar_select %p252, %s251, 1
        %s254 = smul.addr %s253, 2
        %s255 = smul.addr %s254, 8
        %s256 = scalar_lea.vmem %s3, %s255
        %s257 = smul.u32 2, %s18
        %p258 = scmp.eq.s32.totalorder %s19, 0
        // Predicated region
        $region71: #{classifier_forward.8} parent=65 // pred_check
          %p259 = pneg %p258
        $region72: #{classifier_forward.8} parent=65 // pred_check_branch
          %261 = sbr.rel (%p259) target = $region74
        $region73: #{classifier_forward.8} parent=65 // pred_region
          %262 = vst [vmem:[#allocation2] sm:$0xff] 0.0
          %263 = vst [vmem:[#allocation2 + $0x8] sm:$0xff] 0.0
          %264 = vst [vmem:[#allocation2 + $0x10] sm:$0xff] 0.0
          %265 = vst [vmem:[#allocation2 + $0x18] sm:$0xff] 0.0
        $region74: #{classifier_forward.8} parent=65 // pred_fallthru
          _
        %v266 = vld [vmem:[#allocation2] sm:$0xff]
        %v267 = vld [vmem:[#allocation2 + $0x8] sm:$0xff]
        %v268 = vld [vmem:[#allocation2 + $0x10] sm:$0xff]
        %v269 = vld [vmem:[#allocation2 + $0x18] sm:$0xff]
        %v270 = vld [vmem:[%s214] sm:$0xff]
        %v271 = vld [vmem:[%s214 + $0x8] sm:$0xff]
        %v272 = vld [vmem:[%s249] sm:$0xff]
        %v273 = vld [vmem:[%s249 + $0x8] sm:$0xff]
        %v274 = vld [vmem:[%s249 + $0x10] sm:$0xff]
        %v275 = vld [vmem:[%s249 + $0x18] sm:$0xff]
        %v276 = vld [vmem:[%s249 + $0x20] sm:$0xff]
        %v277 = vld [vmem:[%s249 + $0x28] sm:$0xff]
        %v278 = vld [vmem:[%s249 + $0x30] sm:$0xff]
        %v279 = vld [vmem:[%s249 + $0x38] sm:$0xff]
        %v280 = vld [vmem:[%s249 + $0x40] sm:$0xff]
        %v281 = vld [vmem:[%s249 + $0x48] sm:$0xff]
        %v282 = vld [vmem:[%s249 + $0x50] sm:$0xff]
        %v283 = vld [vmem:[%s249 + $0x58] sm:$0xff]
        %v284 = vld [vmem:[%s249 + $0x60] sm:$0xff]
        %v285 = vld [vmem:[%s249 + $0x68] sm:$0xff]
        %v286 = vld [vmem:[%s249 + $0x70] sm:$0xff]
        %v287 = vld [vmem:[%s249 + $0x78] sm:$0xff]
        %v288 = vld [vmem:[%s249 + $0x80] sm:$0xff]
        %v289 = vld [vmem:[%s249 + $0x88] sm:$0xff]
        %v290 = vld [vmem:[%s249 + $0x90] sm:$0xff]
        %v291 = vld [vmem:[%s249 + $0x98] sm:$0xff]
        %v292 = vld [vmem:[%s249 + $0xa0] sm:$0xff]
        %v293 = vld [vmem:[%s249 + $0xa8] sm:$0xff]
        %v294 = vld [vmem:[%s249 + $0xb0] sm:$0xff]
        %v295 = vld [vmem:[%s249 + $0xb8] sm:$0xff]
        %v296 = vld [vmem:[%s249 + $0xc0] sm:$0xff]
        %v297 = vld [vmem:[%s249 + $0xc8] sm:$0xff]
        %v298 = vld [vmem:[%s249 + $0xd0] sm:$0xff]
        %v299 = vld [vmem:[%s249 + $0xd8] sm:$0xff]
        %v300 = vld [vmem:[%s249 + $0xe0] sm:$0xff]
        %v301 = vld [vmem:[%s249 + $0xe8] sm:$0xff]
        %v302 = vld [vmem:[%s249 + $0xf0] sm:$0xff]
        %v303 = vld [vmem:[%s249 + $0xf8] sm:$0xff]
        %v306 = vunpack.c.l.b16 %v270
        %v307 = vunpack.c.h.b16 %v270
        %v308 = vunpack.c.l.b16 %v271
        %v309 = vunpack.c.h.b16 %v271
        %v310 = vpack.c.b16 %v308, %v306
        %v311 = vpack.c.b16 %v309, %v307
        %v346 = vunpack.c.l.b16 %v272
        %v347 = vunpack.c.h.b16 %v272
        %v348 = vunpack.c.l.b16 %v273
        %v349 = vunpack.c.h.b16 %v273
        %v350 = vunpack.c.l.b16 %v274
        %v351 = vunpack.c.h.b16 %v274
        %v352 = vunpack.c.l.b16 %v275
        %v353 = vunpack.c.h.b16 %v275
        %v354 = vunpack.c.l.b16 %v276
        %v355 = vunpack.c.h.b16 %v276
        %v356 = vunpack.c.l.b16 %v277
        %v357 = vunpack.c.h.b16 %v277
        %v358 = vunpack.c.l.b16 %v278
        %v359 = vunpack.c.h.b16 %v278
        %v360 = vunpack.c.l.b16 %v279
        %v361 = vunpack.c.h.b16 %v279
        %v362 = vunpack.c.l.b16 %v280
        %v363 = vunpack.c.h.b16 %v280
        %v364 = vunpack.c.l.b16 %v281
        %v365 = vunpack.c.h.b16 %v281
        %v366 = vunpack.c.l.b16 %v282
        %v367 = vunpack.c.h.b16 %v282
        %v368 = vunpack.c.l.b16 %v283
        %v369 = vunpack.c.h.b16 %v283
        %v370 = vunpack.c.l.b16 %v284
        %v371 = vunpack.c.h.b16 %v284
        %v372 = vunpack.c.l.b16 %v285
        %v373 = vunpack.c.h.b16 %v285
        %v374 = vunpack.c.l.b16 %v286
        %v375 = vunpack.c.h.b16 %v286
        %v376 = vunpack.c.l.b16 %v287
        %v377 = vunpack.c.h.b16 %v287
        %v378 = vunpack.c.l.b16 %v288
        %v379 = vunpack.c.h.b16 %v288
        %v380 = vunpack.c.l.b16 %v289
        %v381 = vunpack.c.h.b16 %v289
        %v382 = vunpack.c.l.b16 %v290
        %v383 = vunpack.c.h.b16 %v290
        %v384 = vunpack.c.l.b16 %v291
        %v385 = vunpack.c.h.b16 %v291
        %v386 = vunpack.c.l.b16 %v292
        %v387 = vunpack.c.h.b16 %v292
        %v388 = vunpack.c.l.b16 %v293
        %v389 = vunpack.c.h.b16 %v293
        %v390 = vunpack.c.l.b16 %v294
        %v391 = vunpack.c.h.b16 %v294
        %v392 = vunpack.c.l.b16 %v295
        %v393 = vunpack.c.h.b16 %v295
        %v394 = vunpack.c.l.b16 %v296
        %v395 = vunpack.c.h.b16 %v296
        %v396 = vunpack.c.l.b16 %v297
        %v397 = vunpack.c.h.b16 %v297
        %v398 = vunpack.c.l.b16 %v298
        %v399 = vunpack.c.h.b16 %v298
        %v400 = vunpack.c.l.b16 %v299
        %v401 = vunpack.c.h.b16 %v299
        %v402 = vunpack.c.l.b16 %v300
        %v403 = vunpack.c.h.b16 %v300
        %v404 = vunpack.c.l.b16 %v301
        %v405 = vunpack.c.h.b16 %v301
        %v406 = vunpack.c.l.b16 %v302
        %v407 = vunpack.c.h.b16 %v302
        %v408 = vunpack.c.l.b16 %v303
        %v409 = vunpack.c.h.b16 %v303
        %v410 = vpack.c.b16 %v348, %v346
        %v411 = vpack.c.b16 %v349, %v347
        %v412 = vpack.c.b16 %v352, %v350
        %v413 = vpack.c.b16 %v353, %v351
        %v414 = vpack.c.b16 %v356, %v354
        %v415 = vpack.c.b16 %v357, %v355
        %v416 = vpack.c.b16 %v360, %v358
        %v417 = vpack.c.b16 %v361, %v359
        %v418 = vpack.c.b16 %v364, %v362
        %v419 = vpack.c.b16 %v365, %v363
        %v420 = vpack.c.b16 %v368, %v366
        %v421 = vpack.c.b16 %v369, %v367
        %v422 = vpack.c.b16 %v372, %v370
        %v423 = vpack.c.b16 %v373, %v371
        %v424 = vpack.c.b16 %v376, %v374
        %v425 = vpack.c.b16 %v377, %v375
        %v426 = vpack.c.b16 %v380, %v378
        %v427 = vpack.c.b16 %v381, %v379
        %v428 = vpack.c.b16 %v384, %v382
        %v429 = vpack.c.b16 %v385, %v383
        %v430 = vpack.c.b16 %v388, %v386
        %v431 = vpack.c.b16 %v389, %v387
        %v432 = vpack.c.b16 %v392, %v390
        %v433 = vpack.c.b16 %v393, %v391
        %v434 = vpack.c.b16 %v396, %v394
        %v435 = vpack.c.b16 %v397, %v395
        %v436 = vpack.c.b16 %v400, %v398
        %v437 = vpack.c.b16 %v401, %v399
        %v438 = vpack.c.b16 %v404, %v402
        %v439 = vpack.c.b16 %v405, %v403
        %v440 = vpack.c.b16 %v408, %v406
        %v441 = vpack.c.b16 %v409, %v407
        %474 = vmatpush.bf16.msra.mxu0 %v424
        %475 = vmatpush.bf16.msra.mxu0 %v422
        %476 = vmatpush.bf16.msra.mxu0 %v420
        %477 = vmatpush.bf16.msra.mxu0 %v418
        %478 = vmatpush.bf16.msra.mxu0 %v416
        %479 = vmatpush.bf16.msra.mxu0 %v414
        %480 = vmatpush.bf16.msra.mxu0 %v412
        %481 = vmatpush.bf16.msra.mxu0 %v410
        %482 = vmatmul.bf16.gmra.mxu0 %v310
        %v483 = vpop.f32.mrf.mxu0
        %v484 = vadd.f32 0.0, %v483
        %v485 = vpop.f32.mrf.mxu0
        %v486 = vadd.f32 0.0, %v485
        %487 = vdwg.mxu0
        %488 = vmatpush.bf16.msra.mxu0 %v440
        %489 = vmatpush.bf16.msra.mxu0 %v438
        %490 = vmatpush.bf16.msra.mxu0 %v436
        %491 = vmatpush.bf16.msra.mxu0 %v434
        %492 = vmatpush.bf16.msra.mxu0 %v432
        %493 = vmatpush.bf16.msra.mxu0 %v430
        %494 = vmatpush.bf16.msra.mxu0 %v428
        %495 = vmatpush.bf16.msra.mxu0 %v426
        %496 = vmatmul.bf16.gmra.mxu0 %v311
        %v497 = vpop.f32.mrf.mxu0
        %v498 = vadd.f32 %v484, %v497
        %v499 = vpop.f32.mrf.mxu0
        %v500 = vadd.f32 %v486, %v499
        %501 = vdwg.mxu0
        %502 = vmatpush.bf16.msra.mxu0 %v425
        %503 = vmatpush.bf16.msra.mxu0 %v423
        %504 = vmatpush.bf16.msra.mxu0 %v421
        %505 = vmatpush.bf16.msra.mxu0 %v419
        %506 = vmatpush.bf16.msra.mxu0 %v417
        %507 = vmatpush.bf16.msra.mxu0 %v415
        %508 = vmatpush.bf16.msra.mxu0 %v413
        %509 = vmatpush.bf16.msra.mxu0 %v411
        %510 = vmatmul.bf16.gmra.mxu0 %v310
        %v511 = vpop.f32.mrf.mxu0
        %v512 = vadd.f32 0.0, %v511
        %v513 = vpop.f32.mrf.mxu0
        %v514 = vadd.f32 0.0, %v513
        %515 = vdwg.mxu0
        %516 = vmatpush.bf16.msra.mxu0 %v441
        %517 = vmatpush.bf16.msra.mxu0 %v439
        %518 = vmatpush.bf16.msra.mxu0 %v437
        %519 = vmatpush.bf16.msra.mxu0 %v435
        %520 = vmatpush.bf16.msra.mxu0 %v433
        %521 = vmatpush.bf16.msra.mxu0 %v431
        %522 = vmatpush.bf16.msra.mxu0 %v429
        %523 = vmatpush.bf16.msra.mxu0 %v427
        %524 = vmatmul.bf16.gmra.mxu0 %v311
        %v525 = vpop.f32.mrf.mxu0
        %v526 = vadd.f32 %v512, %v525
        %v527 = vpop.f32.mrf.mxu0
        %v528 = vadd.f32 %v514, %v527
        %529 = vdwg.mxu0
        %v530 = vadd.f32 %v266, %v498
        %v531 = vadd.f32 %v267, %v526
        %v532 = vadd.f32 %v268, %v500
        %v533 = vadd.f32 %v269, %v528
        %534 = vst [vmem:[#allocation2] sm:$0xff] %v530
        %535 = vst [vmem:[#allocation2 + $0x8] sm:$0xff] %v531
        %536 = vst [vmem:[#allocation2 + $0x10] sm:$0xff] %v532
        %537 = vst [vmem:[#allocation2 + $0x18] sm:$0xff] %v533
        %p538 = scmp.eq.s32.totalorder %s19, 8
        // Predicated region
        $region75: #{classifier_forward.8} parent=65 // pred_check
          %p539 = pneg %p538
        $region76: #{classifier_forward.8} parent=65 // pred_check_branch
          %541 = sbr.rel (%p539) target = $region78
        $region77: #{classifier_forward.8} parent=65 // pred_region
          %v542 = vld [vmem:[#allocation2] sm:$0xff]
          %v543 = vld [vmem:[#allocation2 + $0x8] sm:$0xff]
          %v544 = vld [vmem:[#allocation2 + $0x10] sm:$0xff]
          %v545 = vld [vmem:[#allocation2 + $0x18] sm:$0xff]
          %v546 = vld [vmem:[%s2] sm:$0x3]
          %v548 = vperm.slane %v546, 0
          %v549 = vperm.slane %v546, 1
          %v552 = vadd.f32 %v542, %v548
          %v553 = vadd.f32 %v543, %v549
          %v554 = vadd.f32 %v544, %v548
          %v555 = vadd.f32 %v545, %v549
          %vm556 = vcmp.ge.f32.partialorder %v552, 0.0
          %vm557 = vcmp.ge.f32.partialorder %v553, 0.0
          %vm558 = vcmp.ge.f32.partialorder %v554, 0.0
          %vm559 = vcmp.ge.f32.partialorder %v555, 0.0
          %v560 = vmul.f32 %v552, 0.1
          %v561 = vmul.f32 %v553, 0.1
          %v562 = vmul.f32 %v554, 0.1
          %v563 = vmul.f32 %v555, 0.1
          %v564 = vsel %vm556, %v552, %v560
          %v565 = vsel %vm557, %v553, %v561
          %v566 = vsel %vm558, %v554, %v562
          %v567 = vsel %vm559, %v555, %v563
          %568 = vst [vmem:[%s256] sm:$0xff] %v564
          %569 = vst [vmem:[%s256 + $0x8] sm:$0xff] %v565
          %570 = vst [vmem:[%s256 + $0x10] sm:$0xff] %v566
          %571 = vst [vmem:[%s256 + $0x18] sm:$0xff] %v567
        $region78: #{classifier_forward.8} parent=65 // pred_fallthru
          _
        %s572 = smul.u32 2, %s18
        %p573 = scmp.lt.s32.totalorder %s572, 1
        %s574 = scalar_select %p573, %s572, 1
        %s575 = smul.addr %s574, 2
        %s576 = smul.addr %s575, 8
        %s577 = scalar_lea.vmem %s3, %s576
        // Predicated region
        $region79: #{classifier_forward.8} parent=65 // pred_check
          %p578 = pneg %p119
        $region80: #{classifier_forward.8} parent=65 // pred_check_branch
          %580 = sbr.rel (%p578) target = $region82
        $region81: #{classifier_forward.8} parent=65 // pred_region
          %s581 = smul.u32 2, %s18
        $region82: #{classifier_forward.8} parent=65 // pred_fallthru
          _
        // Predicated region
        $region83: #{classifier_forward.8} parent=65 // pred_check
          %p582 = pneg %p119
        $region84: #{classifier_forward.8} parent=65 // pred_check_branch
          %584 = sbr.rel (%p582) target = $region86
        $region85: #{classifier_forward.8} parent=65 // pred_region
          %s585 = smul.u32 2, %s18
          %p586 = scmp.lt.s32.totalorder %s585, 1
          %s587 = scalar_select %p586, %s585, 1
          %s588 = smul.addr %s587, 2
          %s589 = smul.addr %s588, 8
          %s590 = scalar_lea.vmem %s3, %s589
        $region86: #{classifier_forward.8} parent=65 // pred_fallthru
          _
      $region66: #{classifier_forward.8} parent=5 // pred_fallthru
        _
      %p591 = scmp.le.s32.totalorder 2, %s9
      // Predicated region
      $region87: #{classifier_forward.8} parent=5 // pred_check
        %p592 = pneg %p591
      $region88: #{classifier_forward.8} parent=5 // pred_check_branch
        %594 = sbr.rel (%p592) target = $region90
      $region89: #{classifier_forward.8} parent=5 // pred_region
        %s595 = ssub.s32 %s9, 2
      $region90: #{classifier_forward.8} parent=5 // pred_fallthru
        _
    $region6: #{classifier_forward.8} parent=1 // loop_footer
      %s13 = sadd.s32 1, %s9
    $region7: #{classifier_forward.8} parent=1 // loop_footer_branch
      %8 = sbr.rel target = $region3
    $region8: #{classifier_forward.8} parent=1 // loop_exit
      _

// kernel: classifier_forward.9
$region0: #{classifier_forward.9}
  #allocation0 [shape = 'u32[]', space=smem, size = 0x4, offset = 0x4, fixed_abs, tag = 'smem constant byte address 0x4 - core index']
  #allocation1 [shape = 'u32[72,128]{1,0:T(1,128)}', space=vmem, size = 0x9000, scoped, tag = 'internal scratch']
  %s0 = inlined_call_operand.vmem [shape: bf16[16,256], index: 0, kind: input, shape index: {}]
  %s1 = inlined_call_operand.vmem [shape: bf16[256,256], index: 1, kind: input, shape index: {}]
  %s2 = inlined_call_operand.vmem [shape: f32[1,256], index: 2, kind: input, shape index: {}]
  %s3 = inlined_call_operand.vmem [shape: f32[256,128], index: 3, kind: input, shape index: {}]
  %s4 = inlined_call_operand.vmem [shape: f32[1,128], index: 4, kind: input, shape index: {}]
  %s5 = inlined_call_operand.vmem [shape: f32[16,128], index: 5, kind: output, shape index: {}]
  %s6 = sld [smem:[#allocation0]]
  $region30: #{classifier_forward.9} parent=0
    _
  %s8 = ssub.s32 1, %s6
  %s9 = scalar_select 0, %s8, %s6
  // Predicated region
  $region2: #{classifier_forward.9} parent=0 // pred_check
    _
  $region3: #{classifier_forward.9} parent=0 // pred_check_branch
    %11 = sbr.rel (0) target = $region5
  $region4: #{classifier_forward.9} parent=0 // pred_region
    _
  $region5: #{classifier_forward.9} parent=0 // pred_fallthru
    _
  // Predicated region
  $region6: #{classifier_forward.9} parent=0 // pred_check
    _
  $region7: #{classifier_forward.9} parent=0 // pred_check_branch
    %13 = sbr.rel (0) target = $region9
  $region8: #{classifier_forward.9} parent=0 // pred_region
    _
  $region9: #{classifier_forward.9} parent=0 // pred_fallthru
    _
  // Predicated region
  $region10: #{classifier_forward.9} parent=0 // pred_check
    _
  $region11: #{classifier_forward.9} parent=0 // pred_check_branch
    %15 = sbr.rel (0) target = $region13
  $region12: #{classifier_forward.9} parent=0 // pred_region
    _
  $region13: #{classifier_forward.9} parent=0 // pred_fallthru
    _
  // Predicated region
  $region14: #{classifier_forward.9} parent=0 // pred_check
    _
  $region15: #{classifier_forward.9} parent=0 // pred_check_branch
    %17 = sbr.rel (0) target = $region17
  $region16: #{classifier_forward.9} parent=0 // pred_region
    _
  $region17: #{classifier_forward.9} parent=0 // pred_fallthru
    _
  // Predicated region
  $region18: #{classifier_forward.9} parent=0 // pred_check
    _
  $region19: #{classifier_forward.9} parent=0 // pred_check_branch
    %19 = sbr.rel (0) target = $region21
  $region20: #{classifier_forward.9} parent=0 // pred_region
    _
  $region21: #{classifier_forward.9} parent=0 // pred_fallthru
    _
  %v20 = vld [vmem:[%s0] sm:$0xff]
  %v21 = vld [vmem:[%s0 + $0x8] sm:$0xff]
  %v22 = vld [vmem:[%s1] sm:$0xff]
  %v23 = vld [vmem:[%s1 + $0x8] sm:$0xff]
  %v24 = vld [vmem:[%s1 + $0x10] sm:$0xff]
  %v25 = vld [vmem:[%s1 + $0x18] sm:$0xff]
  %v26 = vld [vmem:[%s1 + $0x20] sm:$0xff]
  %v27 = vld [vmem:[%s1 + $0x28] sm:$0xff]
  %v28 = vld [vmem:[%s1 + $0x30] sm:$0xff]
  %v29 = vld [vmem:[%s1 + $0x38] sm:$0xff]
  %v30 = vld [vmem:[%s1 + $0x40] sm:$0xff]
  %v31 = vld [vmem:[%s1 + $0x48] sm:$0xff]
  %v32 = vld [vmem:[%s1 + $0x50] sm:$0xff]
  %v33 = vld [vmem:[%s1 + $0x58] sm:$0xff]
  %v34 = vld [vmem:[%s1 + $0x60] sm:$0xff]
  %v35 = vld [vmem:[%s1 + $0x68] sm:$0xff]
  %v36 = vld [vmem:[%s1 + $0x70] sm:$0xff]
  %v37 = vld [vmem:[%s1 + $0x78] sm:$0xff]
  %v38 = vld [vmem:[%s1 + $0x80] sm:$0xff]
  %v39 = vld [vmem:[%s1 + $0x88] sm:$0xff]
  %v40 = vld [vmem:[%s1 + $0x90] sm:$0xff]
  %v41 = vld [vmem:[%s1 + $0x98] sm:$0xff]
  %v42 = vld [vmem:[%s1 + $0xa0] sm:$0xff]
  %v43 = vld [vmem:[%s1 + $0xa8] sm:$0xff]
  %v44 = vld [vmem:[%s1 + $0xb0] sm:$0xff]
  %v45 = vld [vmem:[%s1 + $0xb8] sm:$0xff]
  %v46 = vld [vmem:[%s1 + $0xc0] sm:$0xff]
  %v47 = vld [vmem:[%s1 + $0xc8] sm:$0xff]
  %v48 = vld [vmem:[%s1 + $0xd0] sm:$0xff]
  %v49 = vld [vmem:[%s1 + $0xd8] sm:$0xff]
  %v50 = vld [vmem:[%s1 + $0xe0] sm:$0xff]
  %v51 = vld [vmem:[%s1 + $0xe8] sm:$0xff]
  %v52 = vld [vmem:[%s1 + $0xf0] sm:$0xff]
  %v53 = vld [vmem:[%s1 + $0xf8] sm:$0xff]
  %v54 = vld [vmem:[%s2] sm:$0x3]
  %v56 = vperm.slane %v54, 0
  %v57 = vperm.slane %v54, 1
  %v62 = vunpack.c.l.b16 %v20
  %v63 = vunpack.c.h.b16 %v20
  %v64 = vunpack.c.l.b16 %v21
  %v65 = vunpack.c.h.b16 %v21
  %v66 = vpack.c.b16 %v64, %v62
  %v67 = vpack.c.b16 %v65, %v63
  %v102 = vunpack.c.l.b16 %v22
  %v103 = vunpack.c.h.b16 %v22
  %v104 = vunpack.c.l.b16 %v23
  %v105 = vunpack.c.h.b16 %v23
  %v106 = vunpack.c.l.b16 %v24
  %v107 = vunpack.c.h.b16 %v24
  %v108 = vunpack.c.l.b16 %v25
  %v109 = vunpack.c.h.b16 %v25
  %v110 = vunpack.c.l.b16 %v26
  %v111 = vunpack.c.h.b16 %v26
  %v112 = vunpack.c.l.b16 %v27
  %v113 = vunpack.c.h.b16 %v27
  %v114 = vunpack.c.l.b16 %v28
  %v115 = vunpack.c.h.b16 %v28
  %v116 = vunpack.c.l.b16 %v29
  %v117 = vunpack.c.h.b16 %v29
  %v118 = vunpack.c.l.b16 %v30
  %v119 = vunpack.c.h.b16 %v30
  %v120 = vunpack.c.l.b16 %v31
  %v121 = vunpack.c.h.b16 %v31
  %v122 = vunpack.c.l.b16 %v32
  %v123 = vunpack.c.h.b16 %v32
  %v124 = vunpack.c.l.b16 %v33
  %v125 = vunpack.c.h.b16 %v33
  %v126 = vunpack.c.l.b16 %v34
  %v127 = vunpack.c.h.b16 %v34
  %v128 = vunpack.c.l.b16 %v35
  %v129 = vunpack.c.h.b16 %v35
  %v130 = vunpack.c.l.b16 %v36
  %v131 = vunpack.c.h.b16 %v36
  %v132 = vunpack.c.l.b16 %v37
  %v133 = vunpack.c.h.b16 %v37
  %v134 = vunpack.c.l.b16 %v38
  %v135 = vunpack.c.h.b16 %v38
  %v136 = vunpack.c.l.b16 %v39
  %v137 = vunpack.c.h.b16 %v39
  %v138 = vunpack.c.l.b16 %v40
  %v139 = vunpack.c.h.b16 %v40
  %v140 = vunpack.c.l.b16 %v41
  %v141 = vunpack.c.h.b16 %v41
  %v142 = vunpack.c.l.b16 %v42
  %v143 = vunpack.c.h.b16 %v42
  %v144 = vunpack.c.l.b16 %v43
  %v145 = vunpack.c.h.b16 %v43
  %v146 = vunpack.c.l.b16 %v44
  %v147 = vunpack.c.h.b16 %v44
  %v148 = vunpack.c.l.b16 %v45
  %v149 = vunpack.c.h.b16 %v45
  %v150 = vunpack.c.l.b16 %v46
  %v151 = vunpack.c.h.b16 %v46
  %v152 = vunpack.c.l.b16 %v47
  %v153 = vunpack.c.h.b16 %v47
  %v154 = vunpack.c.l.b16 %v48
  %v155 = vunpack.c.h.b16 %v48
  %v156 = vunpack.c.l.b16 %v49
  %v157 = vunpack.c.h.b16 %v49
  %v158 = vunpack.c.l.b16 %v50
  %v159 = vunpack.c.h.b16 %v50
  %v160 = vunpack.c.l.b16 %v51
  %v161 = vunpack.c.h.b16 %v51
  %v162 = vunpack.c.l.b16 %v52
  %v163 = vunpack.c.h.b16 %v52
  %v164 = vunpack.c.l.b16 %v53
  %v165 = vunpack.c.h.b16 %v53
  %v166 = vpack.c.b16 %v104, %v102
  %v167 = vpack.c.b16 %v105, %v103
  %v168 = vpack.c.b16 %v108, %v106
  %v169 = vpack.c.b16 %v109, %v107
  %v170 = vpack.c.b16 %v112, %v110
  %v171 = vpack.c.b16 %v113, %v111
  %v172 = vpack.c.b16 %v116, %v114
  %v173 = vpack.c.b16 %v117, %v115
  %v174 = vpack.c.b16 %v120, %v118
  %v175 = vpack.c.b16 %v121, %v119
  %v176 = vpack.c.b16 %v124, %v122
  %v177 = vpack.c.b16 %v125, %v123
  %v178 = vpack.c.b16 %v128, %v126
  %v179 = vpack.c.b16 %v129, %v127
  %v180 = vpack.c.b16 %v132, %v130
  %v181 = vpack.c.b16 %v133, %v131
  %v182 = vpack.c.b16 %v136, %v134
  %v183 = vpack.c.b16 %v137, %v135
  %v184 = vpack.c.b16 %v140, %v138
  %v185 = vpack.c.b16 %v141, %v139
  %v186 = vpack.c.b16 %v144, %v142
  %v187 = vpack.c.b16 %v145, %v143
  %v188 = vpack.c.b16 %v148, %v146
  %v189 = vpack.c.b16 %v149, %v147
  %v190 = vpack.c.b16 %v152, %v150
  %v191 = vpack.c.b16 %v153, %v151
  %v192 = vpack.c.b16 %v156, %v154
  %v193 = vpack.c.b16 %v157, %v155
  %v194 = vpack.c.b16 %v160, %v158
  %v195 = vpack.c.b16 %v161, %v159
  %v196 = vpack.c.b16 %v164, %v162
  %v197 = vpack.c.b16 %v165, %v163
  %230 = vmatpush.bf16.msra.mxu0 %v180
  %231 = vmatpush.bf16.msra.mxu0 %v178
  %232 = vmatpush.bf16.msra.mxu0 %v176
  %233 = vmatpush.bf16.msra.mxu0 %v174
  %234 = vmatpush.bf16.msra.mxu0 %v172
  %235 = vmatpush.bf16.msra.mxu0 %v170
  %236 = vmatpush.bf16.msra.mxu0 %v168
  %237 = vmatpush.bf16.msra.mxu0 %v166
  %238 = vmatmul.bf16.gmra.mxu0 %v66
  %v239 = vpop.f32.mrf.mxu0
  %v240 = vadd.f32 %v56, %v239
  %v241 = vpop.f32.mrf.mxu0
  %v242 = vadd.f32 %v56, %v241
  %243 = vdwg.mxu0
  %244 = vmatpush.bf16.msra.mxu0 %v196
  %245 = vmatpush.bf16.msra.mxu0 %v194
  %246 = vmatpush.bf16.msra.mxu0 %v192
  %247 = vmatpush.bf16.msra.mxu0 %v190
  %248 = vmatpush.bf16.msra.mxu0 %v188
  %249 = vmatpush.bf16.msra.mxu0 %v186
  %250 = vmatpush.bf16.msra.mxu0 %v184
  %251 = vmatpush.bf16.msra.mxu0 %v182
  %252 = vmatmul.bf16.gmra.mxu0 %v67
  %v253 = vpop.f32.mrf.mxu0
  %v254 = vadd.f32 %v240, %v253
  %v255 = vpop.f32.mrf.mxu0
  %v256 = vadd.f32 %v242, %v255
  %257 = vdwg.mxu0
  %258 = vmatpush.bf16.msra.mxu0 %v181
  %259 = vmatpush.bf16.msra.mxu0 %v179
  %260 = vmatpush.bf16.msra.mxu0 %v177
  %261 = vmatpush.bf16.msra.mxu0 %v175
  %262 = vmatpush.bf16.msra.mxu0 %v173
  %263 = vmatpush.bf16.msra.mxu0 %v171
  %264 = vmatpush.bf16.msra.mxu0 %v169
  %265 = vmatpush.bf16.msra.mxu0 %v167
  %266 = vmatmul.bf16.gmra.mxu0 %v66
  %v267 = vpop.f32.mrf.mxu0
  %v268 = vadd.f32 %v57, %v267
  %v269 = vpop.f32.mrf.mxu0
  %v270 = vadd.f32 %v57, %v269
  %271 = vdwg.mxu0
  %272 = vmatpush.bf16.msra.mxu0 %v197
  %273 = vmatpush.bf16.msra.mxu0 %v195
  %274 = vmatpush.bf16.msra.mxu0 %v193
  %275 = vmatpush.bf16.msra.mxu0 %v191
  %276 = vmatpush.bf16.msra.mxu0 %v189
  %277 = vmatpush.bf16.msra.mxu0 %v187
  %278 = vmatpush.bf16.msra.mxu0 %v185
  %279 = vmatpush.bf16.msra.mxu0 %v183
  %280 = vmatmul.bf16.gmra.mxu0 %v67
  %v281 = vpop.f32.mrf.mxu0
  %v282 = vadd.f32 %v268, %v281
  %v283 = vpop.f32.mrf.mxu0
  %v284 = vadd.f32 %v270, %v283
  %285 = vdwg.mxu0
  %vm286 = vcmp.ge.f32.partialorder %v254, 0.0
  %vm287 = vcmp.ge.f32.partialorder %v282, 0.0
  %vm288 = vcmp.ge.f32.partialorder %v256, 0.0
  %vm289 = vcmp.ge.f32.partialorder %v284, 0.0
  %v290 = vmul.f32 %v254, 0.1
  %v291 = vmul.f32 %v282, 0.1
  %v292 = vmul.f32 %v256, 0.1
  %v293 = vmul.f32 %v284, 0.1
  %v294 = vsel %vm286, %v254, %v290
  %v295 = vsel %vm287, %v282, %v291
  %v296 = vsel %vm288, %v256, %v292
  %v297 = vsel %vm289, %v284, %v293
  %v298 = vld [vmem:[%s3] sm:$0xff]
  %v299 = vld [vmem:[%s3 + $0x8] sm:$0xff]
  %v300 = vld [vmem:[%s3 + $0x10] sm:$0xff]
  %v301 = vld [vmem:[%s3 + $0x18] sm:$0xff]
  %v302 = vld [vmem:[%s3 + $0x20] sm:$0xff]
  %v303 = vld [vmem:[%s3 + $0x28] sm:$0xff]
  %v304 = vld [vmem:[%s3 + $0x30] sm:$0xff]
  %v305 = vld [vmem:[%s3 + $0x38] sm:$0xff]
  %v306 = vld [vmem:[%s3 + $0x40] sm:$0xff]
  %v307 = vld [vmem:[%s3 + $0x48] sm:$0xff]
  %v308 = vld [vmem:[%s3 + $0x50] sm:$0xff]
  %v309 = vld [vmem:[%s3 + $0x58] sm:$0xff]
  %v310 = vld [vmem:[%s3 + $0x60] sm:$0xff]
  %v311 = vld [vmem:[%s3 + $0x68] sm:$0xff]
  %v312 = vld [vmem:[%s3 + $0x70] sm:$0xff]
  %v313 = vld [vmem:[%s3 + $0x78] sm:$0xff]
  %v314 = vld [vmem:[%s3 + $0x80] sm:$0xff]
  %v315 = vld [vmem:[%s3 + $0x88] sm:$0xff]
  %v316 = vld [vmem:[%s3 + $0x90] sm:$0xff]
  %v317 = vld [vmem:[%s3 + $0x98] sm:$0xff]
  %v318 = vld [vmem:[%s3 + $0xa0] sm:$0xff]
  %v319 = vld [vmem:[%s3 + $0xa8] sm:$0xff]
  %v320 = vld [vmem:[%s3 + $0xb0] sm:$0xff]
  %v321 = vld [vmem:[%s3 + $0xb8] sm:$0xff]
  %v322 = vld [vmem:[%s3 + $0xc0] sm:$0xff]
  %v323 = vld [vmem:[%s3 + $0xc8] sm:$0xff]
  %v324 = vld [vmem:[%s3 + $0xd0] sm:$0xff]
  %v325 = vld [vmem:[%s3 + $0xd8] sm:$0xff]
  %v326 = vld [vmem:[%s3 + $0xe0] sm:$0xff]
  %v327 = vld [vmem:[%s3 + $0xe8] sm:$0xff]
  %v328 = vld [vmem:[%s3 + $0xf0] sm:$0xff]
  %v329 = vld [vmem:[%s3 + $0xf8] sm:$0xff]
  %v330 = vld [vmem:[%s4] sm:$0x1]
  %v332 = vperm.slane %v330, 0
  %334 = vmatpush.msra.mxu0 %v313
  %335 = vmatpush.msra.mxu0 %v312
  %336 = vmatpush.msra.mxu0 %v311
  %337 = vmatpush.msra.mxu0 %v310
  %338 = vmatpush.msra.mxu0 %v309
  %339 = vmatpush.msra.mxu0 %v308
  %340 = vmatpush.msra.mxu0 %v307
  %341 = vmatpush.msra.mxu0 %v306
  %342 = vmatpush.msra.mxu0 %v305
  %343 = vmatpush.msra.mxu0 %v304
  %344 = vmatpush.msra.mxu0 %v303
  %345 = vmatpush.msra.mxu0 %v302
  %346 = vmatpush.msra.mxu0 %v301
  %347 = vmatpush.msra.mxu0 %v300
  %348 = vmatpush.msra.mxu0 %v299
  %349 = vmatpush.msra.mxu0 %v298
  %350 = vmatmul.f32.gmra.mxu0 %v294
  %v351 = vpop.f32.mrf.mxu0
  %v352 = vadd.f32 %v332, %v351
  %353 = vmatmul.f32.gmra.mxu0 %v296
  %v354 = vpop.f32.mrf.mxu0
  %v355 = vadd.f32 %v332, %v354
  %356 = vdwg.mxu0
  %357 = vmatpush.msra.mxu0 %v329
  %358 = vmatpush.msra.mxu0 %v328
  %359 = vmatpush.msra.mxu0 %v327
  %360 = vmatpush.msra.mxu0 %v326
  %361 = vmatpush.msra.mxu0 %v325
  %362 = vmatpush.msra.mxu0 %v324
  %363 = vmatpush.msra.mxu0 %v323
  %364 = vmatpush.msra.mxu0 %v322
  %365 = vmatpush.msra.mxu0 %v321
  %366 = vmatpush.msra.mxu0 %v320
  %367 = vmatpush.msra.mxu0 %v319
  %368 = vmatpush.msra.mxu0 %v318
  %369 = vmatpush.msra.mxu0 %v317
  %370 = vmatpush.msra.mxu0 %v316
  %371 = vmatpush.msra.mxu0 %v315
  %372 = vmatpush.msra.mxu0 %v314
  %373 = vmatmul.f32.gmra.mxu0 %v295
  %v374 = vpop.f32.mrf.mxu0
  %v375 = vadd.f32 %v352, %v374
  %376 = vmatmul.f32.gmra.mxu0 %v297
  %v377 = vpop.f32.mrf.mxu0
  %v378 = vadd.f32 %v355, %v377
  %379 = vdwg.mxu0
  %380 = vst [vmem:[%s5] sm:$0xff] %v375
  %381 = vst [vmem:[%s5 + $0x8] sm:$0xff] %v378
  // Predicated region
  $region22: #{classifier_forward.9} parent=0 // pred_check
    _
  $region23: #{classifier_forward.9} parent=0 // pred_check_branch
    %383 = sbr.rel (0) target = $region25
  $region24: #{classifier_forward.9} parent=0 // pred_region
    _
  $region25: #{classifier_forward.9} parent=0 // pred_fallthru
    _
  // Predicated region
  $region26: #{classifier_forward.9} parent=0 // pred_check
    _
  $region27: #{classifier_forward.9} parent=0 // pred_check_branch
    %385 = sbr.rel (0) target = $region29
  $region28: #{classifier_forward.9} parent=0 // pred_region
    _
  $region29: #{classifier_forward.9} parent=0 // pred_fallthru
    _

</llo_original>
